<compile_context>
chip_gen: v7x
topology: tpu7x:2x2x1
jax: 0.10.0
libtpu: 0.0.40
codegen_flags: <defaults>
</compile_context>

<pallas_src>
import math
from dataclasses import dataclass
from functools import partial

import jax
import jax.numpy as jnp
from jax.experimental import pallas as pl
from jax.experimental.pallas import tpu as pltpu

BN_EPS = 1e-3
BN_SCALE = 1.0 / math.sqrt(1.0 + BN_EPS)  # folded eval-mode BatchNorm


def _make_divisible(v, divisor=8, min_value=None):
    if min_value is None:
        min_value = divisor
    new_v = max(min_value, int(v + divisor / 2) // divisor * divisor)
    if new_v < 0.9 * v:
        new_v += divisor
    return new_v


def _round_up(v, m):
    return (v + m - 1) // m * m


def _apply_act(y, act):
    # all epilogue math in f32 (v5e has no bf16 VPU/EUP)
    if act == "relu":
        return jnp.maximum(y, 0.0)
    if act == "hardswish":
        return y * jnp.clip(y + 3.0, 0.0, 6.0) * (1.0 / 6.0)
    if act == "hardsigmoid":
        return jnp.clip(y + 3.0, 0.0, 6.0) * (1.0 / 6.0)
    return y


# ------------------------ fused tiled matmul kernel ------------------------

def _mm_kernel(x_ref, w_ref, *rest, act, has_scale, has_bias, has_res):
    idx = 0
    scale_ref = rest[idx] if has_scale else None
    idx += int(has_scale)
    bias_ref = rest[idx] if has_bias else None
    idx += int(has_bias)
    res_ref = rest[idx] if has_res else None
    idx += int(has_res)
    o_ref = rest[idx]
    acc_ref = rest[idx + 1]

    k = pl.program_id(3)

    @pl.when(k == 0)
    def _():
        acc_ref[...] = jnp.zeros_like(acc_ref)

    x = x_ref[...]
    if has_scale:
        # per-(batch, K-channel) SE scale folded into the matmul:
        # (s ⊙_K x) @ W  ==  sum_k s[k] x[:,k] W[k,:]
        x = (x.astype(jnp.float32) * scale_ref[...]).astype(jnp.bfloat16)
    acc_ref[...] += jnp.dot(x, w_ref[...], preferred_element_type=jnp.float32)

    @pl.when(k == pl.num_programs(3) - 1)
    def _():
        y = acc_ref[...]
        if has_bias:
            y = y + bias_ref[...]                      # (1, tn) broadcast
        y = _apply_act(y, act)
        if has_res:
            y = y + res_ref[...].astype(jnp.float32)   # fused residual add
        o_ref[...] = y.astype(o_ref.dtype)


def fused_matmul(x3, w2, bias=None, act="none", residual=None, k_scale=None,
                 out_dtype=jnp.bfloat16):
    """Batched tiled matmul: (B,M,K) @ (K,N) -> (B,M,N).

    BN is pre-folded into the weights; per-K scale (SE), bias, activation and
    residual-add are fused in the epilogue / inner loop.  Inputs are cast to
    bf16 for the MXU; accumulation and epilogue run in f32.
    """
    B, M, K = x3.shape
    _, N = w2.shape

    Kp = _round_up(K, 128)
    tk = Kp if Kp <= 512 else 512
    Kp = _round_up(Kp, tk)
    Np = _round_up(N, 128)        # lane-dense (>=128-wide) output stores
    tn = Np if Np <= 256 else 256
    Np = _round_up(Np, tn)
    Mp = _round_up(M, 8)
    tm = Mp if Mp <= 256 else 256
    Mp = _round_up(Mp, tm)

    xb = jnp.pad(x3.astype(jnp.bfloat16), ((0, 0), (0, Mp - M), (0, Kp - K)))
    wb = jnp.pad(w2.astype(jnp.bfloat16), ((0, Kp - K), (0, Np - N)))

    has_scale = k_scale is not None
    has_bias = bias is not None
    has_res = residual is not None

    args = [xb, wb]
    in_specs = [
        pl.BlockSpec((None, tm, tk), lambda b, m, n, k: (b, m, k)),
        pl.BlockSpec((tk, tn), lambda b, m, n, k: (k, n)),
    ]
    if has_scale:
        sb = jnp.pad(k_scale.astype(jnp.float32),
                     ((0, 0), (0, Kp - K))).reshape(B, 1, Kp)
        args.append(sb)
        in_specs.append(pl.BlockSpec((None, 1, tk),
                                     lambda b, m, n, k: (b, 0, k)))
    if has_bias:
        bb = jnp.pad(bias.astype(jnp.float32), (0, Np - N)).reshape(1, Np)
        args.append(bb)
        in_specs.append(pl.BlockSpec((1, tn), lambda b, m, n, k: (0, n)))
    if has_res:
        rb = jnp.pad(residual.astype(jnp.bfloat16),
                     ((0, 0), (0, Mp - M), (0, Np - N)))
        args.append(rb)
        in_specs.append(
            pl.BlockSpec((None, tm, tn), lambda b, m, n, k: (b, m, n)))

    out = pl.pallas_call(
        partial(_mm_kernel, act=act, has_scale=has_scale, has_bias=has_bias,
                has_res=has_res),
        out_shape=jax.ShapeDtypeStruct((B, Mp, Np), out_dtype),
        grid=(B, Mp // tm, Np // tn, Kp // tk),
        in_specs=in_specs,
        out_specs=pl.BlockSpec((None, tm, tn), lambda b, m, n, k: (b, m, n)),
        scratch_shapes=[pltpu.VMEM((tm, tn), jnp.float32)],
        compiler_params=pltpu.CompilerParams(
            dimension_semantics=("parallel", "parallel", "parallel",
                                 "arbitrary"),
            vmem_limit_bytes=32 * 1024 * 1024),
    )(*args)
    return out[:, :M, :N]


# ----------------------- depthwise conv (in-kernel) ------------------------

def _dw_kernel(slab_ref, w_ref, o_ref, *, K, stride, dilation, Hs, Ho, Wo,
               act):
    wv = w_ref[...].astype(jnp.float32)            # (K, K, C)
    acc = None
    for i in range(K):
        ri = i * dilation
        si, oi = ri % stride, ri // stride
        for j in range(K):
            rj = j * dilation
            sj, oj = rj % stride, rj // stride
            base = (si * stride + sj) * Hs + oi
            tap = slab_ref[base:base + Ho, oj:oj + Wo, :].astype(jnp.float32)
            contrib = tap * wv[i, j:j + 1, :]      # (Ho,Wo,C) * (1,C)
            acc = contrib if acc is None else acc + contrib
    o_ref[...] = _apply_act(acc, act).astype(o_ref.dtype)


def depthwise_conv(x, w_kkc, stride, dilation, act):
    """x: (B,H,W,C) bf16, w: (K,K,C) f32 (BN pre-folded)."""
    B, H, W, C = x.shape
    K = w_kkc.shape[0]
    p = (K - 1) // 2 * dilation
    Ho = (H + 2 * p - dilation * (K - 1) - 1) // stride + 1
    Wo = (W + 2 * p - dilation * (K - 1) - 1) // stride + 1
    xp = jnp.pad(x, ((0, 0), (p, p), (p, p), (0, 0)))

    s = stride
    off_max = ((K - 1) * dilation) // s
    Hs = Ho + off_max
    Ws = Wo + off_max
    # parity decomposition: stride-s conv becomes stride-1 taps over s*s slabs
    slabs = []
    for pi in range(s):
        for pj in range(s):
            sl = xp[:, pi::s, pj::s, :][:, :Hs, :Ws, :]
            ph, pw = Hs - sl.shape[1], Ws - sl.shape[2]
            if ph > 0 or pw > 0:
                sl = jnp.pad(sl, ((0, 0), (0, ph), (0, pw), (0, 0)))
            slabs.append(sl)
    slab = jnp.concatenate(slabs, axis=1)          # (B, s*s*Hs, Ws, C)

    return pl.pallas_call(
        partial(_dw_kernel, K=K, stride=stride, dilation=dilation, Hs=Hs,
                Ho=Ho, Wo=Wo, act=act),
        out_shape=jax.ShapeDtypeStruct((B, Ho, Wo, C), x.dtype),
        grid=(B,),
        in_specs=[
            pl.BlockSpec((None, s * s * Hs, Ws, C), lambda b: (b, 0, 0, 0)),
            pl.BlockSpec((K, K, C), lambda b: (0, 0, 0)),
        ],
        out_specs=pl.BlockSpec((None, Ho, Wo, C), lambda b: (b, 0, 0, 0)),
        compiler_params=pltpu.CompilerParams(
            dimension_semantics=("parallel",)),
    )(slab, w_kkc)


# --------------------------- global average pool ---------------------------

def _pool_kernel(x_ref, o_ref, acc_ref, *, inv_hw):
    t = pl.program_id(0)

    @pl.when(t == 0)
    def _():
        acc_ref[...] = jnp.zeros_like(acc_ref)

    acc_ref[...] += jnp.sum(x_ref[...].astype(jnp.float32), axis=1)

    @pl.when(t == pl.num_programs(0) - 1)
    def _():
        o_ref[...] = acc_ref[...] * inv_hw


def global_avg_pool(x3):
    """x3: (B, HW, C) -> (B, C) f32 mean over HW (tiled over HW)."""
    B, HW, C = x3.shape
    HWp = _round_up(HW, 8)
    # VMEM-budgeted spatial tile (~4 MiB per input block).
    budget = max(8, (4 * 1024 * 1024 // max(1, B * C * 2)) // 8 * 8)
    t_hw = min(HWp, budget, 4096)
    HWp = _round_up(HWp, t_hw)
    if HWp != HW:
        x3 = jnp.pad(x3, ((0, 0), (0, HWp - HW), (0, 0)))
    return pl.pallas_call(
        partial(_pool_kernel, inv_hw=1.0 / HW),
        out_shape=jax.ShapeDtypeStruct((B, C), jnp.float32),
        grid=(HWp // t_hw,),
        in_specs=[pl.BlockSpec((B, t_hw, C), lambda t: (0, t, 0))],
        out_specs=pl.BlockSpec((B, C), lambda t: (0, 0)),
        scratch_shapes=[pltpu.VMEM((B, C), jnp.float32)],
        compiler_params=pltpu.CompilerParams(
            dimension_semantics=("arbitrary",)),
    )(x3)


# ------------------------------- glue ops ---------------------------------

def extract_patches(x, kh, kw, stride, padding):
    """x: (N,H,W,C) -> patches (N,Ho,Wo,kh*kw,C). (dilation=1; stem only)"""
    N, H, W, C = x.shape
    xp = jnp.pad(x, ((0, 0), (padding, padding), (padding, padding), (0, 0)))
    Ho = (H + 2 * padding - kh) // stride + 1
    Wo = (W + 2 * padding - kw) // stride + 1
    cols = []
    for i in range(kh):
        for j in range(kw):
            cols.append(xp[:, i:i + (Ho - 1) * stride + 1:stride,
                              j:j + (Wo - 1) * stride + 1:stride, :])
    return jnp.stack(cols, axis=3), Ho, Wo


def conv2d_im2col(x, w_hwio, stride, padding, act):
    B, H, W, Cin = x.shape
    KH, KW, _, Cout = w_hwio.shape
    patches, Ho, Wo = extract_patches(x, KH, KW, stride, padding)
    xm = patches.reshape(1, B * Ho * Wo, KH * KW * Cin)
    wm = w_hwio.reshape(KH * KW * Cin, Cout)
    y = fused_matmul(xm, wm, act=act)
    return y[0].reshape(B, Ho, Wo, Cout)


def pointwise_conv(x, w, bias=None, act="none", residual=None):
    B, H, W, Cin = x.shape
    Cout = w.shape[1]
    res = None
    if residual is not None:
        res = residual.reshape(1, B * H * W, residual.shape[-1])
    y = fused_matmul(x.reshape(1, B * H * W, Cin), w,
                     bias=bias, act=act, residual=res)
    return y[0].reshape(B, H, W, Cout)


# ------------------------------ model config ------------------------------

@dataclass
class InvertedResidualConfig:
    input_channels: int
    kernel: int
    expanded_channels: int
    out_channels: int
    use_se: bool
    use_hs: bool
    stride: int
    dilation: int = 1


def _kaiming(key, shape, fan_out):
    return jax.random.normal(key, shape, jnp.float32) * math.sqrt(2.0 / fan_out)


def init_params(key, setting, last_channel, num_classes):
    """Eval-mode BN (unit stats) is folded into conv weights here."""
    params = {}
    keys = iter(jax.random.split(key, 64))
    c0 = setting[0].input_channels
    params["stem_w"] = _kaiming(next(keys), (3, 3, 3, c0), c0 * 9) * BN_SCALE
    blocks = []
    for cnf in setting:
        b = {}
        if cnf.expanded_channels != cnf.input_channels:
            b["expand_w"] = _kaiming(
                next(keys), (cnf.input_channels, cnf.expanded_channels),
                cnf.expanded_channels) * BN_SCALE
        b["dw_w"] = _kaiming(
            next(keys), (cnf.kernel, cnf.kernel, cnf.expanded_channels),
            cnf.expanded_channels * cnf.kernel * cnf.kernel) * BN_SCALE
        if cnf.use_se:
            sq = _make_divisible(cnf.expanded_channels // 4, 8)
            b["se_fc1_w"] = _kaiming(next(keys), (cnf.expanded_channels, sq), sq)
            b["se_fc1_b"] = jnp.zeros((sq,), jnp.float32)
            b["se_fc2_w"] = _kaiming(next(keys), (sq, cnf.expanded_channels),
                                     cnf.expanded_channels)
            b["se_fc2_b"] = jnp.zeros((cnf.expanded_channels,), jnp.float32)
        b["proj_w"] = _kaiming(
            next(keys), (cnf.expanded_channels, cnf.out_channels),
            cnf.out_channels) * BN_SCALE
        blocks.append(b)
    params["blocks"] = blocks
    c_last_in = setting[-1].out_channels
    c_last_out = 6 * c_last_in
    params["last_w"] = _kaiming(next(keys), (c_last_in, c_last_out),
                                c_last_out) * BN_SCALE
    params["cls1_w"] = jax.random.normal(next(keys), (c_last_out, last_channel),
                                         jnp.float32) * 0.01
    params["cls1_b"] = jnp.zeros((last_channel,), jnp.float32)
    params["cls2_w"] = jax.random.normal(next(keys), (last_channel, num_classes),
                                         jnp.float32) * 0.01
    params["cls2_b"] = jnp.zeros((num_classes,), jnp.float32)
    return params


# ------------------------------ forward pass ------------------------------

def inverted_residual_forward(x, cnf, b):
    identity = x
    out = x
    inner_act = "hardswish" if cnf.use_hs else "relu"
    if cnf.expanded_channels != cnf.input_channels:
        out = pointwise_conv(out, b["expand_w"], act=inner_act)
    stride = 1 if cnf.dilation > 1 else cnf.stride
    out = depthwise_conv(out, b["dw_w"], stride, cnf.dilation, inner_act)
    use_res = cnf.stride == 1 and cnf.input_channels == cnf.out_channels

    if cnf.use_se:
        B, H, W, C = out.shape
        x3 = out.reshape(B, H * W, C)
        pooled = global_avg_pool(x3)                                  # (B, C)
        s = fused_matmul(pooled[None], b["se_fc1_w"],
                         bias=b["se_fc1_b"], act="relu",
                         out_dtype=jnp.float32)[0]
        s = fused_matmul(s[None], b["se_fc2_w"],
                         bias=b["se_fc2_b"], act="hardsigmoid",
                         out_dtype=jnp.float32)[0]                    # (B, C)
        # SE scale fused into the projection matmul as a per-K scale:
        # (s ⊙ x) @ W — no scaled-activation HBM round trip, no per-batch
        # weight duplication.
        res = (identity.reshape(B, H * W, cnf.out_channels)
               if use_res else None)
        y = fused_matmul(x3, b["proj_w"], k_scale=s, act="none", residual=res)
        out = y.reshape(B, H, W, cnf.out_channels)
    else:
        res = identity if use_res else None
        out = pointwise_conv(out, b["proj_w"], act="none", residual=res)
    return out


def pcq_mobilenet_forward(params, x_nchw, setting, dilation):
    x = jnp.transpose(x_nchw, (0, 2, 3, 1)).astype(jnp.bfloat16)   # NCHW->NHWC
    # first conv (3x3, stride 2) + folded BN + Hardswish
    x = conv2d_im2col(x, params["stem_w"], stride=2, padding=dilation,
                      act="hardswish")
    for cnf, b in zip(setting, params["blocks"]):
        x = inverted_residual_forward(x, cnf, b)
    x = pointwise_conv(x, params["last_w"], act="hardswish")
    B, H, W, C = x.shape
    pooled = global_avg_pool(x.reshape(B, H * W, C))               # (B, C) f32
    h = fused_matmul(pooled[None], params["cls1_w"],
                     bias=params["cls1_b"], act="hardswish",
                     out_dtype=jnp.float32)[0]
    logits = fused_matmul(h[None], params["cls2_w"],
                          bias=params["cls2_b"], act="none",
                          out_dtype=jnp.float32)[0]
    return logits


# --------------------------------- main ------------------------------------

if __name__ == "__main__":
    # small MobileNetV3-style inverted-residual setting
    setting = [
        InvertedResidualConfig(8, 3, 8, 8, use_se=True, use_hs=False, stride=1),
        InvertedResidualConfig(8, 3, 24, 16, use_se=False, use_hs=True, stride=2),
        InvertedResidualConfig(16, 3, 48, 16, use_se=False, use_hs=True, stride=1),
    ]
    last_channel = 64
    num_classes = 16

    key = jax.random.PRNGKey(0)
    pkey, xkey = jax.random.split(key)
    params = init_params(pkey, setting, last_channel, num_classes)
    x = jax.random.normal(xkey, (2, 3, 16, 16), jnp.float32)       # NCHW

    fwd = jax.jit(partial(pcq_mobilenet_forward, setting=setting, dilation=1))
    out = fwd(params, x)
    out = jax.block_until_ready(out)
    assert out.shape == (2, num_classes), out.shape
    assert bool(jnp.all(jnp.isfinite(out)))
    print("KERNEL_OK")
</pallas_src>

<mosaic_0001>
module attributes {stable_mosaic.version = 11 : i64} {
  func.func @_dw_kernel(%arg0: i32, %arg1: memref<1x10x10x8xbf16, #tpu.memory_space<vmem>>, %arg2: memref<3x3x8xf32, #tpu.memory_space<vmem>>, %arg3: memref<1x8x8x8xbf16, #tpu.memory_space<vmem>>) attributes {dimension_semantics = [#tpu.dimension_semantics<parallel>], iteration_bounds = array<i64: 2>, scalar_prefetch = 0 : i64, scratch_operands = 0 : i64, tpu.core_type = #tpu.core_type<tc>, window_params = [{transform_indices = @transform_0, window_bounds = array<i64: 1, 10, 10, 8>}, {pipeline_mode = #tpu.pipeline_mode<synchronous>, transform_indices = @transform_1, window_bounds = array<i64: 3, 3, 8>}, {transform_indices = @transform_2, window_bounds = array<i64: 1, 8, 8, 8>}]} {
    %c0 = arith.constant 0 : index
    %c0_0 = arith.constant 0 : index
    %c0_1 = arith.constant 0 : index
    %0 = vector.load %arg2[%c0, %c0_0, %c0_1] : memref<3x3x8xf32, #tpu.memory_space<vmem>>, vector<3x3x8xf32>
    %c0_2 = arith.constant 0 : index
    %c0_3 = arith.constant 0 : index
    %c0_4 = arith.constant 0 : index
    %c0_5 = arith.constant 0 : index
    %1 = vector.load %arg1[%c0_2, %c0_3, %c0_4, %c0_5] : memref<1x10x10x8xbf16, #tpu.memory_space<vmem>>, vector<1x8x8x8xbf16>
    %2 = vector.shape_cast %1 : vector<1x8x8x8xbf16> to vector<8x8x8xbf16>
    %3 = arith.extf %2 : vector<8x8x8xbf16> to vector<8x8x8xf32>
    %4 = vector.extract_strided_slice %0 {offsets = [0, 0, 0], sizes = [1, 1, 8], strides = [1, 1, 1]} : vector<3x3x8xf32> to vector<1x1x8xf32>
    %5 = vector.shape_cast %4 : vector<1x1x8xf32> to vector<1x8xf32>
    %6 = vector.shape_cast %5 : vector<1x8xf32> to vector<1x1x8xf32>
    %7 = vector.broadcast %6 : vector<1x1x8xf32> to vector<8x8x8xf32>
    %8 = arith.mulf %3, %7 : vector<8x8x8xf32>
    %c0_6 = arith.constant 0 : index
    %c0_7 = arith.constant 0 : index
    %c1 = arith.constant 1 : index
    %c0_8 = arith.constant 0 : index
    %9 = vector.load %arg1[%c0_6, %c0_7, %c1, %c0_8] : memref<1x10x10x8xbf16, #tpu.memory_space<vmem>>, vector<1x8x8x8xbf16>
    %10 = vector.shape_cast %9 : vector<1x8x8x8xbf16> to vector<8x8x8xbf16>
    %11 = arith.extf %10 : vector<8x8x8xbf16> to vector<8x8x8xf32>
    %12 = vector.extract_strided_slice %0 {offsets = [0, 1, 0], sizes = [1, 1, 8], strides = [1, 1, 1]} : vector<3x3x8xf32> to vector<1x1x8xf32>
    %13 = vector.shape_cast %12 : vector<1x1x8xf32> to vector<1x8xf32>
    %14 = vector.shape_cast %13 : vector<1x8xf32> to vector<1x1x8xf32>
    %15 = vector.broadcast %14 : vector<1x1x8xf32> to vector<8x8x8xf32>
    %16 = arith.mulf %11, %15 : vector<8x8x8xf32>
    %17 = arith.addf %8, %16 : vector<8x8x8xf32>
    %c0_9 = arith.constant 0 : index
    %c0_10 = arith.constant 0 : index
    %c2 = arith.constant 2 : index
    %c0_11 = arith.constant 0 : index
    %18 = vector.load %arg1[%c0_9, %c0_10, %c2, %c0_11] : memref<1x10x10x8xbf16, #tpu.memory_space<vmem>>, vector<1x8x8x8xbf16>
    %19 = vector.shape_cast %18 : vector<1x8x8x8xbf16> to vector<8x8x8xbf16>
    %20 = arith.extf %19 : vector<8x8x8xbf16> to vector<8x8x8xf32>
    %21 = vector.extract_strided_slice %0 {offsets = [0, 2, 0], sizes = [1, 1, 8], strides = [1, 1, 1]} : vector<3x3x8xf32> to vector<1x1x8xf32>
    %22 = vector.shape_cast %21 : vector<1x1x8xf32> to vector<1x8xf32>
    %23 = vector.shape_cast %22 : vector<1x8xf32> to vector<1x1x8xf32>
    %24 = vector.broadcast %23 : vector<1x1x8xf32> to vector<8x8x8xf32>
    %25 = arith.mulf %20, %24 : vector<8x8x8xf32>
    %26 = arith.addf %17, %25 : vector<8x8x8xf32>
    %c0_12 = arith.constant 0 : index
    %c1_13 = arith.constant 1 : index
    %c0_14 = arith.constant 0 : index
    %c0_15 = arith.constant 0 : index
    %27 = vector.load %arg1[%c0_12, %c1_13, %c0_14, %c0_15] : memref<1x10x10x8xbf16, #tpu.memory_space<vmem>>, vector<1x8x8x8xbf16>
    %28 = vector.shape_cast %27 : vector<1x8x8x8xbf16> to vector<8x8x8xbf16>
    %29 = arith.extf %28 : vector<8x8x8xbf16> to vector<8x8x8xf32>
    %30 = vector.extract_strided_slice %0 {offsets = [1, 0, 0], sizes = [1, 1, 8], strides = [1, 1, 1]} : vector<3x3x8xf32> to vector<1x1x8xf32>
    %31 = vector.shape_cast %30 : vector<1x1x8xf32> to vector<1x8xf32>
    %32 = vector.shape_cast %31 : vector<1x8xf32> to vector<1x1x8xf32>
    %33 = vector.broadcast %32 : vector<1x1x8xf32> to vector<8x8x8xf32>
    %34 = arith.mulf %29, %33 : vector<8x8x8xf32>
    %35 = arith.addf %26, %34 : vector<8x8x8xf32>
    %c0_16 = arith.constant 0 : index
    %c1_17 = arith.constant 1 : index
    %c1_18 = arith.constant 1 : index
    %c0_19 = arith.constant 0 : index
    %36 = vector.load %arg1[%c0_16, %c1_17, %c1_18, %c0_19] : memref<1x10x10x8xbf16, #tpu.memory_space<vmem>>, vector<1x8x8x8xbf16>
    %37 = vector.shape_cast %36 : vector<1x8x8x8xbf16> to vector<8x8x8xbf16>
    %38 = arith.extf %37 : vector<8x8x8xbf16> to vector<8x8x8xf32>
    %39 = vector.extract_strided_slice %0 {offsets = [1, 1, 0], sizes = [1, 1, 8], strides = [1, 1, 1]} : vector<3x3x8xf32> to vector<1x1x8xf32>
    %40 = vector.shape_cast %39 : vector<1x1x8xf32> to vector<1x8xf32>
    %41 = vector.shape_cast %40 : vector<1x8xf32> to vector<1x1x8xf32>
    %42 = vector.broadcast %41 : vector<1x1x8xf32> to vector<8x8x8xf32>
    %43 = arith.mulf %38, %42 : vector<8x8x8xf32>
    %44 = arith.addf %35, %43 : vector<8x8x8xf32>
    %c0_20 = arith.constant 0 : index
    %c1_21 = arith.constant 1 : index
    %c2_22 = arith.constant 2 : index
    %c0_23 = arith.constant 0 : index
    %45 = vector.load %arg1[%c0_20, %c1_21, %c2_22, %c0_23] : memref<1x10x10x8xbf16, #tpu.memory_space<vmem>>, vector<1x8x8x8xbf16>
    %46 = vector.shape_cast %45 : vector<1x8x8x8xbf16> to vector<8x8x8xbf16>
    %47 = arith.extf %46 : vector<8x8x8xbf16> to vector<8x8x8xf32>
    %48 = vector.extract_strided_slice %0 {offsets = [1, 2, 0], sizes = [1, 1, 8], strides = [1, 1, 1]} : vector<3x3x8xf32> to vector<1x1x8xf32>
    %49 = vector.shape_cast %48 : vector<1x1x8xf32> to vector<1x8xf32>
    %50 = vector.shape_cast %49 : vector<1x8xf32> to vector<1x1x8xf32>
    %51 = vector.broadcast %50 : vector<1x1x8xf32> to vector<8x8x8xf32>
    %52 = arith.mulf %47, %51 : vector<8x8x8xf32>
    %53 = arith.addf %44, %52 : vector<8x8x8xf32>
    %c0_24 = arith.constant 0 : index
    %c2_25 = arith.constant 2 : index
    %c0_26 = arith.constant 0 : index
    %c0_27 = arith.constant 0 : index
    %54 = vector.load %arg1[%c0_24, %c2_25, %c0_26, %c0_27] : memref<1x10x10x8xbf16, #tpu.memory_space<vmem>>, vector<1x8x8x8xbf16>
    %55 = vector.shape_cast %54 : vector<1x8x8x8xbf16> to vector<8x8x8xbf16>
    %56 = arith.extf %55 : vector<8x8x8xbf16> to vector<8x8x8xf32>
    %57 = vector.extract_strided_slice %0 {offsets = [2, 0, 0], sizes = [1, 1, 8], strides = [1, 1, 1]} : vector<3x3x8xf32> to vector<1x1x8xf32>
    %58 = vector.shape_cast %57 : vector<1x1x8xf32> to vector<1x8xf32>
    %59 = vector.shape_cast %58 : vector<1x8xf32> to vector<1x1x8xf32>
    %60 = vector.broadcast %59 : vector<1x1x8xf32> to vector<8x8x8xf32>
    %61 = arith.mulf %56, %60 : vector<8x8x8xf32>
    %62 = arith.addf %53, %61 : vector<8x8x8xf32>
    %c0_28 = arith.constant 0 : index
    %c2_29 = arith.constant 2 : index
    %c1_30 = arith.constant 1 : index
    %c0_31 = arith.constant 0 : index
    %63 = vector.load %arg1[%c0_28, %c2_29, %c1_30, %c0_31] : memref<1x10x10x8xbf16, #tpu.memory_space<vmem>>, vector<1x8x8x8xbf16>
    %64 = vector.shape_cast %63 : vector<1x8x8x8xbf16> to vector<8x8x8xbf16>
    %65 = arith.extf %64 : vector<8x8x8xbf16> to vector<8x8x8xf32>
    %66 = vector.extract_strided_slice %0 {offsets = [2, 1, 0], sizes = [1, 1, 8], strides = [1, 1, 1]} : vector<3x3x8xf32> to vector<1x1x8xf32>
    %67 = vector.shape_cast %66 : vector<1x1x8xf32> to vector<1x8xf32>
    %68 = vector.shape_cast %67 : vector<1x8xf32> to vector<1x1x8xf32>
    %69 = vector.broadcast %68 : vector<1x1x8xf32> to vector<8x8x8xf32>
    %70 = arith.mulf %65, %69 : vector<8x8x8xf32>
    %71 = arith.addf %62, %70 : vector<8x8x8xf32>
    %c0_32 = arith.constant 0 : index
    %c2_33 = arith.constant 2 : index
    %c2_34 = arith.constant 2 : index
    %c0_35 = arith.constant 0 : index
    %72 = vector.load %arg1[%c0_32, %c2_33, %c2_34, %c0_35] : memref<1x10x10x8xbf16, #tpu.memory_space<vmem>>, vector<1x8x8x8xbf16>
    %73 = vector.shape_cast %72 : vector<1x8x8x8xbf16> to vector<8x8x8xbf16>
    %74 = arith.extf %73 : vector<8x8x8xbf16> to vector<8x8x8xf32>
    %75 = vector.extract_strided_slice %0 {offsets = [2, 2, 0], sizes = [1, 1, 8], strides = [1, 1, 1]} : vector<3x3x8xf32> to vector<1x1x8xf32>
    %76 = vector.shape_cast %75 : vector<1x1x8xf32> to vector<1x8xf32>
    %77 = vector.shape_cast %76 : vector<1x8xf32> to vector<1x1x8xf32>
    %78 = vector.broadcast %77 : vector<1x1x8xf32> to vector<8x8x8xf32>
    %79 = arith.mulf %74, %78 : vector<8x8x8xf32>
    %80 = arith.addf %71, %79 : vector<8x8x8xf32>
    %cst = arith.constant 0.000000e+00 : f32
    %81 = vector.broadcast %cst : f32 to vector<8x8x8xf32>
    %82 = arith.maximumf %80, %81 : vector<8x8x8xf32>
    %83 = arith.truncf %82 : vector<8x8x8xf32> to vector<8x8x8xbf16>
    %c0_36 = arith.constant 0 : index
    %c0_37 = arith.constant 0 : index
    %c0_38 = arith.constant 0 : index
    %c0_39 = arith.constant 0 : index
    %84 = vector.load %arg3[%c0_36, %c0_37, %c0_38, %c0_39] : memref<1x8x8x8xbf16, #tpu.memory_space<vmem>>, vector<1x8x8x8xbf16>
    %85 = vector.shape_cast %84 : vector<1x8x8x8xbf16> to vector<8x8x8xbf16>
    %86 = vector.shape_cast %83 : vector<8x8x8xbf16> to vector<1x8x8x8xbf16>
    tpu.vector_store %arg3[%c0_36, %c0_37, %c0_38, %c0_39], %86 {strides = array<i32>} : memref<1x8x8x8xbf16, #tpu.memory_space<vmem>>, vector<1x8x8x8xbf16>,
    return
  }
  func.func @transform_0(%arg0: i32) -> (i32, i32, i32, i32) {
    %c0_i32 = arith.constant 0 : i32
    %c0_i32_0 = arith.constant 0 : i32
    %c0_i32_1 = arith.constant 0 : i32
    %c0_i32_2 = arith.constant 0 : i32
    return %arg0, %c0_i32, %c0_i32_0, %c0_i32_1 : i32, i32, i32, i32
  }
  func.func @transform_1(%arg0: i32) -> (i32, i32, i32) {
    %c0_i32 = arith.constant 0 : i32
    %c0_i32_0 = arith.constant 0 : i32
    %c0_i32_1 = arith.constant 0 : i32
    %c0_i32_2 = arith.constant 0 : i32
    return %c0_i32, %c0_i32_0, %c0_i32_1 : i32, i32, i32
  }
  func.func @transform_2(%arg0: i32) -> (i32, i32, i32, i32) {
    %c0_i32 = arith.constant 0 : i32
    %c0_i32_0 = arith.constant 0 : i32
    %c0_i32_1 = arith.constant 0 : i32
    %c0_i32_2 = arith.constant 0 : i32
    return %arg0, %c0_i32, %c0_i32_0, %c0_i32_1 : i32, i32, i32, i32
  }
}

module attributes {stable_mosaic.version = 11 : i64} {
  func.func @_mm_kernel(%arg0: i32, %arg1: i32, %arg2: i32, %arg3: i32, %arg4: memref<1x128x128xbf16, #tpu.memory_space<vmem>>, %arg5: memref<128x128xbf16, #tpu.memory_space<vmem>>, %arg6: memref<1x128x128xbf16, #tpu.memory_space<vmem>>, %arg7: memref<128x128xf32, #tpu.memory_space<vmem>>) attributes {dimension_semantics = [#tpu.dimension_semantics<parallel>, #tpu.dimension_semantics<parallel>, #tpu.dimension_semantics<parallel>, #tpu.dimension_semantics<arbitrary>], iteration_bounds = array<i64: 1, 1, 1, 1>, scalar_prefetch = 0 : i64, scratch_operands = 1 : i64, tpu.core_type = #tpu.core_type<tc>, window_params = [{transform_indices = @transform_0, window_bounds = array<i64: 1, 128, 128>}, {transform_indices = @transform_1, window_bounds = array<i64: 128, 128>}, {transform_indices = @transform_2, window_bounds = array<i64: 1, 128, 128>}]} {
    %c0_i32 = arith.constant 0 : i32
    %0 = arith.cmpi eq, %arg3, %c0_i32 : i32
    %1 = arith.extui %0 : i1 to i32
    %c0_i32_0 = arith.constant 0 : i32
    %2 = arith.cmpi ne, %1, %c0_i32_0 : i32
    scf.if %2 {
      %cst_11 = arith.constant 0.000000e+00 : f32
      %13 = vector.broadcast %cst_11 : f32 to vector<128x128xf32>
      %c0_12 = arith.constant 0 : index
      %c0_13 = arith.constant 0 : index
      %14 = vector.load %arg7[%c0_12, %c0_13] : memref<128x128xf32, #tpu.memory_space<vmem>>, vector<128x128xf32>
      tpu.vector_store %arg7[%c0_12, %c0_13], %13 {strides = array<i32>} : memref<128x128xf32, #tpu.memory_space<vmem>>, vector<128x128xf32>,
    } else {
    }
    %c0 = arith.constant 0 : index
    %c0_1 = arith.constant 0 : index
    %c0_2 = arith.constant 0 : index
    %3 = vector.load %arg4[%c0, %c0_1, %c0_2] : memref<1x128x128xbf16, #tpu.memory_space<vmem>>, vector<1x128x128xbf16>
    %4 = vector.shape_cast %3 : vector<1x128x128xbf16> to vector<128x128xbf16>
    %c0_3 = arith.constant 0 : index
    %c0_4 = arith.constant 0 : index
    %5 = vector.load %arg7[%c0_3, %c0_4] : memref<128x128xf32, #tpu.memory_space<vmem>>, vector<128x128xf32>
    %c0_5 = arith.constant 0 : index
    %c0_6 = arith.constant 0 : index
    %6 = vector.load %arg5[%c0_5, %c0_6] : memref<128x128xbf16, #tpu.memory_space<vmem>>, vector<128x128xbf16>
    %cst = arith.constant dense<0.000000e+00> : vector<128x128xf32>
    %7 = tpu.matmul %4, %6, %cst {dimension_numbers = #tpu.dot_dimension_numbers<[1], [0], [0], [1], [0, 0, 1, 1], [], []>} : vector<128x128xbf16>, vector<128x128xbf16>, vector<128x128xf32> -> vector<128x128xf32>
    %8 = arith.addf %5, %7 : vector<128x128xf32>
    %c0_7 = arith.constant 0 : index
    %c0_8 = arith.constant 0 : index
    %9 = vector.load %arg7[%c0_7, %c0_8] : memref<128x128xf32, #tpu.memory_space<vmem>>, vector<128x128xf32>
    tpu.vector_store %arg7[%c0_7, %c0_8], %8 {strides = array<i32>} : memref<128x128xf32, #tpu.memory_space<vmem>>, vector<128x128xf32>,
    %c0_i32_9 = arith.constant 0 : i32
    %10 = arith.cmpi eq, %arg3, %c0_i32_9 : i32
    %11 = arith.extui %10 : i1 to i32
    %c0_i32_10 = arith.constant 0 : i32
    %12 = arith.cmpi ne, %11, %c0_i32_10 : i32
    scf.if %12 {
      %c0_11 = arith.constant 0 : index
      %c0_12 = arith.constant 0 : index
      %13 = vector.load %arg7[%c0_11, %c0_12] : memref<128x128xf32, #tpu.memory_space<vmem>>, vector<128x128xf32>
      %cst_13 = arith.constant 3.000000e+00 : f32
      %14 = vector.broadcast %cst_13 : f32 to vector<128x128xf32>
      %15 = arith.addf %13, %14 : vector<128x128xf32>
      %cst_14 = arith.constant 0.000000e+00 : f32
      %cst_15 = arith.constant 6.000000e+00 : f32
      %16 = vector.broadcast %cst_14 : f32 to vector<128x128xf32>
      %17 = arith.maximumf %16, %15 : vector<128x128xf32>
      %18 = vector.broadcast %cst_15 : f32 to vector<128x128xf32>
      %19 = arith.minimumf %18, %17 : vector<128x128xf32>
      %20 = arith.mulf %13, %19 : vector<128x128xf32>
      %cst_16 = arith.constant 0.166666672 : f32
      %21 = vector.broadcast %cst_16 : f32 to vector<128x128xf32>
      %22 = arith.mulf %20, %21 : vector<128x128xf32>
      %23 = arith.truncf %22 : vector<128x128xf32> to vector<128x128xbf16>
      %c0_17 = arith.constant 0 : index
      %c0_18 = arith.constant 0 : index
      %c0_19 = arith.constant 0 : index
      %24 = vector.load %arg6[%c0_17, %c0_18, %c0_19] : memref<1x128x128xbf16, #tpu.memory_space<vmem>>, vector<1x128x128xbf16>
      %25 = vector.shape_cast %24 : vector<1x128x128xbf16> to vector<128x128xbf16>
      %26 = vector.shape_cast %23 : vector<128x128xbf16> to vector<1x128x128xbf16>
      tpu.vector_store %arg6[%c0_17, %c0_18, %c0_19], %26 {strides = array<i32>} : memref<1x128x128xbf16, #tpu.memory_space<vmem>>, vector<1x128x128xbf16>,
    } else {
    }
    return
  }
  func.func @transform_0(%arg0: i32, %arg1: i32, %arg2: i32, %arg3: i32) -> (i32, i32, i32) {
    %c0_i32 = arith.constant 0 : i32
    return %arg0, %arg1, %arg3 : i32, i32, i32
  }
  func.func @transform_1(%arg0: i32, %arg1: i32, %arg2: i32, %arg3: i32) -> (i32, i32) {
    %c0_i32 = arith.constant 0 : i32
    return %arg3, %arg2 : i32, i32
  }
  func.func @transform_2(%arg0: i32, %arg1: i32, %arg2: i32, %arg3: i32) -> (i32, i32, i32) {
    %c0_i32 = arith.constant 0 : i32
    return %arg0, %arg1, %arg2 : i32, i32, i32
  }
}

module attributes {stable_mosaic.version = 11 : i64} {
  func.func @_pool_kernel(%arg0: i32, %arg1: memref<2x64x8xbf16, #tpu.memory_space<vmem>>, %arg2: memref<2x8xf32, #tpu.memory_space<vmem>>, %arg3: memref<2x8xf32, #tpu.memory_space<vmem>>) attributes {dimension_semantics = [#tpu.dimension_semantics<arbitrary>], iteration_bounds = array<i64: 1>, scalar_prefetch = 0 : i64, scratch_operands = 1 : i64, tpu.core_type = #tpu.core_type<tc>, window_params = [{transform_indices = @transform_0, window_bounds = array<i64: 2, 64, 8>}, {pipeline_mode = #tpu.pipeline_mode<synchronous>, transform_indices = @transform_1, window_bounds = array<i64: 2, 8>}]} {
    %c0_i32 = arith.constant 0 : i32
    %0 = arith.cmpi eq, %arg0, %c0_i32 : i32
    %1 = arith.extui %0 : i1 to i32
    %c0_i32_0 = arith.constant 0 : i32
    %2 = arith.cmpi ne, %1, %c0_i32_0 : i32
    scf.if %2 {
      %cst_9 = arith.constant 0.000000e+00 : f32
      %12 = vector.broadcast %cst_9 : f32 to vector<2x8xf32>
      %c0_10 = arith.constant 0 : index
      %c0_11 = arith.constant 0 : index
      %13 = vector.load %arg3[%c0_10, %c0_11] : memref<2x8xf32, #tpu.memory_space<vmem>>, vector<2x8xf32>
      tpu.vector_store %arg3[%c0_10, %c0_11], %12 {strides = array<i32>} : memref<2x8xf32, #tpu.memory_space<vmem>>, vector<2x8xf32>,
    } else {
    }
    %c0 = arith.constant 0 : index
    %c0_1 = arith.constant 0 : index
    %3 = vector.load %arg3[%c0, %c0_1] : memref<2x8xf32, #tpu.memory_space<vmem>>, vector<2x8xf32>
    %c0_2 = arith.constant 0 : index
    %c0_3 = arith.constant 0 : index
    %c0_4 = arith.constant 0 : index
    %4 = vector.load %arg1[%c0_2, %c0_3, %c0_4] : memref<2x64x8xbf16, #tpu.memory_space<vmem>>, vector<2x64x8xbf16>
    %5 = arith.extf %4 : vector<2x64x8xbf16> to vector<2x64x8xf32>
    %cst = arith.constant dense<0.000000e+00> : vector<2x8xf32>
    %6 = vector.multi_reduction <add>, %5, %cst [1] : vector<2x64x8xf32> to vector<2x8xf32>
    %7 = arith.addf %3, %6 : vector<2x8xf32>
    %c0_5 = arith.constant 0 : index
    %c0_6 = arith.constant 0 : index
    %8 = vector.load %arg3[%c0_5, %c0_6] : memref<2x8xf32, #tpu.memory_space<vmem>>, vector<2x8xf32>
    tpu.vector_store %arg3[%c0_5, %c0_6], %7 {strides = array<i32>} : memref<2x8xf32, #tpu.memory_space<vmem>>, vector<2x8xf32>,
    %c0_i32_7 = arith.constant 0 : i32
    %9 = arith.cmpi eq, %arg0, %c0_i32_7 : i32
    %10 = arith.extui %9 : i1 to i32
    %c0_i32_8 = arith.constant 0 : i32
    %11 = arith.cmpi ne, %10, %c0_i32_8 : i32
    scf.if %11 {
      %c0_9 = arith.constant 0 : index
      %c0_10 = arith.constant 0 : index
      %12 = vector.load %arg3[%c0_9, %c0_10] : memref<2x8xf32, #tpu.memory_space<vmem>>, vector<2x8xf32>
      %cst_11 = arith.constant 1.562500e-02 : f32
      %13 = vector.broadcast %cst_11 : f32 to vector<2x8xf32>
      %14 = arith.mulf %12, %13 : vector<2x8xf32>
      %c0_12 = arith.constant 0 : index
      %c0_13 = arith.constant 0 : index
      %15 = vector.load %arg2[%c0_12, %c0_13] : memref<2x8xf32, #tpu.memory_space<vmem>>, vector<2x8xf32>
      tpu.vector_store %arg2[%c0_12, %c0_13], %14 {strides = array<i32>} : memref<2x8xf32, #tpu.memory_space<vmem>>, vector<2x8xf32>,
    } else {
    }
    return
  }
  func.func @transform_0(%arg0: i32) -> (i32, i32, i32) {
    %c0_i32 = arith.constant 0 : i32
    %c0_i32_0 = arith.constant 0 : i32
    %c0_i32_1 = arith.constant 0 : i32
    return %c0_i32, %arg0, %c0_i32_0 : i32, i32, i32
  }
  func.func @transform_1(%arg0: i32) -> (i32, i32) {
    %c0_i32 = arith.constant 0 : i32
    %c0_i32_0 = arith.constant 0 : i32
    %c0_i32_1 = arith.constant 0 : i32
    return %c0_i32, %c0_i32_0 : i32, i32
  }
}

module attributes {stable_mosaic.version = 11 : i64} {
  func.func @_mm_kernel(%arg0: i32, %arg1: i32, %arg2: i32, %arg3: i32, %arg4: memref<1x8x128xbf16, #tpu.memory_space<vmem>>, %arg5: memref<128x128xbf16, #tpu.memory_space<vmem>>, %arg6: memref<1x128xf32, #tpu.memory_space<vmem>>, %arg7: memref<1x8x128xf32, #tpu.memory_space<vmem>>, %arg8: memref<8x128xf32, #tpu.memory_space<vmem>>) attributes {dimension_semantics = [#tpu.dimension_semantics<parallel>, #tpu.dimension_semantics<parallel>, #tpu.dimension_semantics<parallel>, #tpu.dimension_semantics<arbitrary>], iteration_bounds = array<i64: 1, 1, 1, 1>, scalar_prefetch = 0 : i64, scratch_operands = 1 : i64, tpu.core_type = #tpu.core_type<tc>, window_params = [{transform_indices = @transform_0, window_bounds = array<i64: 1, 8, 128>}, {transform_indices = @transform_1, window_bounds = array<i64: 128, 128>}, {transform_indices = @transform_2, window_bounds = array<i64: 1, 128>}, {transform_indices = @transform_3, window_bounds = array<i64: 1, 8, 128>}]} {
    %c0_i32 = arith.constant 0 : i32
    %0 = arith.cmpi eq, %arg3, %c0_i32 : i32
    %1 = arith.extui %0 : i1 to i32
    %c0_i32_0 = arith.constant 0 : i32
    %2 = arith.cmpi ne, %1, %c0_i32_0 : i32
    scf.if %2 {
      %cst_11 = arith.constant 0.000000e+00 : f32
      %13 = vector.broadcast %cst_11 : f32 to vector<8x128xf32>
      %c0_12 = arith.constant 0 : index
      %c0_13 = arith.constant 0 : index
      %14 = vector.load %arg8[%c0_12, %c0_13] : memref<8x128xf32, #tpu.memory_space<vmem>>, vector<8x128xf32>
      tpu.vector_store %arg8[%c0_12, %c0_13], %13 {strides = array<i32>} : memref<8x128xf32, #tpu.memory_space<vmem>>, vector<8x128xf32>,
    } else {
    }
    %c0 = arith.constant 0 : index
    %c0_1 = arith.constant 0 : index
    %c0_2 = arith.constant 0 : index
    %3 = vector.load %arg4[%c0, %c0_1, %c0_2] : memref<1x8x128xbf16, #tpu.memory_space<vmem>>, vector<1x8x128xbf16>
    %4 = vector.shape_cast %3 : vector<1x8x128xbf16> to vector<8x128xbf16>
    %c0_3 = arith.constant 0 : index
    %c0_4 = arith.constant 0 : index
    %5 = vector.load %arg8[%c0_3, %c0_4] : memref<8x128xf32, #tpu.memory_space<vmem>>, vector<8x128xf32>
    %c0_5 = arith.constant 0 : index
    %c0_6 = arith.constant 0 : index
    %6 = vector.load %arg5[%c0_5, %c0_6] : memref<128x128xbf16, #tpu.memory_space<vmem>>, vector<128x128xbf16>
    %cst = arith.constant dense<0.000000e+00> : vector<8x128xf32>
    %7 = tpu.matmul %4, %6, %cst {dimension_numbers = #tpu.dot_dimension_numbers<[1], [0], [0], [1], [0, 0, 1, 1], [], []>} : vector<8x128xbf16>, vector<128x128xbf16>, vector<8x128xf32> -> vector<8x128xf32>
    %8 = arith.addf %5, %7 : vector<8x128xf32>
    %c0_7 = arith.constant 0 : index
    %c0_8 = arith.constant 0 : index
    %9 = vector.load %arg8[%c0_7, %c0_8] : memref<8x128xf32, #tpu.memory_space<vmem>>, vector<8x128xf32>
    tpu.vector_store %arg8[%c0_7, %c0_8], %8 {strides = array<i32>} : memref<8x128xf32, #tpu.memory_space<vmem>>, vector<8x128xf32>,
    %c0_i32_9 = arith.constant 0 : i32
    %10 = arith.cmpi eq, %arg3, %c0_i32_9 : i32
    %11 = arith.extui %10 : i1 to i32
    %c0_i32_10 = arith.constant 0 : i32
    %12 = arith.cmpi ne, %11, %c0_i32_10 : i32
    scf.if %12 {
      %c0_11 = arith.constant 0 : index
      %c0_12 = arith.constant 0 : index
      %13 = vector.load %arg8[%c0_11, %c0_12] : memref<8x128xf32, #tpu.memory_space<vmem>>, vector<8x128xf32>
      %c0_13 = arith.constant 0 : index
      %c0_14 = arith.constant 0 : index
      %14 = vector.load %arg6[%c0_13, %c0_14] : memref<1x128xf32, #tpu.memory_space<vmem>>, vector<1x128xf32>
      %15 = vector.broadcast %14 : vector<1x128xf32> to vector<8x128xf32>
      %16 = arith.addf %13, %15 : vector<8x128xf32>
      %cst_15 = arith.constant 0.000000e+00 : f32
      %17 = vector.broadcast %cst_15 : f32 to vector<8x128xf32>
      %18 = arith.maximumf %16, %17 : vector<8x128xf32>
      %c0_16 = arith.constant 0 : index
      %c0_17 = arith.constant 0 : index
      %c0_18 = arith.constant 0 : index
      %19 = vector.load %arg7[%c0_16, %c0_17, %c0_18] : memref<1x8x128xf32, #tpu.memory_space<vmem>>, vector<1x8x128xf32>
      %20 = vector.shape_cast %19 : vector<1x8x128xf32> to vector<8x128xf32>
      %21 = vector.shape_cast %18 : vector<8x128xf32> to vector<1x8x128xf32>
      tpu.vector_store %arg7[%c0_16, %c0_17, %c0_18], %21 {strides = array<i32>} : memref<1x8x128xf32, #tpu.memory_space<vmem>>, vector<1x8x128xf32>,
    } else {
    }
    return
  }
  func.func @transform_0(%arg0: i32, %arg1: i32, %arg2: i32, %arg3: i32) -> (i32, i32, i32) {
    %c0_i32 = arith.constant 0 : i32
    return %arg0, %arg1, %arg3 : i32, i32, i32
  }
  func.func @transform_1(%arg0: i32, %arg1: i32, %arg2: i32, %arg3: i32) -> (i32, i32) {
    %c0_i32 = arith.constant 0 : i32
    return %arg3, %arg2 : i32, i32
  }
  func.func @transform_2(%arg0: i32, %arg1: i32, %arg2: i32, %arg3: i32) -> (i32, i32) {
    %c0_i32 = arith.constant 0 : i32
    %c0_i32_0 = arith.constant 0 : i32
    return %c0_i32, %arg2 : i32, i32
  }
  func.func @transform_3(%arg0: i32, %arg1: i32, %arg2: i32, %arg3: i32) -> (i32, i32, i32) {
    %c0_i32 = arith.constant 0 : i32
    return %arg0, %arg1, %arg2 : i32, i32, i32
  }
}

module attributes {stable_mosaic.version = 11 : i64} {
  func.func @_mm_kernel(%arg0: i32, %arg1: i32, %arg2: i32, %arg3: i32, %arg4: memref<1x8x128xbf16, #tpu.memory_space<vmem>>, %arg5: memref<128x128xbf16, #tpu.memory_space<vmem>>, %arg6: memref<1x128xf32, #tpu.memory_space<vmem>>, %arg7: memref<1x8x128xf32, #tpu.memory_space<vmem>>, %arg8: memref<8x128xf32, #tpu.memory_space<vmem>>) attributes {dimension_semantics = [#tpu.dimension_semantics<parallel>, #tpu.dimension_semantics<parallel>, #tpu.dimension_semantics<parallel>, #tpu.dimension_semantics<arbitrary>], iteration_bounds = array<i64: 1, 1, 1, 1>, scalar_prefetch = 0 : i64, scratch_operands = 1 : i64, tpu.core_type = #tpu.core_type<tc>, window_params = [{transform_indices = @transform_0, window_bounds = array<i64: 1, 8, 128>}, {transform_indices = @transform_1, window_bounds = array<i64: 128, 128>}, {transform_indices = @transform_2, window_bounds = array<i64: 1, 128>}, {transform_indices = @transform_3, window_bounds = array<i64: 1, 8, 128>}]} {
    %c0_i32 = arith.constant 0 : i32
    %0 = arith.cmpi eq, %arg3, %c0_i32 : i32
    %1 = arith.extui %0 : i1 to i32
    %c0_i32_0 = arith.constant 0 : i32
    %2 = arith.cmpi ne, %1, %c0_i32_0 : i32
    scf.if %2 {
      %cst_11 = arith.constant 0.000000e+00 : f32
      %13 = vector.broadcast %cst_11 : f32 to vector<8x128xf32>
      %c0_12 = arith.constant 0 : index
      %c0_13 = arith.constant 0 : index
      %14 = vector.load %arg8[%c0_12, %c0_13] : memref<8x128xf32, #tpu.memory_space<vmem>>, vector<8x128xf32>
      tpu.vector_store %arg8[%c0_12, %c0_13], %13 {strides = array<i32>} : memref<8x128xf32, #tpu.memory_space<vmem>>, vector<8x128xf32>,
    } else {
    }
    %c0 = arith.constant 0 : index
    %c0_1 = arith.constant 0 : index
    %c0_2 = arith.constant 0 : index
    %3 = vector.load %arg4[%c0, %c0_1, %c0_2] : memref<1x8x128xbf16, #tpu.memory_space<vmem>>, vector<1x8x128xbf16>
    %4 = vector.shape_cast %3 : vector<1x8x128xbf16> to vector<8x128xbf16>
    %c0_3 = arith.constant 0 : index
    %c0_4 = arith.constant 0 : index
    %5 = vector.load %arg8[%c0_3, %c0_4] : memref<8x128xf32, #tpu.memory_space<vmem>>, vector<8x128xf32>
    %c0_5 = arith.constant 0 : index
    %c0_6 = arith.constant 0 : index
    %6 = vector.load %arg5[%c0_5, %c0_6] : memref<128x128xbf16, #tpu.memory_space<vmem>>, vector<128x128xbf16>
    %cst = arith.constant dense<0.000000e+00> : vector<8x128xf32>
    %7 = tpu.matmul %4, %6, %cst {dimension_numbers = #tpu.dot_dimension_numbers<[1], [0], [0], [1], [0, 0, 1, 1], [], []>} : vector<8x128xbf16>, vector<128x128xbf16>, vector<8x128xf32> -> vector<8x128xf32>
    %8 = arith.addf %5, %7 : vector<8x128xf32>
    %c0_7 = arith.constant 0 : index
    %c0_8 = arith.constant 0 : index
    %9 = vector.load %arg8[%c0_7, %c0_8] : memref<8x128xf32, #tpu.memory_space<vmem>>, vector<8x128xf32>
    tpu.vector_store %arg8[%c0_7, %c0_8], %8 {strides = array<i32>} : memref<8x128xf32, #tpu.memory_space<vmem>>, vector<8x128xf32>,
    %c0_i32_9 = arith.constant 0 : i32
    %10 = arith.cmpi eq, %arg3, %c0_i32_9 : i32
    %11 = arith.extui %10 : i1 to i32
    %c0_i32_10 = arith.constant 0 : i32
    %12 = arith.cmpi ne, %11, %c0_i32_10 : i32
    scf.if %12 {
      %c0_11 = arith.constant 0 : index
      %c0_12 = arith.constant 0 : index
      %13 = vector.load %arg8[%c0_11, %c0_12] : memref<8x128xf32, #tpu.memory_space<vmem>>, vector<8x128xf32>
      %c0_13 = arith.constant 0 : index
      %c0_14 = arith.constant 0 : index
      %14 = vector.load %arg6[%c0_13, %c0_14] : memref<1x128xf32, #tpu.memory_space<vmem>>, vector<1x128xf32>
      %15 = vector.broadcast %14 : vector<1x128xf32> to vector<8x128xf32>
      %16 = arith.addf %13, %15 : vector<8x128xf32>
      %cst_15 = arith.constant 3.000000e+00 : f32
      %17 = vector.broadcast %cst_15 : f32 to vector<8x128xf32>
      %18 = arith.addf %16, %17 : vector<8x128xf32>
      %cst_16 = arith.constant 0.000000e+00 : f32
      %cst_17 = arith.constant 6.000000e+00 : f32
      %19 = vector.broadcast %cst_16 : f32 to vector<8x128xf32>
      %20 = arith.maximumf %19, %18 : vector<8x128xf32>
      %21 = vector.broadcast %cst_17 : f32 to vector<8x128xf32>
      %22 = arith.minimumf %21, %20 : vector<8x128xf32>
      %cst_18 = arith.constant 0.166666672 : f32
      %23 = vector.broadcast %cst_18 : f32 to vector<8x128xf32>
      %24 = arith.mulf %22, %23 : vector<8x128xf32>
      %c0_19 = arith.constant 0 : index
      %c0_20 = arith.constant 0 : index
      %c0_21 = arith.constant 0 : index
      %25 = vector.load %arg7[%c0_19, %c0_20, %c0_21] : memref<1x8x128xf32, #tpu.memory_space<vmem>>, vector<1x8x128xf32>
      %26 = vector.shape_cast %25 : vector<1x8x128xf32> to vector<8x128xf32>
      %27 = vector.shape_cast %24 : vector<8x128xf32> to vector<1x8x128xf32>
      tpu.vector_store %arg7[%c0_19, %c0_20, %c0_21], %27 {strides = array<i32>} : memref<1x8x128xf32, #tpu.memory_space<vmem>>, vector<1x8x128xf32>,
    } else {
    }
    return
  }
  func.func @transform_0(%arg0: i32, %arg1: i32, %arg2: i32, %arg3: i32) -> (i32, i32, i32) {
    %c0_i32 = arith.constant 0 : i32
    return %arg0, %arg1, %arg3 : i32, i32, i32
  }
  func.func @transform_1(%arg0: i32, %arg1: i32, %arg2: i32, %arg3: i32) -> (i32, i32) {
    %c0_i32 = arith.constant 0 : i32
    return %arg3, %arg2 : i32, i32
  }
  func.func @transform_2(%arg0: i32, %arg1: i32, %arg2: i32, %arg3: i32) -> (i32, i32) {
    %c0_i32 = arith.constant 0 : i32
    %c0_i32_0 = arith.constant 0 : i32
    return %c0_i32, %arg2 : i32, i32
  }
  func.func @transform_3(%arg0: i32, %arg1: i32, %arg2: i32, %arg3: i32) -> (i32, i32, i32) {
    %c0_i32 = arith.constant 0 : i32
    return %arg0, %arg1, %arg2 : i32, i32, i32
  }
}

module attributes {stable_mosaic.version = 11 : i64} {
  func.func @_mm_kernel(%arg0: i32, %arg1: i32, %arg2: i32, %arg3: i32, %arg4: memref<1x64x128xbf16, #tpu.memory_space<vmem>>, %arg5: memref<128x128xbf16, #tpu.memory_space<vmem>>, %arg6: memref<1x1x128xf32, #tpu.memory_space<vmem>>, %arg7: memref<1x64x128xbf16, #tpu.memory_space<vmem>>, %arg8: memref<1x64x128xbf16, #tpu.memory_space<vmem>>, %arg9: memref<64x128xf32, #tpu.memory_space<vmem>>) attributes {dimension_semantics = [#tpu.dimension_semantics<parallel>, #tpu.dimension_semantics<parallel>, #tpu.dimension_semantics<parallel>, #tpu.dimension_semantics<arbitrary>], iteration_bounds = array<i64: 2, 1, 1, 1>, scalar_prefetch = 0 : i64, scratch_operands = 1 : i64, tpu.core_type = #tpu.core_type<tc>, window_params = [{transform_indices = @transform_0, window_bounds = array<i64: 1, 64, 128>}, {transform_indices = @transform_1, window_bounds = array<i64: 128, 128>}, {transform_indices = @transform_2, window_bounds = array<i64: 1, 1, 128>}, {transform_indices = @transform_3, window_bounds = array<i64: 1, 64, 128>}, {transform_indices = @transform_4, window_bounds = array<i64: 1, 64, 128>}]} {
    %c0_i32 = arith.constant 0 : i32
    %0 = arith.cmpi eq, %arg3, %c0_i32 : i32
    %1 = arith.extui %0 : i1 to i32
    %c0_i32_0 = arith.constant 0 : i32
    %2 = arith.cmpi ne, %1, %c0_i32_0 : i32
    scf.if %2 {
      %cst_14 = arith.constant 0.000000e+00 : f32
      %19 = vector.broadcast %cst_14 : f32 to vector<64x128xf32>
      %c0_15 = arith.constant 0 : index
      %c0_16 = arith.constant 0 : index
      %20 = vector.load %arg9[%c0_15, %c0_16] : memref<64x128xf32, #tpu.memory_space<vmem>>, vector<64x128xf32>
      tpu.vector_store %arg9[%c0_15, %c0_16], %19 {strides = array<i32>} : memref<64x128xf32, #tpu.memory_space<vmem>>, vector<64x128xf32>,
    } else {
    }
    %c0 = arith.constant 0 : index
    %c0_1 = arith.constant 0 : index
    %c0_2 = arith.constant 0 : index
    %3 = vector.load %arg4[%c0, %c0_1, %c0_2] : memref<1x64x128xbf16, #tpu.memory_space<vmem>>, vector<1x64x128xbf16>
    %4 = vector.shape_cast %3 : vector<1x64x128xbf16> to vector<64x128xbf16>
    %5 = arith.extf %4 : vector<64x128xbf16> to vector<64x128xf32>
    %c0_3 = arith.constant 0 : index
    %c0_4 = arith.constant 0 : index
    %c0_5 = arith.constant 0 : index
    %6 = vector.load %arg6[%c0_3, %c0_4, %c0_5] : memref<1x1x128xf32, #tpu.memory_space<vmem>>, vector<1x1x128xf32>
    %7 = vector.shape_cast %6 : vector<1x1x128xf32> to vector<1x128xf32>
    %8 = vector.broadcast %7 : vector<1x128xf32> to vector<64x128xf32>
    %9 = arith.mulf %5, %8 : vector<64x128xf32>
    %10 = arith.truncf %9 : vector<64x128xf32> to vector<64x128xbf16>
    %c0_6 = arith.constant 0 : index
    %c0_7 = arith.constant 0 : index
    %11 = vector.load %arg9[%c0_6, %c0_7] : memref<64x128xf32, #tpu.memory_space<vmem>>, vector<64x128xf32>
    %c0_8 = arith.constant 0 : index
    %c0_9 = arith.constant 0 : index
    %12 = vector.load %arg5[%c0_8, %c0_9] : memref<128x128xbf16, #tpu.memory_space<vmem>>, vector<128x128xbf16>
    %cst = arith.constant dense<0.000000e+00> : vector<64x128xf32>
    %13 = tpu.matmul %10, %12, %cst {dimension_numbers = #tpu.dot_dimension_numbers<[1], [0], [0], [1], [0, 0, 1, 1], [], []>} : vector<64x128xbf16>, vector<128x128xbf16>, vector<64x128xf32> -> vector<64x128xf32>
    %14 = arith.addf %11, %13 : vector<64x128xf32>
    %c0_10 = arith.constant 0 : index
    %c0_11 = arith.constant 0 : index
    %15 = vector.load %arg9[%c0_10, %c0_11] : memref<64x128xf32, #tpu.memory_space<vmem>>, vector<64x128xf32>
    tpu.vector_store %arg9[%c0_10, %c0_11], %14 {strides = array<i32>} : memref<64x128xf32, #tpu.memory_space<vmem>>, vector<64x128xf32>,
    %c0_i32_12 = arith.constant 0 : i32
    %16 = arith.cmpi eq, %arg3, %c0_i32_12 : i32
    %17 = arith.extui %16 : i1 to i32
    %c0_i32_13 = arith.constant 0 : i32
    %18 = arith.cmpi ne, %17, %c0_i32_13 : i32
    scf.if %18 {
      %c0_14 = arith.constant 0 : index
      %c0_15 = arith.constant 0 : index
      %19 = vector.load %arg9[%c0_14, %c0_15] : memref<64x128xf32, #tpu.memory_space<vmem>>, vector<64x128xf32>
      %c0_16 = arith.constant 0 : index
      %c0_17 = arith.constant 0 : index
      %c0_18 = arith.constant 0 : index
      %20 = vector.load %arg7[%c0_16, %c0_17, %c0_18] : memref<1x64x128xbf16, #tpu.memory_space<vmem>>, vector<1x64x128xbf16>
      %21 = vector.shape_cast %20 : vector<1x64x128xbf16> to vector<64x128xbf16>
      %22 = arith.extf %21 : vector<64x128xbf16> to vector<64x128xf32>
      %23 = arith.addf %19, %22 : vector<64x128xf32>
      %24 = arith.truncf %23 : vector<64x128xf32> to vector<64x128xbf16>
      %c0_19 = arith.constant 0 : index
      %c0_20 = arith.constant 0 : index
      %c0_21 = arith.constant 0 : index
      %25 = vector.load %arg8[%c0_19, %c0_20, %c0_21] : memref<1x64x128xbf16, #tpu.memory_space<vmem>>, vector<1x64x128xbf16>
      %26 = vector.shape_cast %25 : vector<1x64x128xbf16> to vector<64x128xbf16>
      %27 = vector.shape_cast %24 : vector<64x128xbf16> to vector<1x64x128xbf16>
      tpu.vector_store %arg8[%c0_19, %c0_20, %c0_21], %27 {strides = array<i32>} : memref<1x64x128xbf16, #tpu.memory_space<vmem>>, vector<1x64x128xbf16>,
    } else {
    }
    return
  }
  func.func @transform_0(%arg0: i32, %arg1: i32, %arg2: i32, %arg3: i32) -> (i32, i32, i32) {
    %c0_i32 = arith.constant 0 : i32
    return %arg0, %arg1, %arg3 : i32, i32, i32
  }
  func.func @transform_1(%arg0: i32, %arg1: i32, %arg2: i32, %arg3: i32) -> (i32, i32) {
    %c0_i32 = arith.constant 0 : i32
    return %arg3, %arg2 : i32, i32
  }
  func.func @transform_2(%arg0: i32, %arg1: i32, %arg2: i32, %arg3: i32) -> (i32, i32, i32) {
    %c0_i32 = arith.constant 0 : i32
    %c0_i32_0 = arith.constant 0 : i32
    return %arg0, %c0_i32, %arg3 : i32, i32, i32
  }
  func.func @transform_3(%arg0: i32, %arg1: i32, %arg2: i32, %arg3: i32) -> (i32, i32, i32) {
    %c0_i32 = arith.constant 0 : i32
    return %arg0, %arg1, %arg2 : i32, i32, i32
  }
  func.func @transform_4(%arg0: i32, %arg1: i32, %arg2: i32, %arg3: i32) -> (i32, i32, i32) {
    %c0_i32 = arith.constant 0 : i32
    return %arg0, %arg1, %arg2 : i32, i32, i32
  }
}

module attributes {stable_mosaic.version = 11 : i64} {
  func.func @_dw_kernel(%arg0: i32, %arg1: memref<1x20x5x24xbf16, #tpu.memory_space<vmem>>, %arg2: memref<3x3x24xf32, #tpu.memory_space<vmem>>, %arg3: memref<1x4x4x24xbf16, #tpu.memory_space<vmem>>) attributes {dimension_semantics = [#tpu.dimension_semantics<parallel>], iteration_bounds = array<i64: 2>, scalar_prefetch = 0 : i64, scratch_operands = 0 : i64, tpu.core_type = #tpu.core_type<tc>, window_params = [{transform_indices = @transform_0, window_bounds = array<i64: 1, 20, 5, 24>}, {pipeline_mode = #tpu.pipeline_mode<synchronous>, transform_indices = @transform_1, window_bounds = array<i64: 3, 3, 24>}, {transform_indices = @transform_2, window_bounds = array<i64: 1, 4, 4, 24>}]} {
    %c0 = arith.constant 0 : index
    %c0_0 = arith.constant 0 : index
    %c0_1 = arith.constant 0 : index
    %0 = vector.load %arg2[%c0, %c0_0, %c0_1] : memref<3x3x24xf32, #tpu.memory_space<vmem>>, vector<3x3x24xf32>
    %c0_2 = arith.constant 0 : index
    %c0_3 = arith.constant 0 : index
    %c0_4 = arith.constant 0 : index
    %c0_5 = arith.constant 0 : index
    %1 = vector.load %arg1[%c0_2, %c0_3, %c0_4, %c0_5] : memref<1x20x5x24xbf16, #tpu.memory_space<vmem>>, vector<1x4x4x24xbf16>
    %2 = vector.shape_cast %1 : vector<1x4x4x24xbf16> to vector<4x4x24xbf16>
    %3 = arith.extf %2 : vector<4x4x24xbf16> to vector<4x4x24xf32>
    %4 = vector.extract_strided_slice %0 {offsets = [0, 0, 0], sizes = [1, 1, 24], strides = [1, 1, 1]} : vector<3x3x24xf32> to vector<1x1x24xf32>
    %5 = vector.shape_cast %4 : vector<1x1x24xf32> to vector<1x24xf32>
    %6 = vector.shape_cast %5 : vector<1x24xf32> to vector<1x1x24xf32>
    %7 = vector.broadcast %6 : vector<1x1x24xf32> to vector<4x4x24xf32>
    %8 = arith.mulf %3, %7 : vector<4x4x24xf32>
    %c0_6 = arith.constant 0 : index
    %c5 = arith.constant 5 : index
    %c0_7 = arith.constant 0 : index
    %c0_8 = arith.constant 0 : index
    %9 = vector.load %arg1[%c0_6, %c5, %c0_7, %c0_8] : memref<1x20x5x24xbf16, #tpu.memory_space<vmem>>, vector<1x4x4x24xbf16>
    %10 = vector.shape_cast %9 : vector<1x4x4x24xbf16> to vector<4x4x24xbf16>
    %11 = arith.extf %10 : vector<4x4x24xbf16> to vector<4x4x24xf32>
    %12 = vector.extract_strided_slice %0 {offsets = [0, 1, 0], sizes = [1, 1, 24], strides = [1, 1, 1]} : vector<3x3x24xf32> to vector<1x1x24xf32>
    %13 = vector.shape_cast %12 : vector<1x1x24xf32> to vector<1x24xf32>
    %14 = vector.shape_cast %13 : vector<1x24xf32> to vector<1x1x24xf32>
    %15 = vector.broadcast %14 : vector<1x1x24xf32> to vector<4x4x24xf32>
    %16 = arith.mulf %11, %15 : vector<4x4x24xf32>
    %17 = arith.addf %8, %16 : vector<4x4x24xf32>
    %c0_9 = arith.constant 0 : index
    %c0_10 = arith.constant 0 : index
    %c1 = arith.constant 1 : index
    %c0_11 = arith.constant 0 : index
    %18 = vector.load %arg1[%c0_9, %c0_10, %c1, %c0_11] : memref<1x20x5x24xbf16, #tpu.memory_space<vmem>>, vector<1x4x4x24xbf16>
    %19 = vector.shape_cast %18 : vector<1x4x4x24xbf16> to vector<4x4x24xbf16>
    %20 = arith.extf %19 : vector<4x4x24xbf16> to vector<4x4x24xf32>
    %21 = vector.extract_strided_slice %0 {offsets = [0, 2, 0], sizes = [1, 1, 24], strides = [1, 1, 1]} : vector<3x3x24xf32> to vector<1x1x24xf32>
    %22 = vector.shape_cast %21 : vector<1x1x24xf32> to vector<1x24xf32>
    %23 = vector.shape_cast %22 : vector<1x24xf32> to vector<1x1x24xf32>
    %24 = vector.broadcast %23 : vector<1x1x24xf32> to vector<4x4x24xf32>
    %25 = arith.mulf %20, %24 : vector<4x4x24xf32>
    %26 = arith.addf %17, %25 : vector<4x4x24xf32>
    %c0_12 = arith.constant 0 : index
    %c10 = arith.constant 10 : index
    %c0_13 = arith.constant 0 : index
    %c0_14 = arith.constant 0 : index
    %27 = vector.load %arg1[%c0_12, %c10, %c0_13, %c0_14] : memref<1x20x5x24xbf16, #tpu.memory_space<vmem>>, vector<1x4x4x24xbf16>
    %28 = vector.shape_cast %27 : vector<1x4x4x24xbf16> to vector<4x4x24xbf16>
    %29 = arith.extf %28 : vector<4x4x24xbf16> to vector<4x4x24xf32>
    %30 = vector.extract_strided_slice %0 {offsets = [1, 0, 0], sizes = [1, 1, 24], strides = [1, 1, 1]} : vector<3x3x24xf32> to vector<1x1x24xf32>
    %31 = vector.shape_cast %30 : vector<1x1x24xf32> to vector<1x24xf32>
    %32 = vector.shape_cast %31 : vector<1x24xf32> to vector<1x1x24xf32>
    %33 = vector.broadcast %32 : vector<1x1x24xf32> to vector<4x4x24xf32>
    %34 = arith.mulf %29, %33 : vector<4x4x24xf32>
    %35 = arith.addf %26, %34 : vector<4x4x24xf32>
    %c0_15 = arith.constant 0 : index
    %c15 = arith.constant 15 : index
    %c0_16 = arith.constant 0 : index
    %c0_17 = arith.constant 0 : index
    %36 = vector.load %arg1[%c0_15, %c15, %c0_16, %c0_17] : memref<1x20x5x24xbf16, #tpu.memory_space<vmem>>, vector<1x4x4x24xbf16>
    %37 = vector.shape_cast %36 : vector<1x4x4x24xbf16> to vector<4x4x24xbf16>
    %38 = arith.extf %37 : vector<4x4x24xbf16> to vector<4x4x24xf32>
    %39 = vector.extract_strided_slice %0 {offsets = [1, 1, 0], sizes = [1, 1, 24], strides = [1, 1, 1]} : vector<3x3x24xf32> to vector<1x1x24xf32>
    %40 = vector.shape_cast %39 : vector<1x1x24xf32> to vector<1x24xf32>
    %41 = vector.shape_cast %40 : vector<1x24xf32> to vector<1x1x24xf32>
    %42 = vector.broadcast %41 : vector<1x1x24xf32> to vector<4x4x24xf32>
    %43 = arith.mulf %38, %42 : vector<4x4x24xf32>
    %44 = arith.addf %35, %43 : vector<4x4x24xf32>
    %c0_18 = arith.constant 0 : index
    %c10_19 = arith.constant 10 : index
    %c1_20 = arith.constant 1 : index
    %c0_21 = arith.constant 0 : index
    %45 = vector.load %arg1[%c0_18, %c10_19, %c1_20, %c0_21] : memref<1x20x5x24xbf16, #tpu.memory_space<vmem>>, vector<1x4x4x24xbf16>
    %46 = vector.shape_cast %45 : vector<1x4x4x24xbf16> to vector<4x4x24xbf16>
    %47 = arith.extf %46 : vector<4x4x24xbf16> to vector<4x4x24xf32>
    %48 = vector.extract_strided_slice %0 {offsets = [1, 2, 0], sizes = [1, 1, 24], strides = [1, 1, 1]} : vector<3x3x24xf32> to vector<1x1x24xf32>
    %49 = vector.shape_cast %48 : vector<1x1x24xf32> to vector<1x24xf32>
    %50 = vector.shape_cast %49 : vector<1x24xf32> to vector<1x1x24xf32>
    %51 = vector.broadcast %50 : vector<1x1x24xf32> to vector<4x4x24xf32>
    %52 = arith.mulf %47, %51 : vector<4x4x24xf32>
    %53 = arith.addf %44, %52 : vector<4x4x24xf32>
    %c0_22 = arith.constant 0 : index
    %c1_23 = arith.constant 1 : index
    %c0_24 = arith.constant 0 : index
    %c0_25 = arith.constant 0 : index
    %54 = vector.load %arg1[%c0_22, %c1_23, %c0_24, %c0_25] : memref<1x20x5x24xbf16, #tpu.memory_space<vmem>>, vector<1x4x4x24xbf16>
    %55 = vector.shape_cast %54 : vector<1x4x4x24xbf16> to vector<4x4x24xbf16>
    %56 = arith.extf %55 : vector<4x4x24xbf16> to vector<4x4x24xf32>
    %57 = vector.extract_strided_slice %0 {offsets = [2, 0, 0], sizes = [1, 1, 24], strides = [1, 1, 1]} : vector<3x3x24xf32> to vector<1x1x24xf32>
    %58 = vector.shape_cast %57 : vector<1x1x24xf32> to vector<1x24xf32>
    %59 = vector.shape_cast %58 : vector<1x24xf32> to vector<1x1x24xf32>
    %60 = vector.broadcast %59 : vector<1x1x24xf32> to vector<4x4x24xf32>
    %61 = arith.mulf %56, %60 : vector<4x4x24xf32>
    %62 = arith.addf %53, %61 : vector<4x4x24xf32>
    %c0_26 = arith.constant 0 : index
    %c6 = arith.constant 6 : index
    %c0_27 = arith.constant 0 : index
    %c0_28 = arith.constant 0 : index
    %63 = vector.load %arg1[%c0_26, %c6, %c0_27, %c0_28] : memref<1x20x5x24xbf16, #tpu.memory_space<vmem>>, vector<1x4x4x24xbf16>
    %64 = vector.shape_cast %63 : vector<1x4x4x24xbf16> to vector<4x4x24xbf16>
    %65 = arith.extf %64 : vector<4x4x24xbf16> to vector<4x4x24xf32>
    %66 = vector.extract_strided_slice %0 {offsets = [2, 1, 0], sizes = [1, 1, 24], strides = [1, 1, 1]} : vector<3x3x24xf32> to vector<1x1x24xf32>
    %67 = vector.shape_cast %66 : vector<1x1x24xf32> to vector<1x24xf32>
    %68 = vector.shape_cast %67 : vector<1x24xf32> to vector<1x1x24xf32>
    %69 = vector.broadcast %68 : vector<1x1x24xf32> to vector<4x4x24xf32>
    %70 = arith.mulf %65, %69 : vector<4x4x24xf32>
    %71 = arith.addf %62, %70 : vector<4x4x24xf32>
    %c0_29 = arith.constant 0 : index
    %c1_30 = arith.constant 1 : index
    %c1_31 = arith.constant 1 : index
    %c0_32 = arith.constant 0 : index
    %72 = vector.load %arg1[%c0_29, %c1_30, %c1_31, %c0_32] : memref<1x20x5x24xbf16, #tpu.memory_space<vmem>>, vector<1x4x4x24xbf16>
    %73 = vector.shape_cast %72 : vector<1x4x4x24xbf16> to vector<4x4x24xbf16>
    %74 = arith.extf %73 : vector<4x4x24xbf16> to vector<4x4x24xf32>
    %75 = vector.extract_strided_slice %0 {offsets = [2, 2, 0], sizes = [1, 1, 24], strides = [1, 1, 1]} : vector<3x3x24xf32> to vector<1x1x24xf32>
    %76 = vector.shape_cast %75 : vector<1x1x24xf32> to vector<1x24xf32>
    %77 = vector.shape_cast %76 : vector<1x24xf32> to vector<1x1x24xf32>
    %78 = vector.broadcast %77 : vector<1x1x24xf32> to vector<4x4x24xf32>
    %79 = arith.mulf %74, %78 : vector<4x4x24xf32>
    %80 = arith.addf %71, %79 : vector<4x4x24xf32>
    %cst = arith.constant 3.000000e+00 : f32
    %81 = vector.broadcast %cst : f32 to vector<4x4x24xf32>
    %82 = arith.addf %80, %81 : vector<4x4x24xf32>
    %cst_33 = arith.constant 0.000000e+00 : f32
    %cst_34 = arith.constant 6.000000e+00 : f32
    %83 = vector.broadcast %cst_33 : f32 to vector<4x4x24xf32>
    %84 = arith.maximumf %83, %82 : vector<4x4x24xf32>
    %85 = vector.broadcast %cst_34 : f32 to vector<4x4x24xf32>
    %86 = arith.minimumf %85, %84 : vector<4x4x24xf32>
    %87 = arith.mulf %80, %86 : vector<4x4x24xf32>
    %cst_35 = arith.constant 0.166666672 : f32
    %88 = vector.broadcast %cst_35 : f32 to vector<4x4x24xf32>
    %89 = arith.mulf %87, %88 : vector<4x4x24xf32>
    %90 = arith.truncf %89 : vector<4x4x24xf32> to vector<4x4x24xbf16>
    %c0_36 = arith.constant 0 : index
    %c0_37 = arith.constant 0 : index
    %c0_38 = arith.constant 0 : index
    %c0_39 = arith.constant 0 : index
    %91 = vector.load %arg3[%c0_36, %c0_37, %c0_38, %c0_39] : memref<1x4x4x24xbf16, #tpu.memory_space<vmem>>, vector<1x4x4x24xbf16>
    %92 = vector.shape_cast %91 : vector<1x4x4x24xbf16> to vector<4x4x24xbf16>
    %93 = vector.shape_cast %90 : vector<4x4x24xbf16> to vector<1x4x4x24xbf16>
    tpu.vector_store %arg3[%c0_36, %c0_37, %c0_38, %c0_39], %93 {strides = array<i32>} : memref<1x4x4x24xbf16, #tpu.memory_space<vmem>>, vector<1x4x4x24xbf16>,
    return
  }
  func.func @transform_0(%arg0: i32) -> (i32, i32, i32, i32) {
    %c0_i32 = arith.constant 0 : i32
    %c0_i32_0 = arith.constant 0 : i32
    %c0_i32_1 = arith.constant 0 : i32
    %c0_i32_2 = arith.constant 0 : i32
    return %arg0, %c0_i32, %c0_i32_0, %c0_i32_1 : i32, i32, i32, i32
  }
  func.func @transform_1(%arg0: i32) -> (i32, i32, i32) {
    %c0_i32 = arith.constant 0 : i32
    %c0_i32_0 = arith.constant 0 : i32
    %c0_i32_1 = arith.constant 0 : i32
    %c0_i32_2 = arith.constant 0 : i32
    return %c0_i32, %c0_i32_0, %c0_i32_1 : i32, i32, i32
  }
  func.func @transform_2(%arg0: i32) -> (i32, i32, i32, i32) {
    %c0_i32 = arith.constant 0 : i32
    %c0_i32_0 = arith.constant 0 : i32
    %c0_i32_1 = arith.constant 0 : i32
    %c0_i32_2 = arith.constant 0 : i32
    return %arg0, %c0_i32, %c0_i32_0, %c0_i32_1 : i32, i32, i32, i32
  }
}

module attributes {stable_mosaic.version = 11 : i64} {
  func.func @_mm_kernel(%arg0: i32, %arg1: i32, %arg2: i32, %arg3: i32, %arg4: memref<1x32x128xbf16, #tpu.memory_space<vmem>>, %arg5: memref<128x128xbf16, #tpu.memory_space<vmem>>, %arg6: memref<1x32x128xbf16, #tpu.memory_space<vmem>>, %arg7: memref<32x128xf32, #tpu.memory_space<vmem>>) attributes {dimension_semantics = [#tpu.dimension_semantics<parallel>, #tpu.dimension_semantics<parallel>, #tpu.dimension_semantics<parallel>, #tpu.dimension_semantics<arbitrary>], iteration_bounds = array<i64: 1, 1, 1, 1>, scalar_prefetch = 0 : i64, scratch_operands = 1 : i64, tpu.core_type = #tpu.core_type<tc>, window_params = [{transform_indices = @transform_0, window_bounds = array<i64: 1, 32, 128>}, {transform_indices = @transform_1, window_bounds = array<i64: 128, 128>}, {transform_indices = @transform_2, window_bounds = array<i64: 1, 32, 128>}]} {
    %c0_i32 = arith.constant 0 : i32
    %0 = arith.cmpi eq, %arg3, %c0_i32 : i32
    %1 = arith.extui %0 : i1 to i32
    %c0_i32_0 = arith.constant 0 : i32
    %2 = arith.cmpi ne, %1, %c0_i32_0 : i32
    scf.if %2 {
      %cst_11 = arith.constant 0.000000e+00 : f32
      %13 = vector.broadcast %cst_11 : f32 to vector<32x128xf32>
      %c0_12 = arith.constant 0 : index
      %c0_13 = arith.constant 0 : index
      %14 = vector.load %arg7[%c0_12, %c0_13] : memref<32x128xf32, #tpu.memory_space<vmem>>, vector<32x128xf32>
      tpu.vector_store %arg7[%c0_12, %c0_13], %13 {strides = array<i32>} : memref<32x128xf32, #tpu.memory_space<vmem>>, vector<32x128xf32>,
    } else {
    }
    %c0 = arith.constant 0 : index
    %c0_1 = arith.constant 0 : index
    %c0_2 = arith.constant 0 : index
    %3 = vector.load %arg4[%c0, %c0_1, %c0_2] : memref<1x32x128xbf16, #tpu.memory_space<vmem>>, vector<1x32x128xbf16>
    %4 = vector.shape_cast %3 : vector<1x32x128xbf16> to vector<32x128xbf16>
    %c0_3 = arith.constant 0 : index
    %c0_4 = arith.constant 0 : index
    %5 = vector.load %arg7[%c0_3, %c0_4] : memref<32x128xf32, #tpu.memory_space<vmem>>, vector<32x128xf32>
    %c0_5 = arith.constant 0 : index
    %c0_6 = arith.constant 0 : index
    %6 = vector.load %arg5[%c0_5, %c0_6] : memref<128x128xbf16, #tpu.memory_space<vmem>>, vector<128x128xbf16>
    %cst = arith.constant dense<0.000000e+00> : vector<32x128xf32>
    %7 = tpu.matmul %4, %6, %cst {dimension_numbers = #tpu.dot_dimension_numbers<[1], [0], [0], [1], [0, 0, 1, 1], [], []>} : vector<32x128xbf16>, vector<128x128xbf16>, vector<32x128xf32> -> vector<32x128xf32>
    %8 = arith.addf %5, %7 : vector<32x128xf32>
    %c0_7 = arith.constant 0 : index
    %c0_8 = arith.constant 0 : index
    %9 = vector.load %arg7[%c0_7, %c0_8] : memref<32x128xf32, #tpu.memory_space<vmem>>, vector<32x128xf32>
    tpu.vector_store %arg7[%c0_7, %c0_8], %8 {strides = array<i32>} : memref<32x128xf32, #tpu.memory_space<vmem>>, vector<32x128xf32>,
    %c0_i32_9 = arith.constant 0 : i32
    %10 = arith.cmpi eq, %arg3, %c0_i32_9 : i32
    %11 = arith.extui %10 : i1 to i32
    %c0_i32_10 = arith.constant 0 : i32
    %12 = arith.cmpi ne, %11, %c0_i32_10 : i32
    scf.if %12 {
      %c0_11 = arith.constant 0 : index
      %c0_12 = arith.constant 0 : index
      %13 = vector.load %arg7[%c0_11, %c0_12] : memref<32x128xf32, #tpu.memory_space<vmem>>, vector<32x128xf32>
      %14 = arith.truncf %13 : vector<32x128xf32> to vector<32x128xbf16>
      %c0_13 = arith.constant 0 : index
      %c0_14 = arith.constant 0 : index
      %c0_15 = arith.constant 0 : index
      %15 = vector.load %arg6[%c0_13, %c0_14, %c0_15] : memref<1x32x128xbf16, #tpu.memory_space<vmem>>, vector<1x32x128xbf16>
      %16 = vector.shape_cast %15 : vector<1x32x128xbf16> to vector<32x128xbf16>
      %17 = vector.shape_cast %14 : vector<32x128xbf16> to vector<1x32x128xbf16>
      tpu.vector_store %arg6[%c0_13, %c0_14, %c0_15], %17 {strides = array<i32>} : memref<1x32x128xbf16, #tpu.memory_space<vmem>>, vector<1x32x128xbf16>,
    } else {
    }
    return
  }
  func.func @transform_0(%arg0: i32, %arg1: i32, %arg2: i32, %arg3: i32) -> (i32, i32, i32) {
    %c0_i32 = arith.constant 0 : i32
    return %arg0, %arg1, %arg3 : i32, i32, i32
  }
  func.func @transform_1(%arg0: i32, %arg1: i32, %arg2: i32, %arg3: i32) -> (i32, i32) {
    %c0_i32 = arith.constant 0 : i32
    return %arg3, %arg2 : i32, i32
  }
  func.func @transform_2(%arg0: i32, %arg1: i32, %arg2: i32, %arg3: i32) -> (i32, i32, i32) {
    %c0_i32 = arith.constant 0 : i32
    return %arg0, %arg1, %arg2 : i32, i32, i32
  }
}

module attributes {stable_mosaic.version = 11 : i64} {
  func.func @_mm_kernel(%arg0: i32, %arg1: i32, %arg2: i32, %arg3: i32, %arg4: memref<1x32x128xbf16, #tpu.memory_space<vmem>>, %arg5: memref<128x128xbf16, #tpu.memory_space<vmem>>, %arg6: memref<1x32x128xbf16, #tpu.memory_space<vmem>>, %arg7: memref<32x128xf32, #tpu.memory_space<vmem>>) attributes {dimension_semantics = [#tpu.dimension_semantics<parallel>, #tpu.dimension_semantics<parallel>, #tpu.dimension_semantics<parallel>, #tpu.dimension_semantics<arbitrary>], iteration_bounds = array<i64: 1, 1, 1, 1>, scalar_prefetch = 0 : i64, scratch_operands = 1 : i64, tpu.core_type = #tpu.core_type<tc>, window_params = [{transform_indices = @transform_0, window_bounds = array<i64: 1, 32, 128>}, {transform_indices = @transform_1, window_bounds = array<i64: 128, 128>}, {transform_indices = @transform_2, window_bounds = array<i64: 1, 32, 128>}]} {
    %c0_i32 = arith.constant 0 : i32
    %0 = arith.cmpi eq, %arg3, %c0_i32 : i32
    %1 = arith.extui %0 : i1 to i32
    %c0_i32_0 = arith.constant 0 : i32
    %2 = arith.cmpi ne, %1, %c0_i32_0 : i32
    scf.if %2 {
      %cst_11 = arith.constant 0.000000e+00 : f32
      %13 = vector.broadcast %cst_11 : f32 to vector<32x128xf32>
      %c0_12 = arith.constant 0 : index
      %c0_13 = arith.constant 0 : index
      %14 = vector.load %arg7[%c0_12, %c0_13] : memref<32x128xf32, #tpu.memory_space<vmem>>, vector<32x128xf32>
      tpu.vector_store %arg7[%c0_12, %c0_13], %13 {strides = array<i32>} : memref<32x128xf32, #tpu.memory_space<vmem>>, vector<32x128xf32>,
    } else {
    }
    %c0 = arith.constant 0 : index
    %c0_1 = arith.constant 0 : index
    %c0_2 = arith.constant 0 : index
    %3 = vector.load %arg4[%c0, %c0_1, %c0_2] : memref<1x32x128xbf16, #tpu.memory_space<vmem>>, vector<1x32x128xbf16>
    %4 = vector.shape_cast %3 : vector<1x32x128xbf16> to vector<32x128xbf16>
    %c0_3 = arith.constant 0 : index
    %c0_4 = arith.constant 0 : index
    %5 = vector.load %arg7[%c0_3, %c0_4] : memref<32x128xf32, #tpu.memory_space<vmem>>, vector<32x128xf32>
    %c0_5 = arith.constant 0 : index
    %c0_6 = arith.constant 0 : index
    %6 = vector.load %arg5[%c0_5, %c0_6] : memref<128x128xbf16, #tpu.memory_space<vmem>>, vector<128x128xbf16>
    %cst = arith.constant dense<0.000000e+00> : vector<32x128xf32>
    %7 = tpu.matmul %4, %6, %cst {dimension_numbers = #tpu.dot_dimension_numbers<[1], [0], [0], [1], [0, 0, 1, 1], [], []>} : vector<32x128xbf16>, vector<128x128xbf16>, vector<32x128xf32> -> vector<32x128xf32>
    %8 = arith.addf %5, %7 : vector<32x128xf32>
    %c0_7 = arith.constant 0 : index
    %c0_8 = arith.constant 0 : index
    %9 = vector.load %arg7[%c0_7, %c0_8] : memref<32x128xf32, #tpu.memory_space<vmem>>, vector<32x128xf32>
    tpu.vector_store %arg7[%c0_7, %c0_8], %8 {strides = array<i32>} : memref<32x128xf32, #tpu.memory_space<vmem>>, vector<32x128xf32>,
    %c0_i32_9 = arith.constant 0 : i32
    %10 = arith.cmpi eq, %arg3, %c0_i32_9 : i32
    %11 = arith.extui %10 : i1 to i32
    %c0_i32_10 = arith.constant 0 : i32
    %12 = arith.cmpi ne, %11, %c0_i32_10 : i32
    scf.if %12 {
      %c0_11 = arith.constant 0 : index
      %c0_12 = arith.constant 0 : index
      %13 = vector.load %arg7[%c0_11, %c0_12] : memref<32x128xf32, #tpu.memory_space<vmem>>, vector<32x128xf32>
      %cst_13 = arith.constant 3.000000e+00 : f32
      %14 = vector.broadcast %cst_13 : f32 to vector<32x128xf32>
      %15 = arith.addf %13, %14 : vector<32x128xf32>
      %cst_14 = arith.constant 0.000000e+00 : f32
      %cst_15 = arith.constant 6.000000e+00 : f32
      %16 = vector.broadcast %cst_14 : f32 to vector<32x128xf32>
      %17 = arith.maximumf %16, %15 : vector<32x128xf32>
      %18 = vector.broadcast %cst_15 : f32 to vector<32x128xf32>
      %19 = arith.minimumf %18, %17 : vector<32x128xf32>
      %20 = arith.mulf %13, %19 : vector<32x128xf32>
      %cst_16 = arith.constant 0.166666672 : f32
      %21 = vector.broadcast %cst_16 : f32 to vector<32x128xf32>
      %22 = arith.mulf %20, %21 : vector<32x128xf32>
      %23 = arith.truncf %22 : vector<32x128xf32> to vector<32x128xbf16>
      %c0_17 = arith.constant 0 : index
      %c0_18 = arith.constant 0 : index
      %c0_19 = arith.constant 0 : index
      %24 = vector.load %arg6[%c0_17, %c0_18, %c0_19] : memref<1x32x128xbf16, #tpu.memory_space<vmem>>, vector<1x32x128xbf16>
      %25 = vector.shape_cast %24 : vector<1x32x128xbf16> to vector<32x128xbf16>
      %26 = vector.shape_cast %23 : vector<32x128xbf16> to vector<1x32x128xbf16>
      tpu.vector_store %arg6[%c0_17, %c0_18, %c0_19], %26 {strides = array<i32>} : memref<1x32x128xbf16, #tpu.memory_space<vmem>>, vector<1x32x128xbf16>,
    } else {
    }
    return
  }
  func.func @transform_0(%arg0: i32, %arg1: i32, %arg2: i32, %arg3: i32) -> (i32, i32, i32) {
    %c0_i32 = arith.constant 0 : i32
    return %arg0, %arg1, %arg3 : i32, i32, i32
  }
  func.func @transform_1(%arg0: i32, %arg1: i32, %arg2: i32, %arg3: i32) -> (i32, i32) {
    %c0_i32 = arith.constant 0 : i32
    return %arg3, %arg2 : i32, i32
  }
  func.func @transform_2(%arg0: i32, %arg1: i32, %arg2: i32, %arg3: i32) -> (i32, i32, i32) {
    %c0_i32 = arith.constant 0 : i32
    return %arg0, %arg1, %arg2 : i32, i32, i32
  }
}

module attributes {stable_mosaic.version = 11 : i64} {
  func.func @_dw_kernel(%arg0: i32, %arg1: memref<1x6x6x48xbf16, #tpu.memory_space<vmem>>, %arg2: memref<3x3x48xf32, #tpu.memory_space<vmem>>, %arg3: memref<1x4x4x48xbf16, #tpu.memory_space<vmem>>) attributes {dimension_semantics = [#tpu.dimension_semantics<parallel>], iteration_bounds = array<i64: 2>, scalar_prefetch = 0 : i64, scratch_operands = 0 : i64, tpu.core_type = #tpu.core_type<tc>, window_params = [{transform_indices = @transform_0, window_bounds = array<i64: 1, 6, 6, 48>}, {pipeline_mode = #tpu.pipeline_mode<synchronous>, transform_indices = @transform_1, window_bounds = array<i64: 3, 3, 48>}, {transform_indices = @transform_2, window_bounds = array<i64: 1, 4, 4, 48>}]} {
    %c0 = arith.constant 0 : index
    %c0_0 = arith.constant 0 : index
    %c0_1 = arith.constant 0 : index
    %0 = vector.load %arg2[%c0, %c0_0, %c0_1] : memref<3x3x48xf32, #tpu.memory_space<vmem>>, vector<3x3x48xf32>
    %c0_2 = arith.constant 0 : index
    %c0_3 = arith.constant 0 : index
    %c0_4 = arith.constant 0 : index
    %c0_5 = arith.constant 0 : index
    %1 = vector.load %arg1[%c0_2, %c0_3, %c0_4, %c0_5] : memref<1x6x6x48xbf16, #tpu.memory_space<vmem>>, vector<1x4x4x48xbf16>
    %2 = vector.shape_cast %1 : vector<1x4x4x48xbf16> to vector<4x4x48xbf16>
    %3 = arith.extf %2 : vector<4x4x48xbf16> to vector<4x4x48xf32>
    %4 = vector.extract_strided_slice %0 {offsets = [0, 0, 0], sizes = [1, 1, 48], strides = [1, 1, 1]} : vector<3x3x48xf32> to vector<1x1x48xf32>
    %5 = vector.shape_cast %4 : vector<1x1x48xf32> to vector<1x48xf32>
    %6 = vector.shape_cast %5 : vector<1x48xf32> to vector<1x1x48xf32>
    %7 = vector.broadcast %6 : vector<1x1x48xf32> to vector<4x4x48xf32>
    %8 = arith.mulf %3, %7 : vector<4x4x48xf32>
    %c0_6 = arith.constant 0 : index
    %c0_7 = arith.constant 0 : index
    %c1 = arith.constant 1 : index
    %c0_8 = arith.constant 0 : index
    %9 = vector.load %arg1[%c0_6, %c0_7, %c1, %c0_8] : memref<1x6x6x48xbf16, #tpu.memory_space<vmem>>, vector<1x4x4x48xbf16>
    %10 = vector.shape_cast %9 : vector<1x4x4x48xbf16> to vector<4x4x48xbf16>
    %11 = arith.extf %10 : vector<4x4x48xbf16> to vector<4x4x48xf32>
    %12 = vector.extract_strided_slice %0 {offsets = [0, 1, 0], sizes = [1, 1, 48], strides = [1, 1, 1]} : vector<3x3x48xf32> to vector<1x1x48xf32>
    %13 = vector.shape_cast %12 : vector<1x1x48xf32> to vector<1x48xf32>
    %14 = vector.shape_cast %13 : vector<1x48xf32> to vector<1x1x48xf32>
    %15 = vector.broadcast %14 : vector<1x1x48xf32> to vector<4x4x48xf32>
    %16 = arith.mulf %11, %15 : vector<4x4x48xf32>
    %17 = arith.addf %8, %16 : vector<4x4x48xf32>
    %c0_9 = arith.constant 0 : index
    %c0_10 = arith.constant 0 : index
    %c2 = arith.constant 2 : index
    %c0_11 = arith.constant 0 : index
    %18 = vector.load %arg1[%c0_9, %c0_10, %c2, %c0_11] : memref<1x6x6x48xbf16, #tpu.memory_space<vmem>>, vector<1x4x4x48xbf16>
    %19 = vector.shape_cast %18 : vector<1x4x4x48xbf16> to vector<4x4x48xbf16>
    %20 = arith.extf %19 : vector<4x4x48xbf16> to vector<4x4x48xf32>
    %21 = vector.extract_strided_slice %0 {offsets = [0, 2, 0], sizes = [1, 1, 48], strides = [1, 1, 1]} : vector<3x3x48xf32> to vector<1x1x48xf32>
    %22 = vector.shape_cast %21 : vector<1x1x48xf32> to vector<1x48xf32>
    %23 = vector.shape_cast %22 : vector<1x48xf32> to vector<1x1x48xf32>
    %24 = vector.broadcast %23 : vector<1x1x48xf32> to vector<4x4x48xf32>
    %25 = arith.mulf %20, %24 : vector<4x4x48xf32>
    %26 = arith.addf %17, %25 : vector<4x4x48xf32>
    %c0_12 = arith.constant 0 : index
    %c1_13 = arith.constant 1 : index
    %c0_14 = arith.constant 0 : index
    %c0_15 = arith.constant 0 : index
    %27 = vector.load %arg1[%c0_12, %c1_13, %c0_14, %c0_15] : memref<1x6x6x48xbf16, #tpu.memory_space<vmem>>, vector<1x4x4x48xbf16>
    %28 = vector.shape_cast %27 : vector<1x4x4x48xbf16> to vector<4x4x48xbf16>
    %29 = arith.extf %28 : vector<4x4x48xbf16> to vector<4x4x48xf32>
    %30 = vector.extract_strided_slice %0 {offsets = [1, 0, 0], sizes = [1, 1, 48], strides = [1, 1, 1]} : vector<3x3x48xf32> to vector<1x1x48xf32>
    %31 = vector.shape_cast %30 : vector<1x1x48xf32> to vector<1x48xf32>
    %32 = vector.shape_cast %31 : vector<1x48xf32> to vector<1x1x48xf32>
    %33 = vector.broadcast %32 : vector<1x1x48xf32> to vector<4x4x48xf32>
    %34 = arith.mulf %29, %33 : vector<4x4x48xf32>
    %35 = arith.addf %26, %34 : vector<4x4x48xf32>
    %c0_16 = arith.constant 0 : index
    %c1_17 = arith.constant 1 : index
    %c1_18 = arith.constant 1 : index
    %c0_19 = arith.constant 0 : index
    %36 = vector.load %arg1[%c0_16, %c1_17, %c1_18, %c0_19] : memref<1x6x6x48xbf16, #tpu.memory_space<vmem>>, vector<1x4x4x48xbf16>
    %37 = vector.shape_cast %36 : vector<1x4x4x48xbf16> to vector<4x4x48xbf16>
    %38 = arith.extf %37 : vector<4x4x48xbf16> to vector<4x4x48xf32>
    %39 = vector.extract_strided_slice %0 {offsets = [1, 1, 0], sizes = [1, 1, 48], strides = [1, 1, 1]} : vector<3x3x48xf32> to vector<1x1x48xf32>
    %40 = vector.shape_cast %39 : vector<1x1x48xf32> to vector<1x48xf32>
    %41 = vector.shape_cast %40 : vector<1x48xf32> to vector<1x1x48xf32>
    %42 = vector.broadcast %41 : vector<1x1x48xf32> to vector<4x4x48xf32>
    %43 = arith.mulf %38, %42 : vector<4x4x48xf32>
    %44 = arith.addf %35, %43 : vector<4x4x48xf32>
    %c0_20 = arith.constant 0 : index
    %c1_21 = arith.constant 1 : index
    %c2_22 = arith.constant 2 : index
    %c0_23 = arith.constant 0 : index
    %45 = vector.load %arg1[%c0_20, %c1_21, %c2_22, %c0_23] : memref<1x6x6x48xbf16, #tpu.memory_space<vmem>>, vector<1x4x4x48xbf16>
    %46 = vector.shape_cast %45 : vector<1x4x4x48xbf16> to vector<4x4x48xbf16>
    %47 = arith.extf %46 : vector<4x4x48xbf16> to vector<4x4x48xf32>
    %48 = vector.extract_strided_slice %0 {offsets = [1, 2, 0], sizes = [1, 1, 48], strides = [1, 1, 1]} : vector<3x3x48xf32> to vector<1x1x48xf32>
    %49 = vector.shape_cast %48 : vector<1x1x48xf32> to vector<1x48xf32>
    %50 = vector.shape_cast %49 : vector<1x48xf32> to vector<1x1x48xf32>
    %51 = vector.broadcast %50 : vector<1x1x48xf32> to vector<4x4x48xf32>
    %52 = arith.mulf %47, %51 : vector<4x4x48xf32>
    %53 = arith.addf %44, %52 : vector<4x4x48xf32>
    %c0_24 = arith.constant 0 : index
    %c2_25 = arith.constant 2 : index
    %c0_26 = arith.constant 0 : index
    %c0_27 = arith.constant 0 : index
    %54 = vector.load %arg1[%c0_24, %c2_25, %c0_26, %c0_27] : memref<1x6x6x48xbf16, #tpu.memory_space<vmem>>, vector<1x4x4x48xbf16>
    %55 = vector.shape_cast %54 : vector<1x4x4x48xbf16> to vector<4x4x48xbf16>
    %56 = arith.extf %55 : vector<4x4x48xbf16> to vector<4x4x48xf32>
    %57 = vector.extract_strided_slice %0 {offsets = [2, 0, 0], sizes = [1, 1, 48], strides = [1, 1, 1]} : vector<3x3x48xf32> to vector<1x1x48xf32>
    %58 = vector.shape_cast %57 : vector<1x1x48xf32> to vector<1x48xf32>
    %59 = vector.shape_cast %58 : vector<1x48xf32> to vector<1x1x48xf32>
    %60 = vector.broadcast %59 : vector<1x1x48xf32> to vector<4x4x48xf32>
    %61 = arith.mulf %56, %60 : vector<4x4x48xf32>
    %62 = arith.addf %53, %61 : vector<4x4x48xf32>
    %c0_28 = arith.constant 0 : index
    %c2_29 = arith.constant 2 : index
    %c1_30 = arith.constant 1 : index
    %c0_31 = arith.constant 0 : index
    %63 = vector.load %arg1[%c0_28, %c2_29, %c1_30, %c0_31] : memref<1x6x6x48xbf16, #tpu.memory_space<vmem>>, vector<1x4x4x48xbf16>
    %64 = vector.shape_cast %63 : vector<1x4x4x48xbf16> to vector<4x4x48xbf16>
    %65 = arith.extf %64 : vector<4x4x48xbf16> to vector<4x4x48xf32>
    %66 = vector.extract_strided_slice %0 {offsets = [2, 1, 0], sizes = [1, 1, 48], strides = [1, 1, 1]} : vector<3x3x48xf32> to vector<1x1x48xf32>
    %67 = vector.shape_cast %66 : vector<1x1x48xf32> to vector<1x48xf32>
    %68 = vector.shape_cast %67 : vector<1x48xf32> to vector<1x1x48xf32>
    %69 = vector.broadcast %68 : vector<1x1x48xf32> to vector<4x4x48xf32>
    %70 = arith.mulf %65, %69 : vector<4x4x48xf32>
    %71 = arith.addf %62, %70 : vector<4x4x48xf32>
    %c0_32 = arith.constant 0 : index
    %c2_33 = arith.constant 2 : index
    %c2_34 = arith.constant 2 : index
    %c0_35 = arith.constant 0 : index
    %72 = vector.load %arg1[%c0_32, %c2_33, %c2_34, %c0_35] : memref<1x6x6x48xbf16, #tpu.memory_space<vmem>>, vector<1x4x4x48xbf16>
    %73 = vector.shape_cast %72 : vector<1x4x4x48xbf16> to vector<4x4x48xbf16>
    %74 = arith.extf %73 : vector<4x4x48xbf16> to vector<4x4x48xf32>
    %75 = vector.extract_strided_slice %0 {offsets = [2, 2, 0], sizes = [1, 1, 48], strides = [1, 1, 1]} : vector<3x3x48xf32> to vector<1x1x48xf32>
    %76 = vector.shape_cast %75 : vector<1x1x48xf32> to vector<1x48xf32>
    %77 = vector.shape_cast %76 : vector<1x48xf32> to vector<1x1x48xf32>
    %78 = vector.broadcast %77 : vector<1x1x48xf32> to vector<4x4x48xf32>
    %79 = arith.mulf %74, %78 : vector<4x4x48xf32>
    %80 = arith.addf %71, %79 : vector<4x4x48xf32>
    %cst = arith.constant 3.000000e+00 : f32
    %81 = vector.broadcast %cst : f32 to vector<4x4x48xf32>
    %82 = arith.addf %80, %81 : vector<4x4x48xf32>
    %cst_36 = arith.constant 0.000000e+00 : f32
    %cst_37 = arith.constant 6.000000e+00 : f32
    %83 = vector.broadcast %cst_36 : f32 to vector<4x4x48xf32>
    %84 = arith.maximumf %83, %82 : vector<4x4x48xf32>
    %85 = vector.broadcast %cst_37 : f32 to vector<4x4x48xf32>
    %86 = arith.minimumf %85, %84 : vector<4x4x48xf32>
    %87 = arith.mulf %80, %86 : vector<4x4x48xf32>
    %cst_38 = arith.constant 0.166666672 : f32
    %88 = vector.broadcast %cst_38 : f32 to vector<4x4x48xf32>
    %89 = arith.mulf %87, %88 : vector<4x4x48xf32>
    %90 = arith.truncf %89 : vector<4x4x48xf32> to vector<4x4x48xbf16>
    %c0_39 = arith.constant 0 : index
    %c0_40 = arith.constant 0 : index
    %c0_41 = arith.constant 0 : index
    %c0_42 = arith.constant 0 : index
    %91 = vector.load %arg3[%c0_39, %c0_40, %c0_41, %c0_42] : memref<1x4x4x48xbf16, #tpu.memory_space<vmem>>, vector<1x4x4x48xbf16>
    %92 = vector.shape_cast %91 : vector<1x4x4x48xbf16> to vector<4x4x48xbf16>
    %93 = vector.shape_cast %90 : vector<4x4x48xbf16> to vector<1x4x4x48xbf16>
    tpu.vector_store %arg3[%c0_39, %c0_40, %c0_41, %c0_42], %93 {strides = array<i32>} : memref<1x4x4x48xbf16, #tpu.memory_space<vmem>>, vector<1x4x4x48xbf16>,
    return
  }
  func.func @transform_0(%arg0: i32) -> (i32, i32, i32, i32) {
    %c0_i32 = arith.constant 0 : i32
    %c0_i32_0 = arith.constant 0 : i32
    %c0_i32_1 = arith.constant 0 : i32
    %c0_i32_2 = arith.constant 0 : i32
    return %arg0, %c0_i32, %c0_i32_0, %c0_i32_1 : i32, i32, i32, i32
  }
  func.func @transform_1(%arg0: i32) -> (i32, i32, i32) {
    %c0_i32 = arith.constant 0 : i32
    %c0_i32_0 = arith.constant 0 : i32
    %c0_i32_1 = arith.constant 0 : i32
    %c0_i32_2 = arith.constant 0 : i32
    return %c0_i32, %c0_i32_0, %c0_i32_1 : i32, i32, i32
  }
  func.func @transform_2(%arg0: i32) -> (i32, i32, i32, i32) {
    %c0_i32 = arith.constant 0 : i32
    %c0_i32_0 = arith.constant 0 : i32
    %c0_i32_1 = arith.constant 0 : i32
    %c0_i32_2 = arith.constant 0 : i32
    return %arg0, %c0_i32, %c0_i32_0, %c0_i32_1 : i32, i32, i32, i32
  }
}

module attributes {stable_mosaic.version = 11 : i64} {
  func.func @_mm_kernel(%arg0: i32, %arg1: i32, %arg2: i32, %arg3: i32, %arg4: memref<1x32x128xbf16, #tpu.memory_space<vmem>>, %arg5: memref<128x128xbf16, #tpu.memory_space<vmem>>, %arg6: memref<1x32x128xbf16, #tpu.memory_space<vmem>>, %arg7: memref<1x32x128xbf16, #tpu.memory_space<vmem>>, %arg8: memref<32x128xf32, #tpu.memory_space<vmem>>) attributes {dimension_semantics = [#tpu.dimension_semantics<parallel>, #tpu.dimension_semantics<parallel>, #tpu.dimension_semantics<parallel>, #tpu.dimension_semantics<arbitrary>], iteration_bounds = array<i64: 1, 1, 1, 1>, scalar_prefetch = 0 : i64, scratch_operands = 1 : i64, tpu.core_type = #tpu.core_type<tc>, window_params = [{transform_indices = @transform_0, window_bounds = array<i64: 1, 32, 128>}, {transform_indices = @transform_1, window_bounds = array<i64: 128, 128>}, {transform_indices = @transform_2, window_bounds = array<i64: 1, 32, 128>}, {transform_indices = @transform_3, window_bounds = array<i64: 1, 32, 128>}]} {
    %c0_i32 = arith.constant 0 : i32
    %0 = arith.cmpi eq, %arg3, %c0_i32 : i32
    %1 = arith.extui %0 : i1 to i32
    %c0_i32_0 = arith.constant 0 : i32
    %2 = arith.cmpi ne, %1, %c0_i32_0 : i32
    scf.if %2 {
      %cst_11 = arith.constant 0.000000e+00 : f32
      %13 = vector.broadcast %cst_11 : f32 to vector<32x128xf32>
      %c0_12 = arith.constant 0 : index
      %c0_13 = arith.constant 0 : index
      %14 = vector.load %arg8[%c0_12, %c0_13] : memref<32x128xf32, #tpu.memory_space<vmem>>, vector<32x128xf32>
      tpu.vector_store %arg8[%c0_12, %c0_13], %13 {strides = array<i32>} : memref<32x128xf32, #tpu.memory_space<vmem>>, vector<32x128xf32>,
    } else {
    }
    %c0 = arith.constant 0 : index
    %c0_1 = arith.constant 0 : index
    %c0_2 = arith.constant 0 : index
    %3 = vector.load %arg4[%c0, %c0_1, %c0_2] : memref<1x32x128xbf16, #tpu.memory_space<vmem>>, vector<1x32x128xbf16>
    %4 = vector.shape_cast %3 : vector<1x32x128xbf16> to vector<32x128xbf16>
    %c0_3 = arith.constant 0 : index
    %c0_4 = arith.constant 0 : index
    %5 = vector.load %arg8[%c0_3, %c0_4] : memref<32x128xf32, #tpu.memory_space<vmem>>, vector<32x128xf32>
    %c0_5 = arith.constant 0 : index
    %c0_6 = arith.constant 0 : index
    %6 = vector.load %arg5[%c0_5, %c0_6] : memref<128x128xbf16, #tpu.memory_space<vmem>>, vector<128x128xbf16>
    %cst = arith.constant dense<0.000000e+00> : vector<32x128xf32>
    %7 = tpu.matmul %4, %6, %cst {dimension_numbers = #tpu.dot_dimension_numbers<[1], [0], [0], [1], [0, 0, 1, 1], [], []>} : vector<32x128xbf16>, vector<128x128xbf16>, vector<32x128xf32> -> vector<32x128xf32>
    %8 = arith.addf %5, %7 : vector<32x128xf32>
    %c0_7 = arith.constant 0 : index
    %c0_8 = arith.constant 0 : index
    %9 = vector.load %arg8[%c0_7, %c0_8] : memref<32x128xf32, #tpu.memory_space<vmem>>, vector<32x128xf32>
    tpu.vector_store %arg8[%c0_7, %c0_8], %8 {strides = array<i32>} : memref<32x128xf32, #tpu.memory_space<vmem>>, vector<32x128xf32>,
    %c0_i32_9 = arith.constant 0 : i32
    %10 = arith.cmpi eq, %arg3, %c0_i32_9 : i32
    %11 = arith.extui %10 : i1 to i32
    %c0_i32_10 = arith.constant 0 : i32
    %12 = arith.cmpi ne, %11, %c0_i32_10 : i32
    scf.if %12 {
      %c0_11 = arith.constant 0 : index
      %c0_12 = arith.constant 0 : index
      %13 = vector.load %arg8[%c0_11, %c0_12] : memref<32x128xf32, #tpu.memory_space<vmem>>, vector<32x128xf32>
      %c0_13 = arith.constant 0 : index
      %c0_14 = arith.constant 0 : index
      %c0_15 = arith.constant 0 : index
      %14 = vector.load %arg6[%c0_13, %c0_14, %c0_15] : memref<1x32x128xbf16, #tpu.memory_space<vmem>>, vector<1x32x128xbf16>
      %15 = vector.shape_cast %14 : vector<1x32x128xbf16> to vector<32x128xbf16>
      %16 = arith.extf %15 : vector<32x128xbf16> to vector<32x128xf32>
      %17 = arith.addf %13, %16 : vector<32x128xf32>
      %18 = arith.truncf %17 : vector<32x128xf32> to vector<32x128xbf16>
      %c0_16 = arith.constant 0 : index
      %c0_17 = arith.constant 0 : index
      %c0_18 = arith.constant 0 : index
      %19 = vector.load %arg7[%c0_16, %c0_17, %c0_18] : memref<1x32x128xbf16, #tpu.memory_space<vmem>>, vector<1x32x128xbf16>
      %20 = vector.shape_cast %19 : vector<1x32x128xbf16> to vector<32x128xbf16>
      %21 = vector.shape_cast %18 : vector<32x128xbf16> to vector<1x32x128xbf16>
      tpu.vector_store %arg7[%c0_16, %c0_17, %c0_18], %21 {strides = array<i32>} : memref<1x32x128xbf16, #tpu.memory_space<vmem>>, vector<1x32x128xbf16>,
    } else {
    }
    return
  }
  func.func @transform_0(%arg0: i32, %arg1: i32, %arg2: i32, %arg3: i32) -> (i32, i32, i32) {
    %c0_i32 = arith.constant 0 : i32
    return %arg0, %arg1, %arg3 : i32, i32, i32
  }
  func.func @transform_1(%arg0: i32, %arg1: i32, %arg2: i32, %arg3: i32) -> (i32, i32) {
    %c0_i32 = arith.constant 0 : i32
    return %arg3, %arg2 : i32, i32
  }
  func.func @transform_2(%arg0: i32, %arg1: i32, %arg2: i32, %arg3: i32) -> (i32, i32, i32) {
    %c0_i32 = arith.constant 0 : i32
    return %arg0, %arg1, %arg2 : i32, i32, i32
  }
  func.func @transform_3(%arg0: i32, %arg1: i32, %arg2: i32, %arg3: i32) -> (i32, i32, i32) {
    %c0_i32 = arith.constant 0 : i32
    return %arg0, %arg1, %arg2 : i32, i32, i32
  }
}

module attributes {stable_mosaic.version = 11 : i64} {
  func.func @_pool_kernel(%arg0: i32, %arg1: memref<2x16x96xbf16, #tpu.memory_space<vmem>>, %arg2: memref<2x96xf32, #tpu.memory_space<vmem>>, %arg3: memref<2x96xf32, #tpu.memory_space<vmem>>) attributes {dimension_semantics = [#tpu.dimension_semantics<arbitrary>], iteration_bounds = array<i64: 1>, scalar_prefetch = 0 : i64, scratch_operands = 1 : i64, tpu.core_type = #tpu.core_type<tc>, window_params = [{transform_indices = @transform_0, window_bounds = array<i64: 2, 16, 96>}, {pipeline_mode = #tpu.pipeline_mode<synchronous>, transform_indices = @transform_1, window_bounds = array<i64: 2, 96>}]} {
    %c0_i32 = arith.constant 0 : i32
    %0 = arith.cmpi eq, %arg0, %c0_i32 : i32
    %1 = arith.extui %0 : i1 to i32
    %c0_i32_0 = arith.constant 0 : i32
    %2 = arith.cmpi ne, %1, %c0_i32_0 : i32
    scf.if %2 {
      %cst_9 = arith.constant 0.000000e+00 : f32
      %12 = vector.broadcast %cst_9 : f32 to vector<2x96xf32>
      %c0_10 = arith.constant 0 : index
      %c0_11 = arith.constant 0 : index
      %13 = vector.load %arg3[%c0_10, %c0_11] : memref<2x96xf32, #tpu.memory_space<vmem>>, vector<2x96xf32>
      tpu.vector_store %arg3[%c0_10, %c0_11], %12 {strides = array<i32>} : memref<2x96xf32, #tpu.memory_space<vmem>>, vector<2x96xf32>,
    } else {
    }
    %c0 = arith.constant 0 : index
    %c0_1 = arith.constant 0 : index
    %3 = vector.load %arg3[%c0, %c0_1] : memref<2x96xf32, #tpu.memory_space<vmem>>, vector<2x96xf32>
    %c0_2 = arith.constant 0 : index
    %c0_3 = arith.constant 0 : index
    %c0_4 = arith.constant 0 : index
    %4 = vector.load %arg1[%c0_2, %c0_3, %c0_4] : memref<2x16x96xbf16, #tpu.memory_space<vmem>>, vector<2x16x96xbf16>
    %5 = arith.extf %4 : vector<2x16x96xbf16> to vector<2x16x96xf32>
    %cst = arith.constant dense<0.000000e+00> : vector<2x96xf32>
    %6 = vector.multi_reduction <add>, %5, %cst [1] : vector<2x16x96xf32> to vector<2x96xf32>
    %7 = arith.addf %3, %6 : vector<2x96xf32>
    %c0_5 = arith.constant 0 : index
    %c0_6 = arith.constant 0 : index
    %8 = vector.load %arg3[%c0_5, %c0_6] : memref<2x96xf32, #tpu.memory_space<vmem>>, vector<2x96xf32>
    tpu.vector_store %arg3[%c0_5, %c0_6], %7 {strides = array<i32>} : memref<2x96xf32, #tpu.memory_space<vmem>>, vector<2x96xf32>,
    %c0_i32_7 = arith.constant 0 : i32
    %9 = arith.cmpi eq, %arg0, %c0_i32_7 : i32
    %10 = arith.extui %9 : i1 to i32
    %c0_i32_8 = arith.constant 0 : i32
    %11 = arith.cmpi ne, %10, %c0_i32_8 : i32
    scf.if %11 {
      %c0_9 = arith.constant 0 : index
      %c0_10 = arith.constant 0 : index
      %12 = vector.load %arg3[%c0_9, %c0_10] : memref<2x96xf32, #tpu.memory_space<vmem>>, vector<2x96xf32>
      %cst_11 = arith.constant 6.250000e-02 : f32
      %13 = vector.broadcast %cst_11 : f32 to vector<2x96xf32>
      %14 = arith.mulf %12, %13 : vector<2x96xf32>
      %c0_12 = arith.constant 0 : index
      %c0_13 = arith.constant 0 : index
      %15 = vector.load %arg2[%c0_12, %c0_13] : memref<2x96xf32, #tpu.memory_space<vmem>>, vector<2x96xf32>
      tpu.vector_store %arg2[%c0_12, %c0_13], %14 {strides = array<i32>} : memref<2x96xf32, #tpu.memory_space<vmem>>, vector<2x96xf32>,
    } else {
    }
    return
  }
  func.func @transform_0(%arg0: i32) -> (i32, i32, i32) {
    %c0_i32 = arith.constant 0 : i32
    %c0_i32_0 = arith.constant 0 : i32
    %c0_i32_1 = arith.constant 0 : i32
    return %c0_i32, %arg0, %c0_i32_0 : i32, i32, i32
  }
  func.func @transform_1(%arg0: i32) -> (i32, i32) {
    %c0_i32 = arith.constant 0 : i32
    %c0_i32_0 = arith.constant 0 : i32
    %c0_i32_1 = arith.constant 0 : i32
    return %c0_i32, %c0_i32_0 : i32, i32
  }
}

module attributes {stable_mosaic.version = 11 : i64} {
  func.func @_mm_kernel(%arg0: i32, %arg1: i32, %arg2: i32, %arg3: i32, %arg4: memref<1x8x128xbf16, #tpu.memory_space<vmem>>, %arg5: memref<128x128xbf16, #tpu.memory_space<vmem>>, %arg6: memref<1x128xf32, #tpu.memory_space<vmem>>, %arg7: memref<1x8x128xf32, #tpu.memory_space<vmem>>, %arg8: memref<8x128xf32, #tpu.memory_space<vmem>>) attributes {dimension_semantics = [#tpu.dimension_semantics<parallel>, #tpu.dimension_semantics<parallel>, #tpu.dimension_semantics<parallel>, #tpu.dimension_semantics<arbitrary>], iteration_bounds = array<i64: 1, 1, 1, 1>, scalar_prefetch = 0 : i64, scratch_operands = 1 : i64, tpu.core_type = #tpu.core_type<tc>, window_params = [{transform_indices = @transform_0, window_bounds = array<i64: 1, 8, 128>}, {transform_indices = @transform_1, window_bounds = array<i64: 128, 128>}, {transform_indices = @transform_2, window_bounds = array<i64: 1, 128>}, {transform_indices = @transform_3, window_bounds = array<i64: 1, 8, 128>}]} {
    %c0_i32 = arith.constant 0 : i32
    %0 = arith.cmpi eq, %arg3, %c0_i32 : i32
    %1 = arith.extui %0 : i1 to i32
    %c0_i32_0 = arith.constant 0 : i32
    %2 = arith.cmpi ne, %1, %c0_i32_0 : i32
    scf.if %2 {
      %cst_11 = arith.constant 0.000000e+00 : f32
      %13 = vector.broadcast %cst_11 : f32 to vector<8x128xf32>
      %c0_12 = arith.constant 0 : index
      %c0_13 = arith.constant 0 : index
      %14 = vector.load %arg8[%c0_12, %c0_13] : memref<8x128xf32, #tpu.memory_space<vmem>>, vector<8x128xf32>
      tpu.vector_store %arg8[%c0_12, %c0_13], %13 {strides = array<i32>} : memref<8x128xf32, #tpu.memory_space<vmem>>, vector<8x128xf32>,
    } else {
    }
    %c0 = arith.constant 0 : index
    %c0_1 = arith.constant 0 : index
    %c0_2 = arith.constant 0 : index
    %3 = vector.load %arg4[%c0, %c0_1, %c0_2] : memref<1x8x128xbf16, #tpu.memory_space<vmem>>, vector<1x8x128xbf16>
    %4 = vector.shape_cast %3 : vector<1x8x128xbf16> to vector<8x128xbf16>
    %c0_3 = arith.constant 0 : index
    %c0_4 = arith.constant 0 : index
    %5 = vector.load %arg8[%c0_3, %c0_4] : memref<8x128xf32, #tpu.memory_space<vmem>>, vector<8x128xf32>
    %c0_5 = arith.constant 0 : index
    %c0_6 = arith.constant 0 : index
    %6 = vector.load %arg5[%c0_5, %c0_6] : memref<128x128xbf16, #tpu.memory_space<vmem>>, vector<128x128xbf16>
    %cst = arith.constant dense<0.000000e+00> : vector<8x128xf32>
    %7 = tpu.matmul %4, %6, %cst {dimension_numbers = #tpu.dot_dimension_numbers<[1], [0], [0], [1], [0, 0, 1, 1], [], []>} : vector<8x128xbf16>, vector<128x128xbf16>, vector<8x128xf32> -> vector<8x128xf32>
    %8 = arith.addf %5, %7 : vector<8x128xf32>
    %c0_7 = arith.constant 0 : index
    %c0_8 = arith.constant 0 : index
    %9 = vector.load %arg8[%c0_7, %c0_8] : memref<8x128xf32, #tpu.memory_space<vmem>>, vector<8x128xf32>
    tpu.vector_store %arg8[%c0_7, %c0_8], %8 {strides = array<i32>} : memref<8x128xf32, #tpu.memory_space<vmem>>, vector<8x128xf32>,
    %c0_i32_9 = arith.constant 0 : i32
    %10 = arith.cmpi eq, %arg3, %c0_i32_9 : i32
    %11 = arith.extui %10 : i1 to i32
    %c0_i32_10 = arith.constant 0 : i32
    %12 = arith.cmpi ne, %11, %c0_i32_10 : i32
    scf.if %12 {
      %c0_11 = arith.constant 0 : index
      %c0_12 = arith.constant 0 : index
      %13 = vector.load %arg8[%c0_11, %c0_12] : memref<8x128xf32, #tpu.memory_space<vmem>>, vector<8x128xf32>
      %c0_13 = arith.constant 0 : index
      %c0_14 = arith.constant 0 : index
      %14 = vector.load %arg6[%c0_13, %c0_14] : memref<1x128xf32, #tpu.memory_space<vmem>>, vector<1x128xf32>
      %15 = vector.broadcast %14 : vector<1x128xf32> to vector<8x128xf32>
      %16 = arith.addf %13, %15 : vector<8x128xf32>
      %cst_15 = arith.constant 3.000000e+00 : f32
      %17 = vector.broadcast %cst_15 : f32 to vector<8x128xf32>
      %18 = arith.addf %16, %17 : vector<8x128xf32>
      %cst_16 = arith.constant 0.000000e+00 : f32
      %cst_17 = arith.constant 6.000000e+00 : f32
      %19 = vector.broadcast %cst_16 : f32 to vector<8x128xf32>
      %20 = arith.maximumf %19, %18 : vector<8x128xf32>
      %21 = vector.broadcast %cst_17 : f32 to vector<8x128xf32>
      %22 = arith.minimumf %21, %20 : vector<8x128xf32>
      %23 = arith.mulf %16, %22 : vector<8x128xf32>
      %cst_18 = arith.constant 0.166666672 : f32
      %24 = vector.broadcast %cst_18 : f32 to vector<8x128xf32>
      %25 = arith.mulf %23, %24 : vector<8x128xf32>
      %c0_19 = arith.constant 0 : index
      %c0_20 = arith.constant 0 : index
      %c0_21 = arith.constant 0 : index
      %26 = vector.load %arg7[%c0_19, %c0_20, %c0_21] : memref<1x8x128xf32, #tpu.memory_space<vmem>>, vector<1x8x128xf32>
      %27 = vector.shape_cast %26 : vector<1x8x128xf32> to vector<8x128xf32>
      %28 = vector.shape_cast %25 : vector<8x128xf32> to vector<1x8x128xf32>
      tpu.vector_store %arg7[%c0_19, %c0_20, %c0_21], %28 {strides = array<i32>} : memref<1x8x128xf32, #tpu.memory_space<vmem>>, vector<1x8x128xf32>,
    } else {
    }
    return
  }
  func.func @transform_0(%arg0: i32, %arg1: i32, %arg2: i32, %arg3: i32) -> (i32, i32, i32) {
    %c0_i32 = arith.constant 0 : i32
    return %arg0, %arg1, %arg3 : i32, i32, i32
  }
  func.func @transform_1(%arg0: i32, %arg1: i32, %arg2: i32, %arg3: i32) -> (i32, i32) {
    %c0_i32 = arith.constant 0 : i32
    return %arg3, %arg2 : i32, i32
  }
  func.func @transform_2(%arg0: i32, %arg1: i32, %arg2: i32, %arg3: i32) -> (i32, i32) {
    %c0_i32 = arith.constant 0 : i32
    %c0_i32_0 = arith.constant 0 : i32
    return %c0_i32, %arg2 : i32, i32
  }
  func.func @transform_3(%arg0: i32, %arg1: i32, %arg2: i32, %arg3: i32) -> (i32, i32, i32) {
    %c0_i32 = arith.constant 0 : i32
    return %arg0, %arg1, %arg2 : i32, i32, i32
  }
}

module attributes {stable_mosaic.version = 11 : i64} {
  func.func @_mm_kernel(%arg0: i32, %arg1: i32, %arg2: i32, %arg3: i32, %arg4: memref<1x8x128xbf16, #tpu.memory_space<vmem>>, %arg5: memref<128x128xbf16, #tpu.memory_space<vmem>>, %arg6: memref<1x128xf32, #tpu.memory_space<vmem>>, %arg7: memref<1x8x128xf32, #tpu.memory_space<vmem>>, %arg8: memref<8x128xf32, #tpu.memory_space<vmem>>) attributes {dimension_semantics = [#tpu.dimension_semantics<parallel>, #tpu.dimension_semantics<parallel>, #tpu.dimension_semantics<parallel>, #tpu.dimension_semantics<arbitrary>], iteration_bounds = array<i64: 1, 1, 1, 1>, scalar_prefetch = 0 : i64, scratch_operands = 1 : i64, tpu.core_type = #tpu.core_type<tc>, window_params = [{transform_indices = @transform_0, window_bounds = array<i64: 1, 8, 128>}, {transform_indices = @transform_1, window_bounds = array<i64: 128, 128>}, {transform_indices = @transform_2, window_bounds = array<i64: 1, 128>}, {transform_indices = @transform_3, window_bounds = array<i64: 1, 8, 128>}]} {
    %c0_i32 = arith.constant 0 : i32
    %0 = arith.cmpi eq, %arg3, %c0_i32 : i32
    %1 = arith.extui %0 : i1 to i32
    %c0_i32_0 = arith.constant 0 : i32
    %2 = arith.cmpi ne, %1, %c0_i32_0 : i32
    scf.if %2 {
      %cst_11 = arith.constant 0.000000e+00 : f32
      %13 = vector.broadcast %cst_11 : f32 to vector<8x128xf32>
      %c0_12 = arith.constant 0 : index
      %c0_13 = arith.constant 0 : index
      %14 = vector.load %arg8[%c0_12, %c0_13] : memref<8x128xf32, #tpu.memory_space<vmem>>, vector<8x128xf32>
      tpu.vector_store %arg8[%c0_12, %c0_13], %13 {strides = array<i32>} : memref<8x128xf32, #tpu.memory_space<vmem>>, vector<8x128xf32>,
    } else {
    }
    %c0 = arith.constant 0 : index
    %c0_1 = arith.constant 0 : index
    %c0_2 = arith.constant 0 : index
    %3 = vector.load %arg4[%c0, %c0_1, %c0_2] : memref<1x8x128xbf16, #tpu.memory_space<vmem>>, vector<1x8x128xbf16>
    %4 = vector.shape_cast %3 : vector<1x8x128xbf16> to vector<8x128xbf16>
    %c0_3 = arith.constant 0 : index
    %c0_4 = arith.constant 0 : index
    %5 = vector.load %arg8[%c0_3, %c0_4] : memref<8x128xf32, #tpu.memory_space<vmem>>, vector<8x128xf32>
    %c0_5 = arith.constant 0 : index
    %c0_6 = arith.constant 0 : index
    %6 = vector.load %arg5[%c0_5, %c0_6] : memref<128x128xbf16, #tpu.memory_space<vmem>>, vector<128x128xbf16>
    %cst = arith.constant dense<0.000000e+00> : vector<8x128xf32>
    %7 = tpu.matmul %4, %6, %cst {dimension_numbers = #tpu.dot_dimension_numbers<[1], [0], [0], [1], [0, 0, 1, 1], [], []>} : vector<8x128xbf16>, vector<128x128xbf16>, vector<8x128xf32> -> vector<8x128xf32>
    %8 = arith.addf %5, %7 : vector<8x128xf32>
    %c0_7 = arith.constant 0 : index
    %c0_8 = arith.constant 0 : index
    %9 = vector.load %arg8[%c0_7, %c0_8] : memref<8x128xf32, #tpu.memory_space<vmem>>, vector<8x128xf32>
    tpu.vector_store %arg8[%c0_7, %c0_8], %8 {strides = array<i32>} : memref<8x128xf32, #tpu.memory_space<vmem>>, vector<8x128xf32>,
    %c0_i32_9 = arith.constant 0 : i32
    %10 = arith.cmpi eq, %arg3, %c0_i32_9 : i32
    %11 = arith.extui %10 : i1 to i32
    %c0_i32_10 = arith.constant 0 : i32
    %12 = arith.cmpi ne, %11, %c0_i32_10 : i32
    scf.if %12 {
      %c0_11 = arith.constant 0 : index
      %c0_12 = arith.constant 0 : index
      %13 = vector.load %arg8[%c0_11, %c0_12] : memref<8x128xf32, #tpu.memory_space<vmem>>, vector<8x128xf32>
      %c0_13 = arith.constant 0 : index
      %c0_14 = arith.constant 0 : index
      %14 = vector.load %arg6[%c0_13, %c0_14] : memref<1x128xf32, #tpu.memory_space<vmem>>, vector<1x128xf32>
      %15 = vector.broadcast %14 : vector<1x128xf32> to vector<8x128xf32>
      %16 = arith.addf %13, %15 : vector<8x128xf32>
      %c0_15 = arith.constant 0 : index
      %c0_16 = arith.constant 0 : index
      %c0_17 = arith.constant 0 : index
      %17 = vector.load %arg7[%c0_15, %c0_16, %c0_17] : memref<1x8x128xf32, #tpu.memory_space<vmem>>, vector<1x8x128xf32>
      %18 = vector.shape_cast %17 : vector<1x8x128xf32> to vector<8x128xf32>
      %19 = vector.shape_cast %16 : vector<8x128xf32> to vector<1x8x128xf32>
      tpu.vector_store %arg7[%c0_15, %c0_16, %c0_17], %19 {strides = array<i32>} : memref<1x8x128xf32, #tpu.memory_space<vmem>>, vector<1x8x128xf32>,
    } else {
    }
    return
  }
  func.func @transform_0(%arg0: i32, %arg1: i32, %arg2: i32, %arg3: i32) -> (i32, i32, i32) {
    %c0_i32 = arith.constant 0 : i32
    return %arg0, %arg1, %arg3 : i32, i32, i32
  }
  func.func @transform_1(%arg0: i32, %arg1: i32, %arg2: i32, %arg3: i32) -> (i32, i32) {
    %c0_i32 = arith.constant 0 : i32
    return %arg3, %arg2 : i32, i32
  }
  func.func @transform_2(%arg0: i32, %arg1: i32, %arg2: i32, %arg3: i32) -> (i32, i32) {
    %c0_i32 = arith.constant 0 : i32
    %c0_i32_0 = arith.constant 0 : i32
    return %c0_i32, %arg2 : i32, i32
  }
  func.func @transform_3(%arg0: i32, %arg1: i32, %arg2: i32, %arg3: i32) -> (i32, i32, i32) {
    %c0_i32 = arith.constant 0 : i32
    return %arg0, %arg1, %arg2 : i32, i32, i32
  }
}

</mosaic_0001>

<llo_original>
// kernel: pcq_mobilenet_forward.18
$region0: #{pcq_mobilenet_forward.18}
  #allocation0 [shape = 'u32[]', space=smem, size = 0x4, offset = 0x4, fixed_abs, tag = 'smem constant byte address 0x4 - core index']
  #allocation1 [shape = 'u32[144,128]{1,0:T(1,128)}', space=vmem, size = 0x12000, scoped, tag = 'internal scratch']
  #allocation2 [shape = 'f32[2,8]{1,0:T(2,128)}', space=vmem, size = 0x400, scoped, tag = 'scratch operand']
  %s0 = inlined_call_operand.vmem [shape: bf16[2,64,8], index: 0, kind: input, shape index: {}]
  %s1 = inlined_call_operand.vmem [shape: f32[2,8], index: 1, kind: output, shape index: {}]
  %s2 = sld [smem:[#allocation0]]
  $region22: #{pcq_mobilenet_forward.18} parent=0
    _
  %s4 = ssub.s32 1, %s2
  %s5 = scalar_select 0, %s4, %s2
  // Predicated region
  $region2: #{pcq_mobilenet_forward.18} parent=0 // pred_check
    _
  $region3: #{pcq_mobilenet_forward.18} parent=0 // pred_check_branch
    %7 = sbr.rel (0) target = $region5
  $region4: #{pcq_mobilenet_forward.18} parent=0 // pred_region
    _
  $region5: #{pcq_mobilenet_forward.18} parent=0 // pred_fallthru
    _
  %p8 = scmp.eq.s32.totalorder 0, 0
  // Predicated region
  $region6: #{pcq_mobilenet_forward.18} parent=0 // pred_check
    %p9 = pneg %p8
  $region7: #{pcq_mobilenet_forward.18} parent=0 // pred_check_branch
    %11 = sbr.rel (%p9) target = $region9
  $region8: #{pcq_mobilenet_forward.18} parent=0 // pred_region
    %vm12 = vcmask 58368
    %13 = vst.msk [vmem:[#allocation2] sm:$0x3] %vm12, 0.0
  $region9: #{pcq_mobilenet_forward.18} parent=0 // pred_fallthru
    _
  %v14 = vld [vmem:[#allocation2] sm:$0x3]
  %v15 = vld [vmem:[%s0] sm:$0xf]
  %v16 = vld [vmem:[%s0 + $0x4] sm:$0xf]
  %v17 = vld [vmem:[%s0 + $0x8] sm:$0xf]
  %v18 = vld [vmem:[%s0 + $0xc] sm:$0xf]
  %v19 = vld [vmem:[%s0 + $0x10] sm:$0xf]
  %v20 = vld [vmem:[%s0 + $0x14] sm:$0xf]
  %v21 = vld [vmem:[%s0 + $0x18] sm:$0xf]
  %v22 = vld [vmem:[%s0 + $0x1c] sm:$0xf]
  %v23 = vld [vmem:[%s0 + $0x20] sm:$0xf]
  %v24 = vld [vmem:[%s0 + $0x24] sm:$0xf]
  %v25 = vld [vmem:[%s0 + $0x28] sm:$0xf]
  %v26 = vld [vmem:[%s0 + $0x2c] sm:$0xf]
  %v27 = vld [vmem:[%s0 + $0x30] sm:$0xf]
  %v28 = vld [vmem:[%s0 + $0x34] sm:$0xf]
  %v29 = vld [vmem:[%s0 + $0x38] sm:$0xf]
  %v30 = vld [vmem:[%s0 + $0x3c] sm:$0xf]
  %v31 = vunpack.c.l.bf16 %v15
  %v32 = vunpack.c.l.bf16 %v16
  %v33 = vunpack.c.l.bf16 %v17
  %v34 = vunpack.c.l.bf16 %v18
  %v35 = vunpack.c.l.bf16 %v19
  %v36 = vunpack.c.l.bf16 %v20
  %v37 = vunpack.c.l.bf16 %v21
  %v38 = vunpack.c.l.bf16 %v22
  %v39 = vunpack.c.l.bf16 %v23
  %v40 = vunpack.c.l.bf16 %v24
  %v41 = vunpack.c.l.bf16 %v25
  %v42 = vunpack.c.l.bf16 %v26
  %v43 = vunpack.c.l.bf16 %v27
  %v44 = vunpack.c.l.bf16 %v28
  %v45 = vunpack.c.l.bf16 %v29
  %v46 = vunpack.c.l.bf16 %v30
  %vm47 = vcmask 64512
  %v48 = vsel %vm47, %v31, 0.0
  %v49 = vsel %vm47, %v32, 0.0
  %v50 = vadd.f32 %v48, %v49
  %v51 = vsel %vm47, %v33, 0.0
  %v52 = vadd.f32 %v50, %v51
  %v53 = vsel %vm47, %v34, 0.0
  %v54 = vadd.f32 %v52, %v53
  %v55 = vsel %vm47, %v35, 0.0
  %v56 = vadd.f32 %v54, %v55
  %v57 = vsel %vm47, %v36, 0.0
  %v58 = vadd.f32 %v56, %v57
  %v59 = vsel %vm47, %v37, 0.0
  %v60 = vadd.f32 %v58, %v59
  %v61 = vsel %vm47, %v38, 0.0
  %v62 = vadd.f32 %v60, %v61
  %v63 = vrot.slane %v62, 4
  %v64 = vadd.f32 %v62, %v63
  %v65 = vrot.slane %v64, 2
  %v66 = vadd.f32 %v64, %v65
  %v67 = vrot.slane %v66, 1
  %v68 = vadd.f32 %v66, %v67
  %v69 = vsel %vm47, %v39, 0.0
  %v70 = vsel %vm47, %v40, 0.0
  %v71 = vadd.f32 %v69, %v70
  %v72 = vsel %vm47, %v41, 0.0
  %v73 = vadd.f32 %v71, %v72
  %v74 = vsel %vm47, %v42, 0.0
  %v75 = vadd.f32 %v73, %v74
  %v76 = vsel %vm47, %v43, 0.0
  %v77 = vadd.f32 %v75, %v76
  %v78 = vsel %vm47, %v44, 0.0
  %v79 = vadd.f32 %v77, %v78
  %v80 = vsel %vm47, %v45, 0.0
  %v81 = vadd.f32 %v79, %v80
  %v82 = vsel %vm47, %v46, 0.0
  %v83 = vadd.f32 %v81, %v82
  %v84 = vrot.slane %v83, 4
  %v85 = vadd.f32 %v83, %v84
  %v86 = vrot.slane %v85, 2
  %v87 = vadd.f32 %v85, %v86
  %v88 = vrot.slane %v87, 1
  %v89 = vadd.f32 %v87, %v88
  %vm92 = vcmask 1041409
  %v93 = vsel %vm92, %v89, %v68
  %v95 = vadd.f32 %v14, %v93
  %vm96 = vcmask 58368
  %97 = vst.msk [vmem:[#allocation2] sm:$0x3] %vm96, %v95
  // Predicated region
  $region10: #{pcq_mobilenet_forward.18} parent=0 // pred_check
    %p98 = pneg %p8
  $region11: #{pcq_mobilenet_forward.18} parent=0 // pred_check_branch
    %100 = sbr.rel (%p98) target = $region13
  $region12: #{pcq_mobilenet_forward.18} parent=0 // pred_region
    %v101 = vld [vmem:[#allocation2] sm:$0x3]
    %v102 = vmul.f32 %v101, 0.015625
    %103 = vst.msk [vmem:[%s1] sm:$0x3] %vm96, %v102
  $region13: #{pcq_mobilenet_forward.18} parent=0 // pred_fallthru
    _
  // Predicated region
  $region14: #{pcq_mobilenet_forward.18} parent=0 // pred_check
    _
  $region15: #{pcq_mobilenet_forward.18} parent=0 // pred_check_branch
    %105 = sbr.rel (0) target = $region17
  $region16: #{pcq_mobilenet_forward.18} parent=0 // pred_region
    _
  $region17: #{pcq_mobilenet_forward.18} parent=0 // pred_fallthru
    _
  // Predicated region
  $region18: #{pcq_mobilenet_forward.18} parent=0 // pred_check
    _
  $region19: #{pcq_mobilenet_forward.18} parent=0 // pred_check_branch
    %107 = sbr.rel (0) target = $region21
  $region20: #{pcq_mobilenet_forward.18} parent=0 // pred_region
    _
  $region21: #{pcq_mobilenet_forward.18} parent=0 // pred_fallthru
    _

// kernel: pcq_mobilenet_forward.19
$region0: #{pcq_mobilenet_forward.19}
  #allocation0 [shape = 'u32[]', space=smem, size = 0x4, offset = 0x4, fixed_abs, tag = 'smem constant byte address 0x4 - core index']
  #allocation1 [shape = 'u32[144,128]{1,0:T(1,128)}', space=vmem, size = 0x12000, scoped, tag = 'internal scratch']
  #allocation2 [shape = 'f32[8,128]{1,0:T(8,128)}', space=vmem, size = 0x1000, scoped, tag = 'scratch operand']
  %s0 = inlined_call_operand.vmem [shape: bf16[1,8,128], index: 0, kind: input, shape index: {}]
  %s1 = inlined_call_operand.vmem [shape: bf16[128,128], index: 1, kind: input, shape index: {}]
  %s2 = inlined_call_operand.vmem [shape: f32[1,128], index: 2, kind: input, shape index: {}]
  %s3 = inlined_call_operand.vmem [shape: f32[1,8,128], index: 3, kind: output, shape index: {}]
  %s4 = sld [smem:[#allocation0]]
  $region30: #{pcq_mobilenet_forward.19} parent=0
    _
  %s6 = ssub.s32 1, %s4
  %s7 = scalar_select 0, %s6, %s4
  // Predicated region
  $region2: #{pcq_mobilenet_forward.19} parent=0 // pred_check
    _
  $region3: #{pcq_mobilenet_forward.19} parent=0 // pred_check_branch
    %9 = sbr.rel (0) target = $region5
  $region4: #{pcq_mobilenet_forward.19} parent=0 // pred_region
    _
  $region5: #{pcq_mobilenet_forward.19} parent=0 // pred_fallthru
    _
  // Predicated region
  $region6: #{pcq_mobilenet_forward.19} parent=0 // pred_check
    _
  $region7: #{pcq_mobilenet_forward.19} parent=0 // pred_check_branch
    %11 = sbr.rel (0) target = $region9
  $region8: #{pcq_mobilenet_forward.19} parent=0 // pred_region
    _
  $region9: #{pcq_mobilenet_forward.19} parent=0 // pred_fallthru
    _
  // Predicated region
  $region10: #{pcq_mobilenet_forward.19} parent=0 // pred_check
    _
  $region11: #{pcq_mobilenet_forward.19} parent=0 // pred_check_branch
    %13 = sbr.rel (0) target = $region13
  $region12: #{pcq_mobilenet_forward.19} parent=0 // pred_region
    _
  $region13: #{pcq_mobilenet_forward.19} parent=0 // pred_fallthru
    _
  %p15 = scmp.eq.s32.totalorder 0, 0
  // Predicated region
  $region14: #{pcq_mobilenet_forward.19} parent=0 // pred_check
    %p16 = pneg %p15
  $region15: #{pcq_mobilenet_forward.19} parent=0 // pred_check_branch
    %18 = sbr.rel (%p16) target = $region17
  $region16: #{pcq_mobilenet_forward.19} parent=0 // pred_region
    %19 = vst [vmem:[#allocation2] sm:$0xff] 0.0
  $region17: #{pcq_mobilenet_forward.19} parent=0 // pred_fallthru
    _
  %v20 = vld [vmem:[%s0] sm:$0xf]
  %v21 = vld [vmem:[#allocation2] sm:$0xff]
  %v22 = vld [vmem:[%s1] sm:$0xf]
  %v23 = vld [vmem:[%s1 + $0x4] sm:$0xf]
  %v24 = vld [vmem:[%s1 + $0x8] sm:$0xf]
  %v25 = vld [vmem:[%s1 + $0xc] sm:$0xf]
  %v26 = vld [vmem:[%s1 + $0x10] sm:$0xf]
  %v27 = vld [vmem:[%s1 + $0x14] sm:$0xf]
  %v28 = vld [vmem:[%s1 + $0x18] sm:$0xf]
  %v29 = vld [vmem:[%s1 + $0x1c] sm:$0xf]
  %v30 = vld [vmem:[%s1 + $0x20] sm:$0xf]
  %v31 = vld [vmem:[%s1 + $0x24] sm:$0xf]
  %v32 = vld [vmem:[%s1 + $0x28] sm:$0xf]
  %v33 = vld [vmem:[%s1 + $0x2c] sm:$0xf]
  %v34 = vld [vmem:[%s1 + $0x30] sm:$0xf]
  %v35 = vld [vmem:[%s1 + $0x34] sm:$0xf]
  %v36 = vld [vmem:[%s1 + $0x38] sm:$0xf]
  %v37 = vld [vmem:[%s1 + $0x3c] sm:$0xf]
  %v54 = vunpack.c.l.b16 %v22
  %v55 = vunpack.c.l.b16 %v23
  %v56 = vunpack.c.l.b16 %v24
  %v57 = vunpack.c.l.b16 %v25
  %v58 = vunpack.c.l.b16 %v26
  %v59 = vunpack.c.l.b16 %v27
  %v60 = vunpack.c.l.b16 %v28
  %v61 = vunpack.c.l.b16 %v29
  %v62 = vunpack.c.l.b16 %v30
  %v63 = vunpack.c.l.b16 %v31
  %v64 = vunpack.c.l.b16 %v32
  %v65 = vunpack.c.l.b16 %v33
  %v66 = vunpack.c.l.b16 %v34
  %v67 = vunpack.c.l.b16 %v35
  %v68 = vunpack.c.l.b16 %v36
  %v69 = vunpack.c.l.b16 %v37
  %v70 = vpack.c.b16 %v55, %v54
  %v71 = vpack.c.b16 %v57, %v56
  %v72 = vpack.c.b16 %v59, %v58
  %v73 = vpack.c.b16 %v61, %v60
  %v74 = vpack.c.b16 %v63, %v62
  %v75 = vpack.c.b16 %v65, %v64
  %v76 = vpack.c.b16 %v67, %v66
  %v77 = vpack.c.b16 %v69, %v68
  %86 = vmatprep.subr.bf16.mxu0 0
  %87 = vmatpush1.bf16.msra.mxu0 %v70
  %88 = vmatprep.subr.bf16.mxu0 0
  %89 = vmatpush1.bf16.msra.mxu0 %v71
  %90 = vmatprep.subr.bf16.mxu0 0
  %91 = vmatpush1.bf16.msra.mxu0 %v72
  %92 = vmatprep.subr.bf16.mxu0 0
  %93 = vmatpush1.bf16.msra.mxu0 %v73
  %94 = vmatprep.subr.bf16.mxu0 0
  %95 = vmatpush1.bf16.msra.mxu0 %v74
  %96 = vmatprep.subr.bf16.mxu0 0
  %97 = vmatpush1.bf16.msra.mxu0 %v75
  %98 = vmatprep.subr.bf16.mxu0 0
  %99 = vmatpush1.bf16.msra.mxu0 %v76
  %100 = vmatprep.subr.bf16.mxu0 0
  %101 = vmatpush1.bf16.msra.mxu0 %v77
  %102 = vmatprep.subr.bf16.mxu0 0
  %103 = vmatpush1.bf16.msra.mxu0 0
  %104 = vmatprep.subr.bf16.mxu0 0
  %105 = vmatpush1.bf16.msra.mxu0 0
  %106 = vmatprep.subr.bf16.mxu0 0
  %107 = vmatpush1.bf16.msra.mxu0 0
  %108 = vmatprep.subr.bf16.mxu0 0
  %109 = vmatpush1.bf16.msra.mxu0 0
  %110 = vmatprep.subr.bf16.mxu0 0
  %111 = vmatpush1.bf16.msra.mxu0 0
  %112 = vmatprep.subr.bf16.mxu0 0
  %113 = vmatpush1.bf16.msra.mxu0 0
  %114 = vmatprep.subr.bf16.mxu0 0
  %115 = vmatpush1.bf16.msra.mxu0 0
  %116 = vmatprep.subr.bf16.mxu0 0
  %117 = vmatpush1.bf16.msra.mxu0 0
  %118 = vmatprep.mubr.bf16.mxu0 0
  %119 = vmatmul.mubr.bf16.gmra.mrb[0].mxu0 %v20
  %v120 = vpop.f32.mrb[0].mxu0
  %v121 = vadd.f32 0.0, %v120
  %v122 = vpop.f32.mrb[0].mxu0
  %v123 = vpop.f32.mrb[0].mxu0
  %v124 = vpop.f32.mrb[0].mxu0
  %125 = vdwg.mxu0
  %v126 = vadd.f32 %v21, %v121
  %127 = vst [vmem:[#allocation2] sm:$0xff] %v126
  // Predicated region
  $region18: #{pcq_mobilenet_forward.19} parent=0 // pred_check
    %p128 = pneg %p15
  $region19: #{pcq_mobilenet_forward.19} parent=0 // pred_check_branch
    %130 = sbr.rel (%p128) target = $region21
  $region20: #{pcq_mobilenet_forward.19} parent=0 // pred_region
    %v131 = vld [vmem:[#allocation2] sm:$0xff]
    %v132 = vld [vmem:[%s2] sm:$0x1]
    %v134 = vlaneseq
    %v135 = vshrl.u32 %v134, 7
    %v136 = vsub.s32 0, %v135
    %v137 = vrot.slane %v132, %v136
    %v139 = vadd.f32 %v131, %v137
    %v140 = vmax.f32 %v139, 0.0
    %141 = vst [vmem:[%s3] sm:$0xff] %v140
  $region21: #{pcq_mobilenet_forward.19} parent=0 // pred_fallthru
    _
  // Predicated region
  $region22: #{pcq_mobilenet_forward.19} parent=0 // pred_check
    _
  $region23: #{pcq_mobilenet_forward.19} parent=0 // pred_check_branch
    %143 = sbr.rel (0) target = $region25
  $region24: #{pcq_mobilenet_forward.19} parent=0 // pred_region
    _
  $region25: #{pcq_mobilenet_forward.19} parent=0 // pred_fallthru
    _
  // Predicated region
  $region26: #{pcq_mobilenet_forward.19} parent=0 // pred_check
    _
  $region27: #{pcq_mobilenet_forward.19} parent=0 // pred_check_branch
    %145 = sbr.rel (0) target = $region29
  $region28: #{pcq_mobilenet_forward.19} parent=0 // pred_region
    _
  $region29: #{pcq_mobilenet_forward.19} parent=0 // pred_fallthru
    _

// kernel: pcq_mobilenet_forward.16
$region0: #{pcq_mobilenet_forward.16}
  #allocation0 [shape = 'u32[]', space=smem, size = 0x4, offset = 0x4, fixed_abs, tag = 'smem constant byte address 0x4 - core index']
  #allocation1 [shape = 'u32[144,128]{1,0:T(1,128)}', space=vmem, size = 0x12000, scoped, tag = 'internal scratch']
  #allocation2 [shape = 'f32[128,128]{1,0:T(8,128)}', space=vmem, size = 0x10000, scoped, tag = 'scratch operand']
  %s0 = inlined_call_operand.vmem [shape: bf16[1,128,128], index: 0, kind: input, shape index: {}]
  %s1 = inlined_call_operand.vmem [shape: bf16[128,128], index: 1, kind: input, shape index: {}]
  %s2 = inlined_call_operand.vmem [shape: bf16[1,128,128], index: 2, kind: output, shape index: {}]
  %s3 = sld [smem:[#allocation0]]
  $region26: #{pcq_mobilenet_forward.16} parent=0
    _
  %s5 = ssub.s32 1, %s3
  %s6 = scalar_select 0, %s5, %s3
  // Predicated region
  $region2: #{pcq_mobilenet_forward.16} parent=0 // pred_check
    _
  $region3: #{pcq_mobilenet_forward.16} parent=0 // pred_check_branch
    %8 = sbr.rel (0) target = $region5
  $region4: #{pcq_mobilenet_forward.16} parent=0 // pred_region
    _
  $region5: #{pcq_mobilenet_forward.16} parent=0 // pred_fallthru
    _
  // Predicated region
  $region6: #{pcq_mobilenet_forward.16} parent=0 // pred_check
    _
  $region7: #{pcq_mobilenet_forward.16} parent=0 // pred_check_branch
    %10 = sbr.rel (0) target = $region9
  $region8: #{pcq_mobilenet_forward.16} parent=0 // pred_region
    _
  $region9: #{pcq_mobilenet_forward.16} parent=0 // pred_fallthru
    _
  %p12 = scmp.eq.s32.totalorder 0, 0
  // Predicated region
  $region10: #{pcq_mobilenet_forward.16} parent=0 // pred_check
    %p13 = pneg %p12
  $region11: #{pcq_mobilenet_forward.16} parent=0 // pred_check_branch
    %15 = sbr.rel (%p13) target = $region13
  $region12: #{pcq_mobilenet_forward.16} parent=0 // pred_region
    %16 = vst [vmem:[#allocation2] sm:$0xff] 0.0
    %17 = vst [vmem:[#allocation2 + $0x8] sm:$0xff] 0.0
    %18 = vst [vmem:[#allocation2 + $0x10] sm:$0xff] 0.0
    %19 = vst [vmem:[#allocation2 + $0x18] sm:$0xff] 0.0
    %20 = vst [vmem:[#allocation2 + $0x20] sm:$0xff] 0.0
    %21 = vst [vmem:[#allocation2 + $0x28] sm:$0xff] 0.0
    %22 = vst [vmem:[#allocation2 + $0x30] sm:$0xff] 0.0
    %23 = vst [vmem:[#allocation2 + $0x38] sm:$0xff] 0.0
    %24 = vst [vmem:[#allocation2 + $0x40] sm:$0xff] 0.0
    %25 = vst [vmem:[#allocation2 + $0x48] sm:$0xff] 0.0
    %26 = vst [vmem:[#allocation2 + $0x50] sm:$0xff] 0.0
    %27 = vst [vmem:[#allocation2 + $0x58] sm:$0xff] 0.0
    %28 = vst [vmem:[#allocation2 + $0x60] sm:$0xff] 0.0
    %29 = vst [vmem:[#allocation2 + $0x68] sm:$0xff] 0.0
    %30 = vst [vmem:[#allocation2 + $0x70] sm:$0xff] 0.0
    %31 = vst [vmem:[#allocation2 + $0x78] sm:$0xff] 0.0
  $region13: #{pcq_mobilenet_forward.16} parent=0 // pred_fallthru
    _
  %v32 = vld [vmem:[%s0] sm:$0xf]
  %v33 = vld [vmem:[%s0 + $0x4] sm:$0xf]
  %v34 = vld [vmem:[%s0 + $0x8] sm:$0xf]
  %v35 = vld [vmem:[%s0 + $0xc] sm:$0xf]
  %v36 = vld [vmem:[%s0 + $0x10] sm:$0xf]
  %v37 = vld [vmem:[%s0 + $0x14] sm:$0xf]
  %v38 = vld [vmem:[%s0 + $0x18] sm:$0xf]
  %v39 = vld [vmem:[%s0 + $0x1c] sm:$0xf]
  %v40 = vld [vmem:[%s0 + $0x20] sm:$0xf]
  %v41 = vld [vmem:[%s0 + $0x24] sm:$0xf]
  %v42 = vld [vmem:[%s0 + $0x28] sm:$0xf]
  %v43 = vld [vmem:[%s0 + $0x2c] sm:$0xf]
  %v44 = vld [vmem:[%s0 + $0x30] sm:$0xf]
  %v45 = vld [vmem:[%s0 + $0x34] sm:$0xf]
  %v46 = vld [vmem:[%s0 + $0x38] sm:$0xf]
  %v47 = vld [vmem:[%s0 + $0x3c] sm:$0xf]
  %v48 = vld [vmem:[#allocation2] sm:$0xff]
  %v49 = vld [vmem:[#allocation2 + $0x8] sm:$0xff]
  %v50 = vld [vmem:[#allocation2 + $0x10] sm:$0xff]
  %v51 = vld [vmem:[#allocation2 + $0x18] sm:$0xff]
  %v52 = vld [vmem:[#allocation2 + $0x20] sm:$0xff]
  %v53 = vld [vmem:[#allocation2 + $0x28] sm:$0xff]
  %v54 = vld [vmem:[#allocation2 + $0x30] sm:$0xff]
  %v55 = vld [vmem:[#allocation2 + $0x38] sm:$0xff]
  %v56 = vld [vmem:[#allocation2 + $0x40] sm:$0xff]
  %v57 = vld [vmem:[#allocation2 + $0x48] sm:$0xff]
  %v58 = vld [vmem:[#allocation2 + $0x50] sm:$0xff]
  %v59 = vld [vmem:[#allocation2 + $0x58] sm:$0xff]
  %v60 = vld [vmem:[#allocation2 + $0x60] sm:$0xff]
  %v61 = vld [vmem:[#allocation2 + $0x68] sm:$0xff]
  %v62 = vld [vmem:[#allocation2 + $0x70] sm:$0xff]
  %v63 = vld [vmem:[#allocation2 + $0x78] sm:$0xff]
  %v64 = vld [vmem:[%s1] sm:$0xf]
  %v65 = vld [vmem:[%s1 + $0x4] sm:$0xf]
  %v66 = vld [vmem:[%s1 + $0x8] sm:$0xf]
  %v67 = vld [vmem:[%s1 + $0xc] sm:$0xf]
  %v68 = vld [vmem:[%s1 + $0x10] sm:$0xf]
  %v69 = vld [vmem:[%s1 + $0x14] sm:$0xf]
  %v70 = vld [vmem:[%s1 + $0x18] sm:$0xf]
  %v71 = vld [vmem:[%s1 + $0x1c] sm:$0xf]
  %v72 = vld [vmem:[%s1 + $0x20] sm:$0xf]
  %v73 = vld [vmem:[%s1 + $0x24] sm:$0xf]
  %v74 = vld [vmem:[%s1 + $0x28] sm:$0xf]
  %v75 = vld [vmem:[%s1 + $0x2c] sm:$0xf]
  %v76 = vld [vmem:[%s1 + $0x30] sm:$0xf]
  %v77 = vld [vmem:[%s1 + $0x34] sm:$0xf]
  %v78 = vld [vmem:[%s1 + $0x38] sm:$0xf]
  %v79 = vld [vmem:[%s1 + $0x3c] sm:$0xf]
  %v96 = vunpack.c.l.b16 %v32
  %v97 = vunpack.c.l.b16 %v33
  %v98 = vunpack.c.l.b16 %v34
  %v99 = vunpack.c.l.b16 %v35
  %v100 = vunpack.c.l.b16 %v36
  %v101 = vunpack.c.l.b16 %v37
  %v102 = vunpack.c.l.b16 %v38
  %v103 = vunpack.c.l.b16 %v39
  %v104 = vunpack.c.l.b16 %v40
  %v105 = vunpack.c.l.b16 %v41
  %v106 = vunpack.c.l.b16 %v42
  %v107 = vunpack.c.l.b16 %v43
  %v108 = vunpack.c.l.b16 %v44
  %v109 = vunpack.c.l.b16 %v45
  %v110 = vunpack.c.l.b16 %v46
  %v111 = vunpack.c.l.b16 %v47
  %v112 = vpack.c.b16 %v97, %v96
  %v113 = vpack.c.b16 %v99, %v98
  %v114 = vpack.c.b16 %v101, %v100
  %v115 = vpack.c.b16 %v103, %v102
  %v116 = vpack.c.b16 %v105, %v104
  %v117 = vpack.c.b16 %v107, %v106
  %v118 = vpack.c.b16 %v109, %v108
  %v119 = vpack.c.b16 %v111, %v110
  %v144 = vunpack.c.l.b16 %v64
  %v145 = vunpack.c.l.b16 %v65
  %v146 = vunpack.c.l.b16 %v66
  %v147 = vunpack.c.l.b16 %v67
  %v148 = vunpack.c.l.b16 %v68
  %v149 = vunpack.c.l.b16 %v69
  %v150 = vunpack.c.l.b16 %v70
  %v151 = vunpack.c.l.b16 %v71
  %v152 = vunpack.c.l.b16 %v72
  %v153 = vunpack.c.l.b16 %v73
  %v154 = vunpack.c.l.b16 %v74
  %v155 = vunpack.c.l.b16 %v75
  %v156 = vunpack.c.l.b16 %v76
  %v157 = vunpack.c.l.b16 %v77
  %v158 = vunpack.c.l.b16 %v78
  %v159 = vunpack.c.l.b16 %v79
  %v160 = vpack.c.b16 %v145, %v144
  %v161 = vpack.c.b16 %v147, %v146
  %v162 = vpack.c.b16 %v149, %v148
  %v163 = vpack.c.b16 %v151, %v150
  %v164 = vpack.c.b16 %v153, %v152
  %v165 = vpack.c.b16 %v155, %v154
  %v166 = vpack.c.b16 %v157, %v156
  %v167 = vpack.c.b16 %v159, %v158
  %176 = vmatprep.subr.bf16.mxu0 0
  %177 = vmatpush1.bf16.msra.mxu0 %v160
  %178 = vmatprep.subr.bf16.mxu0 0
  %179 = vmatpush1.bf16.msra.mxu0 %v161
  %180 = vmatprep.subr.bf16.mxu0 0
  %181 = vmatpush1.bf16.msra.mxu0 %v162
  %182 = vmatprep.subr.bf16.mxu0 0
  %183 = vmatpush1.bf16.msra.mxu0 %v163
  %184 = vmatprep.subr.bf16.mxu0 0
  %185 = vmatpush1.bf16.msra.mxu0 %v164
  %186 = vmatprep.subr.bf16.mxu0 0
  %187 = vmatpush1.bf16.msra.mxu0 %v165
  %188 = vmatprep.subr.bf16.mxu0 0
  %189 = vmatpush1.bf16.msra.mxu0 %v166
  %190 = vmatprep.subr.bf16.mxu0 0
  %191 = vmatpush1.bf16.msra.mxu0 %v167
  %192 = vmatprep.subr.bf16.mxu0 0
  %193 = vmatpush1.bf16.msra.mxu0 0
  %194 = vmatprep.subr.bf16.mxu0 0
  %195 = vmatpush1.bf16.msra.mxu0 0
  %196 = vmatprep.subr.bf16.mxu0 0
  %197 = vmatpush1.bf16.msra.mxu0 0
  %198 = vmatprep.subr.bf16.mxu0 0
  %199 = vmatpush1.bf16.msra.mxu0 0
  %200 = vmatprep.subr.bf16.mxu0 0
  %201 = vmatpush1.bf16.msra.mxu0 0
  %202 = vmatprep.subr.bf16.mxu0 0
  %203 = vmatpush1.bf16.msra.mxu0 0
  %204 = vmatprep.subr.bf16.mxu0 0
  %205 = vmatpush1.bf16.msra.mxu0 0
  %206 = vmatprep.subr.bf16.mxu0 0
  %207 = vmatpush1.bf16.msra.mxu0 0
  %208 = vmatprep.mubr.bf16.mxu0 0
  %209 = vmatmul.mubr.bf16.gmra.mrb[0].mxu0 %v112
  %v210 = vpop.f32.mrb[0].mxu0
  %v211 = vadd.f32 0.0, %v210
  %v212 = vpop.f32.mrb[0].mxu0
  %v213 = vpop.f32.mrb[0].mxu0
  %v214 = vadd.f32 0.0, %v213
  %v215 = vpop.f32.mrb[0].mxu0
  %216 = vmatprep.mubr.bf16.mxu0 0
  %217 = vmatmul.mubr.bf16.gmra.mrb[0].mxu0 %v113
  %v218 = vpop.f32.mrb[0].mxu0
  %v219 = vadd.f32 0.0, %v218
  %v220 = vpop.f32.mrb[0].mxu0
  %v221 = vpop.f32.mrb[0].mxu0
  %v222 = vadd.f32 0.0, %v221
  %v223 = vpop.f32.mrb[0].mxu0
  %224 = vmatprep.mubr.bf16.mxu0 0
  %225 = vmatmul.mubr.bf16.gmra.mrb[0].mxu0 %v114
  %v226 = vpop.f32.mrb[0].mxu0
  %v227 = vadd.f32 0.0, %v226
  %v228 = vpop.f32.mrb[0].mxu0
  %v229 = vpop.f32.mrb[0].mxu0
  %v230 = vadd.f32 0.0, %v229
  %v231 = vpop.f32.mrb[0].mxu0
  %232 = vmatprep.mubr.bf16.mxu0 0
  %233 = vmatmul.mubr.bf16.gmra.mrb[0].mxu0 %v115
  %v234 = vpop.f32.mrb[0].mxu0
  %v235 = vadd.f32 0.0, %v234
  %v236 = vpop.f32.mrb[0].mxu0
  %v237 = vpop.f32.mrb[0].mxu0
  %v238 = vadd.f32 0.0, %v237
  %v239 = vpop.f32.mrb[0].mxu0
  %240 = vmatprep.mubr.bf16.mxu0 0
  %241 = vmatmul.mubr.bf16.gmra.mrb[0].mxu0 %v116
  %v242 = vpop.f32.mrb[0].mxu0
  %v243 = vadd.f32 0.0, %v242
  %v244 = vpop.f32.mrb[0].mxu0
  %v245 = vpop.f32.mrb[0].mxu0
  %v246 = vadd.f32 0.0, %v245
  %v247 = vpop.f32.mrb[0].mxu0
  %248 = vmatprep.mubr.bf16.mxu0 0
  %249 = vmatmul.mubr.bf16.gmra.mrb[0].mxu0 %v117
  %v250 = vpop.f32.mrb[0].mxu0
  %v251 = vadd.f32 0.0, %v250
  %v252 = vpop.f32.mrb[0].mxu0
  %v253 = vpop.f32.mrb[0].mxu0
  %v254 = vadd.f32 0.0, %v253
  %v255 = vpop.f32.mrb[0].mxu0
  %256 = vmatprep.mubr.bf16.mxu0 0
  %257 = vmatmul.mubr.bf16.gmra.mrb[0].mxu0 %v118
  %v258 = vpop.f32.mrb[0].mxu0
  %v259 = vadd.f32 0.0, %v258
  %v260 = vpop.f32.mrb[0].mxu0
  %v261 = vpop.f32.mrb[0].mxu0
  %v262 = vadd.f32 0.0, %v261
  %v263 = vpop.f32.mrb[0].mxu0
  %264 = vmatprep.mubr.bf16.mxu0 0
  %265 = vmatmul.mubr.bf16.gmra.mrb[0].mxu0 %v119
  %v266 = vpop.f32.mrb[0].mxu0
  %v267 = vadd.f32 0.0, %v266
  %v268 = vpop.f32.mrb[0].mxu0
  %v269 = vpop.f32.mrb[0].mxu0
  %v270 = vadd.f32 0.0, %v269
  %v271 = vpop.f32.mrb[0].mxu0
  %272 = vdwg.mxu0
  %v273 = vadd.f32 %v48, %v211
  %v274 = vadd.f32 %v49, %v214
  %v275 = vadd.f32 %v50, %v219
  %v276 = vadd.f32 %v51, %v222
  %v277 = vadd.f32 %v52, %v227
  %v278 = vadd.f32 %v53, %v230
  %v279 = vadd.f32 %v54, %v235
  %v280 = vadd.f32 %v55, %v238
  %v281 = vadd.f32 %v56, %v243
  %v282 = vadd.f32 %v57, %v246
  %v283 = vadd.f32 %v58, %v251
  %v284 = vadd.f32 %v59, %v254
  %v285 = vadd.f32 %v60, %v259
  %v286 = vadd.f32 %v61, %v262
  %v287 = vadd.f32 %v62, %v267
  %v288 = vadd.f32 %v63, %v270
  %289 = vst [vmem:[#allocation2] sm:$0xff] %v273
  %290 = vst [vmem:[#allocation2 + $0x8] sm:$0xff] %v274
  %291 = vst [vmem:[#allocation2 + $0x10] sm:$0xff] %v275
  %292 = vst [vmem:[#allocation2 + $0x18] sm:$0xff] %v276
  %293 = vst [vmem:[#allocation2 + $0x20] sm:$0xff] %v277
  %294 = vst [vmem:[#allocation2 + $0x28] sm:$0xff] %v278
  %295 = vst [vmem:[#allocation2 + $0x30] sm:$0xff] %v279
  %296 = vst [vmem:[#allocation2 + $0x38] sm:$0xff] %v280
  %297 = vst [vmem:[#allocation2 + $0x40] sm:$0xff] %v281
  %298 = vst [vmem:[#allocation2 + $0x48] sm:$0xff] %v282
  %299 = vst [vmem:[#allocation2 + $0x50] sm:$0xff] %v283
  %300 = vst [vmem:[#allocation2 + $0x58] sm:$0xff] %v284
  %301 = vst [vmem:[#allocation2 + $0x60] sm:$0xff] %v285
  %302 = vst [vmem:[#allocation2 + $0x68] sm:$0xff] %v286
  %303 = vst [vmem:[#allocation2 + $0x70] sm:$0xff] %v287
  %304 = vst [vmem:[#allocation2 + $0x78] sm:$0xff] %v288
  // Predicated region
  $region14: #{pcq_mobilenet_forward.16} parent=0 // pred_check
    %p305 = pneg %p12
  $region15: #{pcq_mobilenet_forward.16} parent=0 // pred_check_branch
    %307 = sbr.rel (%p305) target = $region17
  $region16: #{pcq_mobilenet_forward.16} parent=0 // pred_region
    %v308 = vld [vmem:[#allocation2] sm:$0xff]
    %v309 = vld [vmem:[#allocation2 + $0x8] sm:$0xff]
    %v310 = vld [vmem:[#allocation2 + $0x10] sm:$0xff]
    %v311 = vld [vmem:[#allocation2 + $0x18] sm:$0xff]
    %v312 = vld [vmem:[#allocation2 + $0x20] sm:$0xff]
    %v313 = vld [vmem:[#allocation2 + $0x28] sm:$0xff]
    %v314 = vld [vmem:[#allocation2 + $0x30] sm:$0xff]
    %v315 = vld [vmem:[#allocation2 + $0x38] sm:$0xff]
    %v316 = vld [vmem:[#allocation2 + $0x40] sm:$0xff]
    %v317 = vld [vmem:[#allocation2 + $0x48] sm:$0xff]
    %v318 = vld [vmem:[#allocation2 + $0x50] sm:$0xff]
    %v319 = vld [vmem:[#allocation2 + $0x58] sm:$0xff]
    %v320 = vld [vmem:[#allocation2 + $0x60] sm:$0xff]
    %v321 = vld [vmem:[#allocation2 + $0x68] sm:$0xff]
    %v322 = vld [vmem:[#allocation2 + $0x70] sm:$0xff]
    %v323 = vld [vmem:[#allocation2 + $0x78] sm:$0xff]
    %v324 = vadd.f32 %v308, 3.0
    %v325 = vadd.f32 %v309, 3.0
    %v326 = vadd.f32 %v310, 3.0
    %v327 = vadd.f32 %v311, 3.0
    %v328 = vadd.f32 %v312, 3.0
    %v329 = vadd.f32 %v313, 3.0
    %v330 = vadd.f32 %v314, 3.0
    %v331 = vadd.f32 %v315, 3.0
    %v332 = vadd.f32 %v316, 3.0
    %v333 = vadd.f32 %v317, 3.0
    %v334 = vadd.f32 %v318, 3.0
    %v335 = vadd.f32 %v319, 3.0
    %v336 = vadd.f32 %v320, 3.0
    %v337 = vadd.f32 %v321, 3.0
    %v338 = vadd.f32 %v322, 3.0
    %v339 = vadd.f32 %v323, 3.0
    %v340 = vmax.f32 %v324, 0.0
    %v341 = vmax.f32 %v325, 0.0
    %v342 = vmax.f32 %v326, 0.0
    %v343 = vmax.f32 %v327, 0.0
    %v344 = vmax.f32 %v328, 0.0
    %v345 = vmax.f32 %v329, 0.0
    %v346 = vmax.f32 %v330, 0.0
    %v347 = vmax.f32 %v331, 0.0
    %v348 = vmax.f32 %v332, 0.0
    %v349 = vmax.f32 %v333, 0.0
    %v350 = vmax.f32 %v334, 0.0
    %v351 = vmax.f32 %v335, 0.0
    %v352 = vmax.f32 %v336, 0.0
    %v353 = vmax.f32 %v337, 0.0
    %v354 = vmax.f32 %v338, 0.0
    %v355 = vmax.f32 %v339, 0.0
    %v356 = vmin.f32 %v340, 6.0
    %v357 = vmin.f32 %v341, 6.0
    %v358 = vmin.f32 %v342, 6.0
    %v359 = vmin.f32 %v343, 6.0
    %v360 = vmin.f32 %v344, 6.0
    %v361 = vmin.f32 %v345, 6.0
    %v362 = vmin.f32 %v346, 6.0
    %v363 = vmin.f32 %v347, 6.0
    %v364 = vmin.f32 %v348, 6.0
    %v365 = vmin.f32 %v349, 6.0
    %v366 = vmin.f32 %v350, 6.0
    %v367 = vmin.f32 %v351, 6.0
    %v368 = vmin.f32 %v352, 6.0
    %v369 = vmin.f32 %v353, 6.0
    %v370 = vmin.f32 %v354, 6.0
    %v371 = vmin.f32 %v355, 6.0
    %v372 = vmul.f32 %v308, %v356
    %v373 = vmul.f32 %v309, %v357
    %v374 = vmul.f32 %v310, %v358
    %v375 = vmul.f32 %v311, %v359
    %v376 = vmul.f32 %v312, %v360
    %v377 = vmul.f32 %v313, %v361
    %v378 = vmul.f32 %v314, %v362
    %v379 = vmul.f32 %v315, %v363
    %v380 = vmul.f32 %v316, %v364
    %v381 = vmul.f32 %v317, %v365
    %v382 = vmul.f32 %v318, %v366
    %v383 = vmul.f32 %v319, %v367
    %v384 = vmul.f32 %v320, %v368
    %v385 = vmul.f32 %v321, %v369
    %v386 = vmul.f32 %v322, %v370
    %v387 = vmul.f32 %v323, %v371
    %v388 = vmul.f32 %v372, 0.16666667
    %v389 = vmul.f32 %v373, 0.16666667
    %v390 = vmul.f32 %v374, 0.16666667
    %v391 = vmul.f32 %v375, 0.16666667
    %v392 = vmul.f32 %v376, 0.16666667
    %v393 = vmul.f32 %v377, 0.16666667
    %v394 = vmul.f32 %v378, 0.16666667
    %v395 = vmul.f32 %v379, 0.16666667
    %v396 = vmul.f32 %v380, 0.16666667
    %v397 = vmul.f32 %v381, 0.16666667
    %v398 = vmul.f32 %v382, 0.16666667
    %v399 = vmul.f32 %v383, 0.16666667
    %v400 = vmul.f32 %v384, 0.16666667
    %v401 = vmul.f32 %v385, 0.16666667
    %v402 = vmul.f32 %v386, 0.16666667
    %v403 = vmul.f32 %v387, 0.16666667
    %v404 = vpack.c.bf16 %v389, %v388
    %v405 = vpack.c.bf16 %v391, %v390
    %v406 = vpack.c.bf16 %v393, %v392
    %v407 = vpack.c.bf16 %v395, %v394
    %v408 = vpack.c.bf16 %v397, %v396
    %v409 = vpack.c.bf16 %v399, %v398
    %v410 = vpack.c.bf16 %v401, %v400
    %v411 = vpack.c.bf16 %v403, %v402
    %v420 = vunpack.c.l.b16 %v404
    %v421 = vunpack.c.h.b16 %v404
    %v422 = vunpack.c.l.b16 %v405
    %v423 = vunpack.c.h.b16 %v405
    %v424 = vunpack.c.l.b16 %v406
    %v425 = vunpack.c.h.b16 %v406
    %v426 = vunpack.c.l.b16 %v407
    %v427 = vunpack.c.h.b16 %v407
    %v428 = vunpack.c.l.b16 %v408
    %v429 = vunpack.c.h.b16 %v408
    %v430 = vunpack.c.l.b16 %v409
    %v431 = vunpack.c.h.b16 %v409
    %v432 = vunpack.c.l.b16 %v410
    %v433 = vunpack.c.h.b16 %v410
    %v434 = vunpack.c.l.b16 %v411
    %v435 = vunpack.c.h.b16 %v411
    %v436 = vpack.c.b16 %v420, %v420
    %v437 = vpack.c.b16 %v421, %v421
    %v438 = vpack.c.b16 %v422, %v422
    %v439 = vpack.c.b16 %v423, %v423
    %v440 = vpack.c.b16 %v424, %v424
    %v441 = vpack.c.b16 %v425, %v425
    %v442 = vpack.c.b16 %v426, %v426
    %v443 = vpack.c.b16 %v427, %v427
    %v444 = vpack.c.b16 %v428, %v428
    %v445 = vpack.c.b16 %v429, %v429
    %v446 = vpack.c.b16 %v430, %v430
    %v447 = vpack.c.b16 %v431, %v431
    %v448 = vpack.c.b16 %v432, %v432
    %v449 = vpack.c.b16 %v433, %v433
    %v450 = vpack.c.b16 %v434, %v434
    %v451 = vpack.c.b16 %v435, %v435
    %468 = vst [vmem:[%s2] sm:$0xf] %v436
    %469 = vst [vmem:[%s2 + $0x4] sm:$0xf] %v437
    %470 = vst [vmem:[%s2 + $0x8] sm:$0xf] %v438
    %471 = vst [vmem:[%s2 + $0xc] sm:$0xf] %v439
    %472 = vst [vmem:[%s2 + $0x10] sm:$0xf] %v440
    %473 = vst [vmem:[%s2 + $0x14] sm:$0xf] %v441
    %474 = vst [vmem:[%s2 + $0x18] sm:$0xf] %v442
    %475 = vst [vmem:[%s2 + $0x1c] sm:$0xf] %v443
    %476 = vst [vmem:[%s2 + $0x20] sm:$0xf] %v444
    %477 = vst [vmem:[%s2 + $0x24] sm:$0xf] %v445
    %478 = vst [vmem:[%s2 + $0x28] sm:$0xf] %v446
    %479 = vst [vmem:[%s2 + $0x2c] sm:$0xf] %v447
    %480 = vst [vmem:[%s2 + $0x30] sm:$0xf] %v448
    %481 = vst [vmem:[%s2 + $0x34] sm:$0xf] %v449
    %482 = vst [vmem:[%s2 + $0x38] sm:$0xf] %v450
    %483 = vst [vmem:[%s2 + $0x3c] sm:$0xf] %v451
  $region17: #{pcq_mobilenet_forward.16} parent=0 // pred_fallthru
    _
  // Predicated region
  $region18: #{pcq_mobilenet_forward.16} parent=0 // pred_check
    _
  $region19: #{pcq_mobilenet_forward.16} parent=0 // pred_check_branch
    %485 = sbr.rel (0) target = $region21
  $region20: #{pcq_mobilenet_forward.16} parent=0 // pred_region
    _
  $region21: #{pcq_mobilenet_forward.16} parent=0 // pred_fallthru
    _
  // Predicated region
  $region22: #{pcq_mobilenet_forward.16} parent=0 // pred_check
    _
  $region23: #{pcq_mobilenet_forward.16} parent=0 // pred_check_branch
    %487 = sbr.rel (0) target = $region25
  $region24: #{pcq_mobilenet_forward.16} parent=0 // pred_region
    _
  $region25: #{pcq_mobilenet_forward.16} parent=0 // pred_fallthru
    _

// kernel: pcq_mobilenet_forward.17
$region0: #{pcq_mobilenet_forward.17}
  #allocation0 [shape = 'u32[]', space=smem, size = 0x4, offset = 0x4, fixed_abs, tag = 'smem constant byte address 0x4 - core index']
  #allocation1 [shape = 'u32[144,128]{1,0:T(1,128)}', space=vmem, size = 0x12000, scoped, tag = 'internal scratch']
  %s0 = inlined_call_operand.vmem [shape: bf16[2,10,10,8], index: 0, kind: input, shape index: {}]
  %s1 = inlined_call_operand.vmem [shape: f32[3,3,8], index: 1, kind: input, shape index: {}]
  %s2 = inlined_call_operand.vmem [shape: bf16[2,8,8,8], index: 2, kind: output, shape index: {}]
  %s3 = sld [smem:[#allocation0]]
  $region41: #{pcq_mobilenet_forward.17} parent=0
    _
  %s5 = ssub.s32 1, %s3
  %s6 = scalar_select 0, %s5, %s3
  loop: start=0, step=1, limit=4
  $region2: #{pcq_mobilenet_forward.17} parent=0 // loop_pre_header
    _
  $region3: #{pcq_mobilenet_forward.17} parent=0 // loop_header
    %s8 = sphi 0, %s12
    %p9 = scmp.ge.s32.totalorder %s8, 4
    %s18 = sphi 0, %s20
    %s21 = sphi 0, %s18
    %s22 = sphi 0, %s21
    %s38 = sphi 0, %s22
    %s42 = sphi 0, %s42
    %s44 = sphi 0, %s42
    %s45 = sphi 0, %s44
    %s59 = sphi 0, %s45
    %s65 = sphi 0, %s67
    %s68 = sphi 0, %s65
    %s69 = sphi 0, %s68
    %s85 = sphi 0, %s69
  $region4: #{pcq_mobilenet_forward.17} parent=0 // loop_header_branch
    %11 = sbr.rel (%p9) target = $region8
  $region5: #{pcq_mobilenet_forward.17} parent=0 // loop_body
    %s13 = ssub.s32 %s8, 1
    %s14 = ssub.s32 %s8, 2
    %s15 = sadd.s32 %s8, 1
    %s16 = ssub.s32 %s8, %s15
    %p17 = scmp.eq.s32.totalorder %s16, 0
    %s19 = sadd.s32 %s18, 1
    %s20 = scalar_select %p17, %s18, %s19
    %p23 = pneg %p17
    %p24 = scmp.eq.s32.totalorder %s8, 1
    %p25 = por %p23, %p24
    %p26 = scmp.ne.s32.totalorder %s18, %s21
    %p27 = scmp.eq.s32.totalorder %s8, 0
    %p28 = por %p26, %p27
    %p29 = scmp.ne.s32.totalorder %s18, %s21
    %p30 = scmp.eq.s32.totalorder %s13, 1
    %p31 = por %p29, %p30
    %p32 = scmp.ne.s32.totalorder %s21, %s22
    %p33 = scmp.eq.s32.totalorder %s13, 0
    %p34 = por %p32, %p33
    %p35 = scmp.ne.s32.totalorder %s21, %s22
    %p36 = scmp.eq.s32.totalorder %s14, 1
    %p37 = por %p35, %p36
    %p39 = scmp.ne.s32.totalorder %s22, %s38
    %p40 = scmp.eq.s32.totalorder %s14, 0
    %p41 = por %p39, %p40
    %s43 = sadd.s32 %s42, 1
    %p46 = scmp.eq.s32.totalorder %s8, 1
    %p47 = scmp.ne.s32.totalorder %s42, %s44
    %p48 = scmp.eq.s32.totalorder %s8, 0
    %p49 = por %p47, %p48
    %p50 = scmp.ne.s32.totalorder %s42, %s44
    %p51 = scmp.eq.s32.totalorder %s13, 1
    %p52 = por %p50, %p51
    %p53 = scmp.ne.s32.totalorder %s44, %s45
    %p54 = scmp.eq.s32.totalorder %s13, 0
    %p55 = por %p53, %p54
    %p56 = scmp.ne.s32.totalorder %s44, %s45
    %p57 = scmp.eq.s32.totalorder %s14, 1
    %p58 = por %p56, %p57
    %p60 = scmp.ne.s32.totalorder %s45, %s59
    %p61 = scmp.eq.s32.totalorder %s14, 0
    %p62 = por %p60, %p61
    %s63 = ssub.s32 %s8, %s15
    %p64 = scmp.eq.s32.totalorder %s63, 0
    %s66 = sadd.s32 %s65, 1
    %s67 = scalar_select %p64, %s65, %s66
    %p70 = pneg %p64
    %p71 = scmp.eq.s32.totalorder %s8, 1
    %p72 = por %p70, %p71
    %p73 = scmp.ne.s32.totalorder %s65, %s68
    %p74 = scmp.eq.s32.totalorder %s8, 0
    %p75 = por %p73, %p74
    %p76 = scmp.ne.s32.totalorder %s65, %s68
    %p77 = scmp.eq.s32.totalorder %s13, 1
    %p78 = por %p76, %p77
    %p79 = scmp.ne.s32.totalorder %s68, %s69
    %p80 = scmp.eq.s32.totalorder %s13, 0
    %p81 = por %p79, %p80
    %p82 = scmp.ne.s32.totalorder %s68, %s69
    %p83 = scmp.eq.s32.totalorder %s14, 1
    %p84 = por %p82, %p83
    %p86 = scmp.ne.s32.totalorder %s69, %s85
    %p87 = scmp.eq.s32.totalorder %s14, 0
    %p88 = por %p86, %p87
    %p89 = scmp.le.s32.totalorder 1, %s8
    %p90 = scmp.lt.s32.totalorder %s8, 3
    %p91 = pnand %p89, %p90
    %p92 = pneg %p91
    // Predicated region
    $region9: #{pcq_mobilenet_forward.17} parent=5 // pred_check
      _
    $region10: #{pcq_mobilenet_forward.17} parent=5 // pred_check_branch
      %94 = sbr.rel (%p91) target = $region12
    $region11: #{pcq_mobilenet_forward.17} parent=5 // pred_region
      %s95 = ssub.s32 %s8, 1
      // Predicated region
      $region13: #{pcq_mobilenet_forward.17} parent=11 // pred_check
        %p96 = pneg %p55
      $region14: #{pcq_mobilenet_forward.17} parent=11 // pred_check_branch
        %98 = sbr.rel (%p96) target = $region16
      $region15: #{pcq_mobilenet_forward.17} parent=11 // pred_region
        _
      $region16: #{pcq_mobilenet_forward.17} parent=11 // pred_fallthru
        _
    $region12: #{pcq_mobilenet_forward.17} parent=5 // pred_fallthru
      _
    %p99 = scmp.lt.s32.totalorder %s8, 2
    // Predicated region
    $region17: #{pcq_mobilenet_forward.17} parent=5 // pred_check
      %p100 = pneg %p99
    $region18: #{pcq_mobilenet_forward.17} parent=5 // pred_check_branch
      %102 = sbr.rel (%p100) target = $region20
    $region19: #{pcq_mobilenet_forward.17} parent=5 // pred_region
      // Predicated region
      $region21: #{pcq_mobilenet_forward.17} parent=19 // pred_check
        %p103 = pneg %p28
      $region22: #{pcq_mobilenet_forward.17} parent=19 // pred_check_branch
        %105 = sbr.rel (%p103) target = $region24
      $region23: #{pcq_mobilenet_forward.17} parent=19 // pred_region
        %p106 = scmp.lt.s32.totalorder %s8, 1
        %s107 = scalar_select %p106, %s8, 1
        %s108 = smul.addr %s107, 20
        %s109 = smul.addr %s108, 4
        %s110 = scalar_lea.vmem %s0, %s109
      $region24: #{pcq_mobilenet_forward.17} parent=19 // pred_fallthru
        _
    $region20: #{pcq_mobilenet_forward.17} parent=5 // pred_fallthru
      _
    %p111 = scmp.le.s32.totalorder 1, %s8
    %p112 = scmp.lt.s32.totalorder %s8, 3
    %p113 = pnand %p111, %p112
    %p114 = pneg %p113
    // Predicated region
    $region25: #{pcq_mobilenet_forward.17} parent=5 // pred_check
      _
    $region26: #{pcq_mobilenet_forward.17} parent=5 // pred_check_branch
      %116 = sbr.rel (%p113) target = $region28
    $region27: #{pcq_mobilenet_forward.17} parent=5 // pred_region
      %s117 = ssub.s32 %s8, 1
      %p118 = scmp.lt.s32.totalorder %s13, 1
      %s119 = scalar_select %p118, %s13, 1
      %s120 = smul.addr %s119, 20
      %s121 = smul.addr %s120, 4
      %s122 = scalar_lea.vmem %s0, %s121
      %p123 = pneg %p34
      %p124 = pneg %p31
      %p125 = pneg %p55
      %p126 = pneg %p52
      %p127 = pneg %p81
      %p128 = pneg %p78
      %p129 = scmp.lt.s32.totalorder %s13, 1
      %s130 = scalar_select %p129, %s13, 1
      %s131 = smul.addr %s130, 8
      %s132 = smul.addr %s131, 4
      %s133 = scalar_lea.vmem %s2, %s132
      %p134 = scmp.lt.s32.totalorder %s13, 1
      %s135 = scalar_select %p134, %s13, 1
      %s136 = smul.addr %s135, 20
      %s137 = smul.addr %s136, 4
      %s138 = scalar_lea.vmem %s0, %s137
      %p139 = scmp.lt.s32.totalorder %s13, 1
      %s140 = scalar_select %p139, %s13, 1
      %s141 = smul.addr %s140, 8
      %s142 = smul.addr %s141, 4
      %s143 = scalar_lea.vmem %s2, %s142
      %v144 = vld [vmem:[%s1] sm:$0x7]
      %v145 = vld [vmem:[%s1 + $0x4] sm:$0x7]
      %v146 = vld [vmem:[%s1 + $0x8] sm:$0x7]
      %v147 = vld [vmem:[%s138] sm:$0xf]
      %v148 = vld [vmem:[%s138 + $0x8] sm:$0xf]
      %v149 = vld [vmem:[%s138 + $0x10] sm:$0xf]
      %v150 = vld [vmem:[%s138 + $0x18] sm:$0xf]
      %v151 = vld [vmem:[%s138 + $0x20] sm:$0xf]
      %v152 = vld [vmem:[%s138 + $0x28] sm:$0xf]
      %v153 = vld [vmem:[%s138 + $0x30] sm:$0xf]
      %v154 = vld [vmem:[%s138 + $0x38] sm:$0xf]
      %v155 = vunpack.c.l.bf16 %v147
      %v156 = vunpack.c.l.bf16 %v148
      %v157 = vunpack.c.l.bf16 %v149
      %v158 = vunpack.c.l.bf16 %v150
      %v159 = vunpack.c.l.bf16 %v151
      %v160 = vunpack.c.l.bf16 %v152
      %v161 = vunpack.c.l.bf16 %v153
      %v162 = vunpack.c.l.bf16 %v154
      %v163 = vlaneseq
      %v164 = vshrl.u32 %v163, 7
      %v165 = vsub.s32 0, %v164
      %v166 = vrot.slane %v144, %v165
      %v167 = vmul.f32 %v155, %v166
      %v168 = vmul.f32 %v156, %v166
      %v169 = vmul.f32 %v157, %v166
      %v170 = vmul.f32 %v158, %v166
      %v171 = vmul.f32 %v159, %v166
      %v172 = vmul.f32 %v160, %v166
      %v173 = vmul.f32 %v161, %v166
      %v174 = vmul.f32 %v162, %v166
      %v175 = vld [vmem:[%s138 + $0x4] sm:$0x1]
      %v176 = vld [vmem:[%s138 + $0xc] sm:$0x1]
      %v177 = vld [vmem:[%s138 + $0x14] sm:$0x1]
      %v178 = vld [vmem:[%s138 + $0x1c] sm:$0x1]
      %v179 = vld [vmem:[%s138 + $0x24] sm:$0x1]
      %v180 = vld [vmem:[%s138 + $0x2c] sm:$0x1]
      %v181 = vld [vmem:[%s138 + $0x34] sm:$0x1]
      %v182 = vld [vmem:[%s138 + $0x3c] sm:$0x1]
      %v183 = vunpack.c.l.bf16 %v175
      %v184 = vunpack.c.l.bf16 %v176
      %v185 = vunpack.c.l.bf16 %v177
      %v186 = vunpack.c.l.bf16 %v178
      %v187 = vunpack.c.l.bf16 %v179
      %v188 = vunpack.c.l.bf16 %v180
      %v189 = vunpack.c.l.bf16 %v181
      %v190 = vunpack.c.l.bf16 %v182
      %v191 = vlaneseq
      %v192 = vshrl.u32 %v191, 7
      %v193 = vsub.s32 1, %v192
      %v194 = vrot.slane %v144, %v193
      %v195 = vmul.f32 %v155, %v194
      %v196 = vmul.f32 %v183, %v194
      %v197 = vmul.f32 %v156, %v194
      %v198 = vmul.f32 %v184, %v194
      %v199 = vmul.f32 %v157, %v194
      %v200 = vmul.f32 %v185, %v194
      %v201 = vmul.f32 %v158, %v194
      %v202 = vmul.f32 %v186, %v194
      %v203 = vmul.f32 %v159, %v194
      %v204 = vmul.f32 %v187, %v194
      %v205 = vmul.f32 %v160, %v194
      %v206 = vmul.f32 %v188, %v194
      %v207 = vmul.f32 %v161, %v194
      %v208 = vmul.f32 %v189, %v194
      %v209 = vmul.f32 %v162, %v194
      %v210 = vmul.f32 %v190, %v194
      %vm227 = vcmask 1046528
      %v228 = vrot.slane %v195, 1
      %v229 = vrot.slane %v196, 1
      %v230 = vsel %vm227, %v228, %v229
      %v231 = vrot.slane %v197, 1
      %v232 = vrot.slane %v198, 1
      %v233 = vsel %vm227, %v231, %v232
      %v234 = vrot.slane %v199, 1
      %v235 = vrot.slane %v200, 1
      %v236 = vsel %vm227, %v234, %v235
      %v237 = vrot.slane %v201, 1
      %v238 = vrot.slane %v202, 1
      %v239 = vsel %vm227, %v237, %v238
      %v240 = vrot.slane %v203, 1
      %v241 = vrot.slane %v204, 1
      %v242 = vsel %vm227, %v240, %v241
      %v243 = vrot.slane %v205, 1
      %v244 = vrot.slane %v206, 1
      %v245 = vsel %vm227, %v243, %v244
      %v246 = vrot.slane %v207, 1
      %v247 = vrot.slane %v208, 1
      %v248 = vsel %vm227, %v246, %v247
      %v249 = vrot.slane %v209, 1
      %v250 = vrot.slane %v210, 1
      %v251 = vsel %vm227, %v249, %v250
      %v260 = vadd.f32 %v167, %v230
      %v261 = vadd.f32 %v168, %v233
      %v262 = vadd.f32 %v169, %v236
      %v263 = vadd.f32 %v170, %v239
      %v264 = vadd.f32 %v171, %v242
      %v265 = vadd.f32 %v172, %v245
      %v266 = vadd.f32 %v173, %v248
      %v267 = vadd.f32 %v174, %v251
      %v268 = vld [vmem:[%s138] sm:$0xe]
      %v269 = vld [vmem:[%s138 + $0x8] sm:$0xe]
      %v270 = vld [vmem:[%s138 + $0x10] sm:$0xe]
      %v271 = vld [vmem:[%s138 + $0x18] sm:$0xe]
      %v272 = vld [vmem:[%s138 + $0x20] sm:$0xe]
      %v273 = vld [vmem:[%s138 + $0x28] sm:$0xe]
      %v274 = vld [vmem:[%s138 + $0x30] sm:$0xe]
      %v275 = vld [vmem:[%s138 + $0x38] sm:$0xe]
      %v276 = vunpack.c.l.bf16 %v268
      %v277 = vunpack.c.l.bf16 %v269
      %v278 = vunpack.c.l.bf16 %v270
      %v279 = vunpack.c.l.bf16 %v271
      %v280 = vunpack.c.l.bf16 %v272
      %v281 = vunpack.c.l.bf16 %v273
      %v282 = vunpack.c.l.bf16 %v274
      %v283 = vunpack.c.l.bf16 %v275
      %v284 = vlaneseq
      %v285 = vshrl.u32 %v284, 7
      %v286 = vsub.s32 2, %v285
      %v287 = vrot.slane %v144, %v286
      %v288 = vmul.f32 %v276, %v287
      %v289 = vmul.f32 %v183, %v287
      %v290 = vmul.f32 %v277, %v287
      %v291 = vmul.f32 %v184, %v287
      %v292 = vmul.f32 %v278, %v287
      %v293 = vmul.f32 %v185, %v287
      %v294 = vmul.f32 %v279, %v287
      %v295 = vmul.f32 %v186, %v287
      %v296 = vmul.f32 %v280, %v287
      %v297 = vmul.f32 %v187, %v287
      %v298 = vmul.f32 %v281, %v287
      %v299 = vmul.f32 %v188, %v287
      %v300 = vmul.f32 %v282, %v287
      %v301 = vmul.f32 %v189, %v287
      %v302 = vmul.f32 %v283, %v287
      %v303 = vmul.f32 %v190, %v287
      %vm320 = vcmask 1045504
      %v321 = vrot.slane %v288, 2
      %v322 = vrot.slane %v289, 2
      %v323 = vsel %vm320, %v321, %v322
      %v324 = vrot.slane %v290, 2
      %v325 = vrot.slane %v291, 2
      %v326 = vsel %vm320, %v324, %v325
      %v327 = vrot.slane %v292, 2
      %v328 = vrot.slane %v293, 2
      %v329 = vsel %vm320, %v327, %v328
      %v330 = vrot.slane %v294, 2
      %v331 = vrot.slane %v295, 2
      %v332 = vsel %vm320, %v330, %v331
      %v333 = vrot.slane %v296, 2
      %v334 = vrot.slane %v297, 2
      %v335 = vsel %vm320, %v333, %v334
      %v336 = vrot.slane %v298, 2
      %v337 = vrot.slane %v299, 2
      %v338 = vsel %vm320, %v336, %v337
      %v339 = vrot.slane %v300, 2
      %v340 = vrot.slane %v301, 2
      %v341 = vsel %vm320, %v339, %v340
      %v342 = vrot.slane %v302, 2
      %v343 = vrot.slane %v303, 2
      %v344 = vsel %vm320, %v342, %v343
      %v353 = vadd.f32 %v260, %v323
      %v354 = vadd.f32 %v261, %v326
      %v355 = vadd.f32 %v262, %v329
      %v356 = vadd.f32 %v263, %v332
      %v357 = vadd.f32 %v264, %v335
      %v358 = vadd.f32 %v265, %v338
      %v359 = vadd.f32 %v266, %v341
      %v360 = vadd.f32 %v267, %v344
      %s361 = scalar_lea.vmem %s138, 8
      %v362 = vld [vmem:[%s361] sm:$0xf]
      %v363 = vld [vmem:[%s361 + $0x8] sm:$0xf]
      %v364 = vld [vmem:[%s361 + $0x10] sm:$0xf]
      %v365 = vld [vmem:[%s361 + $0x18] sm:$0xf]
      %v366 = vld [vmem:[%s361 + $0x20] sm:$0xf]
      %v367 = vld [vmem:[%s361 + $0x28] sm:$0xf]
      %v368 = vld [vmem:[%s361 + $0x30] sm:$0xf]
      %v369 = vld [vmem:[%s361 + $0x38] sm:$0xf]
      %v370 = vunpack.c.l.bf16 %v362
      %v371 = vunpack.c.l.bf16 %v363
      %v372 = vunpack.c.l.bf16 %v364
      %v373 = vunpack.c.l.bf16 %v365
      %v374 = vunpack.c.l.bf16 %v366
      %v375 = vunpack.c.l.bf16 %v367
      %v376 = vunpack.c.l.bf16 %v368
      %v377 = vunpack.c.l.bf16 %v369
      %v378 = vlaneseq
      %v379 = vshrl.u32 %v378, 7
      %v380 = vsub.s32 0, %v379
      %v381 = vrot.slane %v145, %v380
      %v382 = vmul.f32 %v370, %v381
      %v383 = vmul.f32 %v371, %v381
      %v384 = vmul.f32 %v372, %v381
      %v385 = vmul.f32 %v373, %v381
      %v386 = vmul.f32 %v374, %v381
      %v387 = vmul.f32 %v375, %v381
      %v388 = vmul.f32 %v376, %v381
      %v389 = vmul.f32 %v377, %v381
      %v390 = vadd.f32 %v353, %v382
      %v391 = vadd.f32 %v354, %v383
      %v392 = vadd.f32 %v355, %v384
      %v393 = vadd.f32 %v356, %v385
      %v394 = vadd.f32 %v357, %v386
      %v395 = vadd.f32 %v358, %v387
      %v396 = vadd.f32 %v359, %v388
      %v397 = vadd.f32 %v360, %v389
      %v398 = vld [vmem:[%s361 + $0x4] sm:$0x1]
      %v399 = vld [vmem:[%s361 + $0xc] sm:$0x1]
      %v400 = vld [vmem:[%s361 + $0x14] sm:$0x1]
      %v401 = vld [vmem:[%s361 + $0x1c] sm:$0x1]
      %v402 = vld [vmem:[%s361 + $0x24] sm:$0x1]
      %v403 = vld [vmem:[%s361 + $0x2c] sm:$0x1]
      %v404 = vld [vmem:[%s361 + $0x34] sm:$0x1]
      %v405 = vld [vmem:[%s361 + $0x3c] sm:$0x1]
      %v406 = vunpack.c.l.bf16 %v398
      %v407 = vunpack.c.l.bf16 %v399
      %v408 = vunpack.c.l.bf16 %v400
      %v409 = vunpack.c.l.bf16 %v401
      %v410 = vunpack.c.l.bf16 %v402
      %v411 = vunpack.c.l.bf16 %v403
      %v412 = vunpack.c.l.bf16 %v404
      %v413 = vunpack.c.l.bf16 %v405
      %v414 = vlaneseq
      %v415 = vshrl.u32 %v414, 7
      %v416 = vsub.s32 1, %v415
      %v417 = vrot.slane %v145, %v416
      %v418 = vmul.f32 %v370, %v417
      %v419 = vmul.f32 %v406, %v417
      %v420 = vmul.f32 %v371, %v417
      %v421 = vmul.f32 %v407, %v417
      %v422 = vmul.f32 %v372, %v417
      %v423 = vmul.f32 %v408, %v417
      %v424 = vmul.f32 %v373, %v417
      %v425 = vmul.f32 %v409, %v417
      %v426 = vmul.f32 %v374, %v417
      %v427 = vmul.f32 %v410, %v417
      %v428 = vmul.f32 %v375, %v417
      %v429 = vmul.f32 %v411, %v417
      %v430 = vmul.f32 %v376, %v417
      %v431 = vmul.f32 %v412, %v417
      %v432 = vmul.f32 %v377, %v417
      %v433 = vmul.f32 %v413, %v417
      %v450 = vrot.slane %v418, 1
      %v451 = vrot.slane %v419, 1
      %v452 = vsel %vm227, %v450, %v451
      %v453 = vrot.slane %v420, 1
      %v454 = vrot.slane %v421, 1
      %v455 = vsel %vm227, %v453, %v454
      %v456 = vrot.slane %v422, 1
      %v457 = vrot.slane %v423, 1
      %v458 = vsel %vm227, %v456, %v457
      %v459 = vrot.slane %v424, 1
      %v460 = vrot.slane %v425, 1
      %v461 = vsel %vm227, %v459, %v460
      %v462 = vrot.slane %v426, 1
      %v463 = vrot.slane %v427, 1
      %v464 = vsel %vm227, %v462, %v463
      %v465 = vrot.slane %v428, 1
      %v466 = vrot.slane %v429, 1
      %v467 = vsel %vm227, %v465, %v466
      %v468 = vrot.slane %v430, 1
      %v469 = vrot.slane %v431, 1
      %v470 = vsel %vm227, %v468, %v469
      %v471 = vrot.slane %v432, 1
      %v472 = vrot.slane %v433, 1
      %v473 = vsel %vm227, %v471, %v472
      %v482 = vadd.f32 %v390, %v452
      %v483 = vadd.f32 %v391, %v455
      %v484 = vadd.f32 %v392, %v458
      %v485 = vadd.f32 %v393, %v461
      %v486 = vadd.f32 %v394, %v464
      %v487 = vadd.f32 %v395, %v467
      %v488 = vadd.f32 %v396, %v470
      %v489 = vadd.f32 %v397, %v473
      %v490 = vld [vmem:[%s361] sm:$0xe]
      %v491 = vld [vmem:[%s361 + $0x8] sm:$0xe]
      %v492 = vld [vmem:[%s361 + $0x10] sm:$0xe]
      %v493 = vld [vmem:[%s361 + $0x18] sm:$0xe]
      %v494 = vld [vmem:[%s361 + $0x20] sm:$0xe]
      %v495 = vld [vmem:[%s361 + $0x28] sm:$0xe]
      %v496 = vld [vmem:[%s361 + $0x30] sm:$0xe]
      %v497 = vld [vmem:[%s361 + $0x38] sm:$0xe]
      %v498 = vunpack.c.l.bf16 %v490
      %v499 = vunpack.c.l.bf16 %v491
      %v500 = vunpack.c.l.bf16 %v492
      %v501 = vunpack.c.l.bf16 %v493
      %v502 = vunpack.c.l.bf16 %v494
      %v503 = vunpack.c.l.bf16 %v495
      %v504 = vunpack.c.l.bf16 %v496
      %v505 = vunpack.c.l.bf16 %v497
      %v506 = vlaneseq
      %v507 = vshrl.u32 %v506, 7
      %v508 = vsub.s32 2, %v507
      %v509 = vrot.slane %v145, %v508
      %v510 = vmul.f32 %v498, %v509
      %v511 = vmul.f32 %v406, %v509
      %v512 = vmul.f32 %v499, %v509
      %v513 = vmul.f32 %v407, %v509
      %v514 = vmul.f32 %v500, %v509
      %v515 = vmul.f32 %v408, %v509
      %v516 = vmul.f32 %v501, %v509
      %v517 = vmul.f32 %v409, %v509
      %v518 = vmul.f32 %v502, %v509
      %v519 = vmul.f32 %v410, %v509
      %v520 = vmul.f32 %v503, %v509
      %v521 = vmul.f32 %v411, %v509
      %v522 = vmul.f32 %v504, %v509
      %v523 = vmul.f32 %v412, %v509
      %v524 = vmul.f32 %v505, %v509
      %v525 = vmul.f32 %v413, %v509
      %v542 = vrot.slane %v510, 2
      %v543 = vrot.slane %v511, 2
      %v544 = vsel %vm320, %v542, %v543
      %v545 = vrot.slane %v512, 2
      %v546 = vrot.slane %v513, 2
      %v547 = vsel %vm320, %v545, %v546
      %v548 = vrot.slane %v514, 2
      %v549 = vrot.slane %v515, 2
      %v550 = vsel %vm320, %v548, %v549
      %v551 = vrot.slane %v516, 2
      %v552 = vrot.slane %v517, 2
      %v553 = vsel %vm320, %v551, %v552
      %v554 = vrot.slane %v518, 2
      %v555 = vrot.slane %v519, 2
      %v556 = vsel %vm320, %v554, %v555
      %v557 = vrot.slane %v520, 2
      %v558 = vrot.slane %v521, 2
      %v559 = vsel %vm320, %v557, %v558
      %v560 = vrot.slane %v522, 2
      %v561 = vrot.slane %v523, 2
      %v562 = vsel %vm320, %v560, %v561
      %v563 = vrot.slane %v524, 2
      %v564 = vrot.slane %v525, 2
      %v565 = vsel %vm320, %v563, %v564
      %v574 = vadd.f32 %v482, %v544
      %v575 = vadd.f32 %v483, %v547
      %v576 = vadd.f32 %v484, %v550
      %v577 = vadd.f32 %v485, %v553
      %v578 = vadd.f32 %v486, %v556
      %v579 = vadd.f32 %v487, %v559
      %v580 = vadd.f32 %v488, %v562
      %v581 = vadd.f32 %v489, %v565
      %s582 = scalar_lea.vmem %s138, 16
      %v583 = vld [vmem:[%s582] sm:$0xf]
      %v584 = vld [vmem:[%s582 + $0x8] sm:$0xf]
      %v585 = vld [vmem:[%s582 + $0x10] sm:$0xf]
      %v586 = vld [vmem:[%s582 + $0x18] sm:$0xf]
      %v587 = vld [vmem:[%s582 + $0x20] sm:$0xf]
      %v588 = vld [vmem:[%s582 + $0x28] sm:$0xf]
      %v589 = vld [vmem:[%s582 + $0x30] sm:$0xf]
      %v590 = vld [vmem:[%s582 + $0x38] sm:$0xf]
      %v591 = vunpack.c.l.bf16 %v583
      %v592 = vunpack.c.l.bf16 %v584
      %v593 = vunpack.c.l.bf16 %v585
      %v594 = vunpack.c.l.bf16 %v586
      %v595 = vunpack.c.l.bf16 %v587
      %v596 = vunpack.c.l.bf16 %v588
      %v597 = vunpack.c.l.bf16 %v589
      %v598 = vunpack.c.l.bf16 %v590
      %v599 = vlaneseq
      %v600 = vshrl.u32 %v599, 7
      %v601 = vsub.s32 0, %v600
      %v602 = vrot.slane %v146, %v601
      %v603 = vmul.f32 %v591, %v602
      %v604 = vmul.f32 %v592, %v602
      %v605 = vmul.f32 %v593, %v602
      %v606 = vmul.f32 %v594, %v602
      %v607 = vmul.f32 %v595, %v602
      %v608 = vmul.f32 %v596, %v602
      %v609 = vmul.f32 %v597, %v602
      %v610 = vmul.f32 %v598, %v602
      %v611 = vadd.f32 %v574, %v603
      %v612 = vadd.f32 %v575, %v604
      %v613 = vadd.f32 %v576, %v605
      %v614 = vadd.f32 %v577, %v606
      %v615 = vadd.f32 %v578, %v607
      %v616 = vadd.f32 %v579, %v608
      %v617 = vadd.f32 %v580, %v609
      %v618 = vadd.f32 %v581, %v610
      %v619 = vld [vmem:[%s582 + $0x4] sm:$0x1]
      %v620 = vld [vmem:[%s582 + $0xc] sm:$0x1]
      %v621 = vld [vmem:[%s582 + $0x14] sm:$0x1]
      %v622 = vld [vmem:[%s582 + $0x1c] sm:$0x1]
      %v623 = vld [vmem:[%s582 + $0x24] sm:$0x1]
      %v624 = vld [vmem:[%s582 + $0x2c] sm:$0x1]
      %v625 = vld [vmem:[%s582 + $0x34] sm:$0x1]
      %v626 = vld [vmem:[%s582 + $0x3c] sm:$0x1]
      %v627 = vunpack.c.l.bf16 %v619
      %v628 = vunpack.c.l.bf16 %v620
      %v629 = vunpack.c.l.bf16 %v621
      %v630 = vunpack.c.l.bf16 %v622
      %v631 = vunpack.c.l.bf16 %v623
      %v632 = vunpack.c.l.bf16 %v624
      %v633 = vunpack.c.l.bf16 %v625
      %v634 = vunpack.c.l.bf16 %v626
      %v635 = vlaneseq
      %v636 = vshrl.u32 %v635, 7
      %v637 = vsub.s32 1, %v636
      %v638 = vrot.slane %v146, %v637
      %v639 = vmul.f32 %v591, %v638
      %v640 = vmul.f32 %v627, %v638
      %v641 = vmul.f32 %v592, %v638
      %v642 = vmul.f32 %v628, %v638
      %v643 = vmul.f32 %v593, %v638
      %v644 = vmul.f32 %v629, %v638
      %v645 = vmul.f32 %v594, %v638
      %v646 = vmul.f32 %v630, %v638
      %v647 = vmul.f32 %v595, %v638
      %v648 = vmul.f32 %v631, %v638
      %v649 = vmul.f32 %v596, %v638
      %v650 = vmul.f32 %v632, %v638
      %v651 = vmul.f32 %v597, %v638
      %v652 = vmul.f32 %v633, %v638
      %v653 = vmul.f32 %v598, %v638
      %v654 = vmul.f32 %v634, %v638
      %v671 = vrot.slane %v639, 1
      %v672 = vrot.slane %v640, 1
      %v673 = vsel %vm227, %v671, %v672
      %v674 = vrot.slane %v641, 1
      %v675 = vrot.slane %v642, 1
      %v676 = vsel %vm227, %v674, %v675
      %v677 = vrot.slane %v643, 1
      %v678 = vrot.slane %v644, 1
      %v679 = vsel %vm227, %v677, %v678
      %v680 = vrot.slane %v645, 1
      %v681 = vrot.slane %v646, 1
      %v682 = vsel %vm227, %v680, %v681
      %v683 = vrot.slane %v647, 1
      %v684 = vrot.slane %v648, 1
      %v685 = vsel %vm227, %v683, %v684
      %v686 = vrot.slane %v649, 1
      %v687 = vrot.slane %v650, 1
      %v688 = vsel %vm227, %v686, %v687
      %v689 = vrot.slane %v651, 1
      %v690 = vrot.slane %v652, 1
      %v691 = vsel %vm227, %v689, %v690
      %v692 = vrot.slane %v653, 1
      %v693 = vrot.slane %v654, 1
      %v694 = vsel %vm227, %v692, %v693
      %v703 = vadd.f32 %v611, %v673
      %v704 = vadd.f32 %v612, %v676
      %v705 = vadd.f32 %v613, %v679
      %v706 = vadd.f32 %v614, %v682
      %v707 = vadd.f32 %v615, %v685
      %v708 = vadd.f32 %v616, %v688
      %v709 = vadd.f32 %v617, %v691
      %v710 = vadd.f32 %v618, %v694
      %v711 = vld [vmem:[%s582] sm:$0xe]
      %v712 = vld [vmem:[%s582 + $0x8] sm:$0xe]
      %v713 = vld [vmem:[%s582 + $0x10] sm:$0xe]
      %v714 = vld [vmem:[%s582 + $0x18] sm:$0xe]
      %v715 = vld [vmem:[%s582 + $0x20] sm:$0xe]
      %v716 = vld [vmem:[%s582 + $0x28] sm:$0xe]
      %v717 = vld [vmem:[%s582 + $0x30] sm:$0xe]
      %v718 = vld [vmem:[%s582 + $0x38] sm:$0xe]
      %v719 = vunpack.c.l.bf16 %v711
      %v720 = vunpack.c.l.bf16 %v712
      %v721 = vunpack.c.l.bf16 %v713
      %v722 = vunpack.c.l.bf16 %v714
      %v723 = vunpack.c.l.bf16 %v715
      %v724 = vunpack.c.l.bf16 %v716
      %v725 = vunpack.c.l.bf16 %v717
      %v726 = vunpack.c.l.bf16 %v718
      %v727 = vlaneseq
      %v728 = vshrl.u32 %v727, 7
      %v729 = vsub.s32 2, %v728
      %v730 = vrot.slane %v146, %v729
      %v731 = vmul.f32 %v719, %v730
      %v732 = vmul.f32 %v627, %v730
      %v733 = vmul.f32 %v720, %v730
      %v734 = vmul.f32 %v628, %v730
      %v735 = vmul.f32 %v721, %v730
      %v736 = vmul.f32 %v629, %v730
      %v737 = vmul.f32 %v722, %v730
      %v738 = vmul.f32 %v630, %v730
      %v739 = vmul.f32 %v723, %v730
      %v740 = vmul.f32 %v631, %v730
      %v741 = vmul.f32 %v724, %v730
      %v742 = vmul.f32 %v632, %v730
      %v743 = vmul.f32 %v725, %v730
      %v744 = vmul.f32 %v633, %v730
      %v745 = vmul.f32 %v726, %v730
      %v746 = vmul.f32 %v634, %v730
      %v763 = vrot.slane %v731, 2
      %v764 = vrot.slane %v732, 2
      %v765 = vsel %vm320, %v763, %v764
      %v766 = vrot.slane %v733, 2
      %v767 = vrot.slane %v734, 2
      %v768 = vsel %vm320, %v766, %v767
      %v769 = vrot.slane %v735, 2
      %v770 = vrot.slane %v736, 2
      %v771 = vsel %vm320, %v769, %v770
      %v772 = vrot.slane %v737, 2
      %v773 = vrot.slane %v738, 2
      %v774 = vsel %vm320, %v772, %v773
      %v775 = vrot.slane %v739, 2
      %v776 = vrot.slane %v740, 2
      %v777 = vsel %vm320, %v775, %v776
      %v778 = vrot.slane %v741, 2
      %v779 = vrot.slane %v742, 2
      %v780 = vsel %vm320, %v778, %v779
      %v781 = vrot.slane %v743, 2
      %v782 = vrot.slane %v744, 2
      %v783 = vsel %vm320, %v781, %v782
      %v784 = vrot.slane %v745, 2
      %v785 = vrot.slane %v746, 2
      %v786 = vsel %vm320, %v784, %v785
      %v795 = vadd.f32 %v703, %v765
      %v796 = vadd.f32 %v704, %v768
      %v797 = vadd.f32 %v705, %v771
      %v798 = vadd.f32 %v706, %v774
      %v799 = vadd.f32 %v707, %v777
      %v800 = vadd.f32 %v708, %v780
      %v801 = vadd.f32 %v709, %v783
      %v802 = vadd.f32 %v710, %v786
      %v803 = vmax.f32 %v795, 0.0
      %v804 = vmax.f32 %v796, 0.0
      %v805 = vmax.f32 %v797, 0.0
      %v806 = vmax.f32 %v798, 0.0
      %v807 = vmax.f32 %v799, 0.0
      %v808 = vmax.f32 %v800, 0.0
      %v809 = vmax.f32 %v801, 0.0
      %v810 = vmax.f32 %v802, 0.0
      %v811 = vpack.c.bf16 %v803, %v803
      %v812 = vpack.c.bf16 %v804, %v804
      %v813 = vpack.c.bf16 %v805, %v805
      %v814 = vpack.c.bf16 %v806, %v806
      %v815 = vpack.c.bf16 %v807, %v807
      %v816 = vpack.c.bf16 %v808, %v808
      %v817 = vpack.c.bf16 %v809, %v809
      %v818 = vpack.c.bf16 %v810, %v810
      %vm819 = vcmask 60416
      %820 = vst.msk [vmem:[%s143] sm:$0xf] %vm819, %v811
      %821 = vst.msk [vmem:[%s143 + $0x4] sm:$0xf] %vm819, %v812
      %822 = vst.msk [vmem:[%s143 + $0x8] sm:$0xf] %vm819, %v813
      %823 = vst.msk [vmem:[%s143 + $0xc] sm:$0xf] %vm819, %v814
      %824 = vst.msk [vmem:[%s143 + $0x10] sm:$0xf] %vm819, %v815
      %825 = vst.msk [vmem:[%s143 + $0x14] sm:$0xf] %vm819, %v816
      %826 = vst.msk [vmem:[%s143 + $0x18] sm:$0xf] %vm819, %v817
      %827 = vst.msk [vmem:[%s143 + $0x1c] sm:$0xf] %vm819, %v818
      %p828 = scmp.lt.s32.totalorder %s13, 1
      %s829 = scalar_select %p828, %s13, 1
      %s830 = smul.addr %s829, 8
      %s831 = smul.addr %s830, 4
      %s832 = scalar_lea.vmem %s2, %s831
      // Predicated region
      $region29: #{pcq_mobilenet_forward.17} parent=27 // pred_check
        %p833 = pneg %p78
      $region30: #{pcq_mobilenet_forward.17} parent=27 // pred_check_branch
        %835 = sbr.rel (%p833) target = $region32
      $region31: #{pcq_mobilenet_forward.17} parent=27 // pred_region
        _
      $region32: #{pcq_mobilenet_forward.17} parent=27 // pred_fallthru
        _
    $region28: #{pcq_mobilenet_forward.17} parent=5 // pred_fallthru
      _
    %p836 = scmp.le.s32.totalorder 2, %s8
    // Predicated region
    $region33: #{pcq_mobilenet_forward.17} parent=5 // pred_check
      %p837 = pneg %p836
    $region34: #{pcq_mobilenet_forward.17} parent=5 // pred_check_branch
      %839 = sbr.rel (%p837) target = $region36
    $region35: #{pcq_mobilenet_forward.17} parent=5 // pred_region
      %s840 = ssub.s32 %s8, 2
      // Predicated region
      $region37: #{pcq_mobilenet_forward.17} parent=35 // pred_check
        %p841 = pneg %p84
      $region38: #{pcq_mobilenet_forward.17} parent=35 // pred_check_branch
        %843 = sbr.rel (%p841) target = $region40
      $region39: #{pcq_mobilenet_forward.17} parent=35 // pred_region
        %p844 = scmp.lt.s32.totalorder %s14, 1
        %s845 = scalar_select %p844, %s14, 1
        %s846 = smul.addr %s845, 8
        %s847 = smul.addr %s846, 4
        %s848 = scalar_lea.vmem %s2, %s847
      $region40: #{pcq_mobilenet_forward.17} parent=35 // pred_fallthru
        _
    $region36: #{pcq_mobilenet_forward.17} parent=5 // pred_fallthru
      _
  $region6: #{pcq_mobilenet_forward.17} parent=0 // loop_footer
    %s12 = sadd.s32 1, %s8
  $region7: #{pcq_mobilenet_forward.17} parent=0 // loop_footer_branch
    %7 = sbr.rel target = $region3
  $region8: #{pcq_mobilenet_forward.17} parent=0 // loop_exit
    _

// kernel: pcq_mobilenet_forward.20
$region0: #{pcq_mobilenet_forward.20}
  #allocation0 [shape = 'u32[]', space=smem, size = 0x4, offset = 0x4, fixed_abs, tag = 'smem constant byte address 0x4 - core index']
  #allocation1 [shape = 'u32[144,128]{1,0:T(1,128)}', space=vmem, size = 0x12000, scoped, tag = 'internal scratch']
  #allocation2 [shape = 'f32[8,128]{1,0:T(8,128)}', space=vmem, size = 0x1000, scoped, tag = 'scratch operand']
  %s0 = inlined_call_operand.vmem [shape: bf16[1,8,128], index: 0, kind: input, shape index: {}]
  %s1 = inlined_call_operand.vmem [shape: bf16[128,128], index: 1, kind: input, shape index: {}]
  %s2 = inlined_call_operand.vmem [shape: f32[1,128], index: 2, kind: input, shape index: {}]
  %s3 = inlined_call_operand.vmem [shape: f32[1,8,128], index: 3, kind: output, shape index: {}]
  %s4 = sld [smem:[#allocation0]]
  $region30: #{pcq_mobilenet_forward.20} parent=0
    _
  %s6 = ssub.s32 1, %s4
  %s7 = scalar_select 0, %s6, %s4
  // Predicated region
  $region2: #{pcq_mobilenet_forward.20} parent=0 // pred_check
    _
  $region3: #{pcq_mobilenet_forward.20} parent=0 // pred_check_branch
    %9 = sbr.rel (0) target = $region5
  $region4: #{pcq_mobilenet_forward.20} parent=0 // pred_region
    _
  $region5: #{pcq_mobilenet_forward.20} parent=0 // pred_fallthru
    _
  // Predicated region
  $region6: #{pcq_mobilenet_forward.20} parent=0 // pred_check
    _
  $region7: #{pcq_mobilenet_forward.20} parent=0 // pred_check_branch
    %11 = sbr.rel (0) target = $region9
  $region8: #{pcq_mobilenet_forward.20} parent=0 // pred_region
    _
  $region9: #{pcq_mobilenet_forward.20} parent=0 // pred_fallthru
    _
  // Predicated region
  $region10: #{pcq_mobilenet_forward.20} parent=0 // pred_check
    _
  $region11: #{pcq_mobilenet_forward.20} parent=0 // pred_check_branch
    %13 = sbr.rel (0) target = $region13
  $region12: #{pcq_mobilenet_forward.20} parent=0 // pred_region
    _
  $region13: #{pcq_mobilenet_forward.20} parent=0 // pred_fallthru
    _
  %p15 = scmp.eq.s32.totalorder 0, 0
  // Predicated region
  $region14: #{pcq_mobilenet_forward.20} parent=0 // pred_check
    %p16 = pneg %p15
  $region15: #{pcq_mobilenet_forward.20} parent=0 // pred_check_branch
    %18 = sbr.rel (%p16) target = $region17
  $region16: #{pcq_mobilenet_forward.20} parent=0 // pred_region
    %19 = vst [vmem:[#allocation2] sm:$0xff] 0.0
  $region17: #{pcq_mobilenet_forward.20} parent=0 // pred_fallthru
    _
  %v20 = vld [vmem:[%s0] sm:$0xf]
  %v21 = vld [vmem:[#allocation2] sm:$0xff]
  %v22 = vld [vmem:[%s1] sm:$0xf]
  %v23 = vld [vmem:[%s1 + $0x4] sm:$0xf]
  %v24 = vld [vmem:[%s1 + $0x8] sm:$0xf]
  %v25 = vld [vmem:[%s1 + $0xc] sm:$0xf]
  %v26 = vld [vmem:[%s1 + $0x10] sm:$0xf]
  %v27 = vld [vmem:[%s1 + $0x14] sm:$0xf]
  %v28 = vld [vmem:[%s1 + $0x18] sm:$0xf]
  %v29 = vld [vmem:[%s1 + $0x1c] sm:$0xf]
  %v30 = vld [vmem:[%s1 + $0x20] sm:$0xf]
  %v31 = vld [vmem:[%s1 + $0x24] sm:$0xf]
  %v32 = vld [vmem:[%s1 + $0x28] sm:$0xf]
  %v33 = vld [vmem:[%s1 + $0x2c] sm:$0xf]
  %v34 = vld [vmem:[%s1 + $0x30] sm:$0xf]
  %v35 = vld [vmem:[%s1 + $0x34] sm:$0xf]
  %v36 = vld [vmem:[%s1 + $0x38] sm:$0xf]
  %v37 = vld [vmem:[%s1 + $0x3c] sm:$0xf]
  %v54 = vunpack.c.l.b16 %v22
  %v55 = vunpack.c.l.b16 %v23
  %v56 = vunpack.c.l.b16 %v24
  %v57 = vunpack.c.l.b16 %v25
  %v58 = vunpack.c.l.b16 %v26
  %v59 = vunpack.c.l.b16 %v27
  %v60 = vunpack.c.l.b16 %v28
  %v61 = vunpack.c.l.b16 %v29
  %v62 = vunpack.c.l.b16 %v30
  %v63 = vunpack.c.l.b16 %v31
  %v64 = vunpack.c.l.b16 %v32
  %v65 = vunpack.c.l.b16 %v33
  %v66 = vunpack.c.l.b16 %v34
  %v67 = vunpack.c.l.b16 %v35
  %v68 = vunpack.c.l.b16 %v36
  %v69 = vunpack.c.l.b16 %v37
  %v70 = vpack.c.b16 %v55, %v54
  %v71 = vpack.c.b16 %v57, %v56
  %v72 = vpack.c.b16 %v59, %v58
  %v73 = vpack.c.b16 %v61, %v60
  %v74 = vpack.c.b16 %v63, %v62
  %v75 = vpack.c.b16 %v65, %v64
  %v76 = vpack.c.b16 %v67, %v66
  %v77 = vpack.c.b16 %v69, %v68
  %86 = vmatprep.subr.bf16.mxu0 0
  %87 = vmatpush1.bf16.msra.mxu0 %v70
  %88 = vmatprep.subr.bf16.mxu0 0
  %89 = vmatpush1.bf16.msra.mxu0 %v71
  %90 = vmatprep.subr.bf16.mxu0 0
  %91 = vmatpush1.bf16.msra.mxu0 %v72
  %92 = vmatprep.subr.bf16.mxu0 0
  %93 = vmatpush1.bf16.msra.mxu0 %v73
  %94 = vmatprep.subr.bf16.mxu0 0
  %95 = vmatpush1.bf16.msra.mxu0 %v74
  %96 = vmatprep.subr.bf16.mxu0 0
  %97 = vmatpush1.bf16.msra.mxu0 %v75
  %98 = vmatprep.subr.bf16.mxu0 0
  %99 = vmatpush1.bf16.msra.mxu0 %v76
  %100 = vmatprep.subr.bf16.mxu0 0
  %101 = vmatpush1.bf16.msra.mxu0 %v77
  %102 = vmatprep.subr.bf16.mxu0 0
  %103 = vmatpush1.bf16.msra.mxu0 0
  %104 = vmatprep.subr.bf16.mxu0 0
  %105 = vmatpush1.bf16.msra.mxu0 0
  %106 = vmatprep.subr.bf16.mxu0 0
  %107 = vmatpush1.bf16.msra.mxu0 0
  %108 = vmatprep.subr.bf16.mxu0 0
  %109 = vmatpush1.bf16.msra.mxu0 0
  %110 = vmatprep.subr.bf16.mxu0 0
  %111 = vmatpush1.bf16.msra.mxu0 0
  %112 = vmatprep.subr.bf16.mxu0 0
  %113 = vmatpush1.bf16.msra.mxu0 0
  %114 = vmatprep.subr.bf16.mxu0 0
  %115 = vmatpush1.bf16.msra.mxu0 0
  %116 = vmatprep.subr.bf16.mxu0 0
  %117 = vmatpush1.bf16.msra.mxu0 0
  %118 = vmatprep.mubr.bf16.mxu0 0
  %119 = vmatmul.mubr.bf16.gmra.mrb[0].mxu0 %v20
  %v120 = vpop.f32.mrb[0].mxu0
  %v121 = vadd.f32 0.0, %v120
  %v122 = vpop.f32.mrb[0].mxu0
  %v123 = vpop.f32.mrb[0].mxu0
  %v124 = vpop.f32.mrb[0].mxu0
  %125 = vdwg.mxu0
  %v126 = vadd.f32 %v21, %v121
  %127 = vst [vmem:[#allocation2] sm:$0xff] %v126
  // Predicated region
  $region18: #{pcq_mobilenet_forward.20} parent=0 // pred_check
    %p128 = pneg %p15
  $region19: #{pcq_mobilenet_forward.20} parent=0 // pred_check_branch
    %130 = sbr.rel (%p128) target = $region21
  $region20: #{pcq_mobilenet_forward.20} parent=0 // pred_region
    %v131 = vld [vmem:[#allocation2] sm:$0xff]
    %v132 = vld [vmem:[%s2] sm:$0x1]
    %v134 = vlaneseq
    %v135 = vshrl.u32 %v134, 7
    %v136 = vsub.s32 0, %v135
    %v137 = vrot.slane %v132, %v136
    %v139 = vadd.f32 %v131, %v137
    %v140 = vadd.f32 %v139, 3.0
    %v141 = vmax.f32 %v140, 0.0
    %v142 = vmin.f32 %v141, 6.0
    %v143 = vmul.f32 %v142, 0.16666667
    %144 = vst [vmem:[%s3] sm:$0xff] %v143
  $region21: #{pcq_mobilenet_forward.20} parent=0 // pred_fallthru
    _
  // Predicated region
  $region22: #{pcq_mobilenet_forward.20} parent=0 // pred_check
    _
  $region23: #{pcq_mobilenet_forward.20} parent=0 // pred_check_branch
    %146 = sbr.rel (0) target = $region25
  $region24: #{pcq_mobilenet_forward.20} parent=0 // pred_region
    _
  $region25: #{pcq_mobilenet_forward.20} parent=0 // pred_fallthru
    _
  // Predicated region
  $region26: #{pcq_mobilenet_forward.20} parent=0 // pred_check
    _
  $region27: #{pcq_mobilenet_forward.20} parent=0 // pred_check_branch
    %148 = sbr.rel (0) target = $region29
  $region28: #{pcq_mobilenet_forward.20} parent=0 // pred_region
    _
  $region29: #{pcq_mobilenet_forward.20} parent=0 // pred_fallthru
    _

// kernel: pcq_mobilenet_forward.21
$region0: #{pcq_mobilenet_forward.21}
  #allocation0 [shape = 'u32[]', space=smem, size = 0x4, offset = 0x4, fixed_abs, tag = 'smem constant byte address 0x4 - core index']
  #allocation1 [shape = 'u32[144,128]{1,0:T(1,128)}', space=vmem, size = 0x12000, scoped, tag = 'internal scratch']
  #allocation2 [shape = 'f32[64,128]{1,0:T(8,128)}', space=vmem, size = 0x8000, scoped, tag = 'scratch operand']
  %s0 = inlined_call_operand.vmem [shape: bf16[2,64,128], index: 0, kind: input, shape index: {}]
  %s1 = inlined_call_operand.vmem [shape: bf16[128,128], index: 1, kind: input, shape index: {}]
  %s2 = inlined_call_operand.vmem [shape: f32[2,1,128], index: 2, kind: input, shape index: {}]
  %s3 = inlined_call_operand.vmem [shape: bf16[2,64,128], index: 3, kind: input, shape index: {}]
  %s4 = inlined_call_operand.vmem [shape: bf16[2,64,128], index: 4, kind: output, shape index: {}]
  %s5 = sld [smem:[#allocation0]]
  $region57: #{pcq_mobilenet_forward.21} parent=0
    _
  %s7 = ssub.s32 1, %s5
  %s8 = scalar_select 0, %s7, %s5
  loop: start=0, step=1, limit=4
  $region2: #{pcq_mobilenet_forward.21} parent=0 // loop_pre_header
    _
  $region3: #{pcq_mobilenet_forward.21} parent=0 // loop_header
    %s10 = sphi 0, %s14
    %p11 = scmp.ge.s32.totalorder %s10, 4
    %s17 = sphi 0, %s43
    %s18 = sphi 0, %s39
    %s19 = sphi 0, %s35
    %s20 = sphi 0, %s31
    %s21 = sphi 0, %s17
    %s22 = sphi 0, %s18
    %s23 = sphi 0, %s19
    %s24 = sphi 0, %s20
    %s25 = sphi 0, %s21
    %s26 = sphi 0, %s22
    %s27 = sphi 0, %s23
    %s28 = sphi 0, %s24
    %s50 = sphi 0, %s52
    %s53 = sphi 0, %s50
    %s54 = sphi 0, %s53
    %s70 = sphi 0, %s54
    %s78 = sphi 0, %s80
    %s81 = sphi 0, %s78
    %s82 = sphi 0, %s81
    %s98 = sphi 0, %s82
    %s106 = sphi 0, %s108
    %s109 = sphi 0, %s106
    %s110 = sphi 0, %s109
    %s126 = sphi 0, %s110
    %s136 = sphi 0, %s138
    %s139 = sphi 0, %s136
    %s140 = sphi 0, %s139
    %s156 = sphi 0, %s140
    %s166 = sphi 0, %s168
    %s169 = sphi 0, %s166
    %s170 = sphi 0, %s169
    %s186 = sphi 0, %s170
  $region4: #{pcq_mobilenet_forward.21} parent=0 // loop_header_branch
    %13 = sbr.rel (%p11) target = $region8
  $region5: #{pcq_mobilenet_forward.21} parent=0 // loop_body
    %s15 = ssub.s32 %s10, 1
    %s16 = ssub.s32 %s10, 2
    %s29 = sadd.s32 1, %s20
    %p30 = scmp.ge.s32.totalorder %s29, 1
    %s31 = scalar_select %p30, 0, %s29
    %s32 = sadd.s32 1, %s19
    %s33 = scalar_select %p30, %s32, %s19
    %p34 = scmp.ge.s32.totalorder %s33, 1
    %s35 = scalar_select %p34, 0, %s33
    %s36 = sadd.s32 1, %s18
    %s37 = scalar_select %p34, %s36, %s18
    %p38 = scmp.ge.s32.totalorder %s37, 1
    %s39 = scalar_select %p38, 0, %s37
    %s40 = sadd.s32 1, %s17
    %s41 = scalar_select %p38, %s40, %s17
    %p42 = scmp.ge.s32.totalorder %s41, 2
    %s43 = scalar_select %p42, 0, %s41
    %s44 = ssub.s32 %s17, %s43
    %s45 = ssub.s32 %s18, %s39
    %s46 = sor.u32 %s44, %s45
    %s47 = ssub.s32 %s20, %s31
    %s48 = sor.u32 %s46, %s47
    %p49 = scmp.eq.s32.totalorder %s48, 0
    %s51 = sadd.s32 %s50, 1
    %s52 = scalar_select %p49, %s50, %s51
    %p55 = pneg %p49
    %p56 = scmp.eq.s32.totalorder %s10, 1
    %p57 = por %p55, %p56
    %p58 = scmp.ne.s32.totalorder %s50, %s53
    %p59 = scmp.eq.s32.totalorder %s10, 0
    %p60 = por %p58, %p59
    %p61 = scmp.ne.s32.totalorder %s50, %s53
    %p62 = scmp.eq.s32.totalorder %s15, 1
    %p63 = por %p61, %p62
    %p64 = scmp.ne.s32.totalorder %s53, %s54
    %p65 = scmp.eq.s32.totalorder %s15, 0
    %p66 = por %p64, %p65
    %p67 = scmp.ne.s32.totalorder %s53, %s54
    %p68 = scmp.eq.s32.totalorder %s16, 1
    %p69 = por %p67, %p68
    %p71 = scmp.ne.s32.totalorder %s54, %s70
    %p72 = scmp.eq.s32.totalorder %s16, 0
    %p73 = por %p71, %p72
    %s74 = ssub.s32 %s20, %s31
    %s75 = ssub.s32 %s19, %s35
    %s76 = sor.u32 %s74, %s75
    %p77 = scmp.eq.s32.totalorder %s76, 0
    %s79 = sadd.s32 %s78, 1
    %s80 = scalar_select %p77, %s78, %s79
    %p83 = pneg %p77
    %p84 = scmp.eq.s32.totalorder %s10, 1
    %p85 = por %p83, %p84
    %p86 = scmp.ne.s32.totalorder %s78, %s81
    %p87 = scmp.eq.s32.totalorder %s10, 0
    %p88 = por %p86, %p87
    %p89 = scmp.ne.s32.totalorder %s78, %s81
    %p90 = scmp.eq.s32.totalorder %s15, 1
    %p91 = por %p89, %p90
    %p92 = scmp.ne.s32.totalorder %s81, %s82
    %p93 = scmp.eq.s32.totalorder %s15, 0
    %p94 = por %p92, %p93
    %p95 = scmp.ne.s32.totalorder %s81, %s82
    %p96 = scmp.eq.s32.totalorder %s16, 1
    %p97 = por %p95, %p96
    %p99 = scmp.ne.s32.totalorder %s82, %s98
    %p100 = scmp.eq.s32.totalorder %s16, 0
    %p101 = por %p99, %p100
    %s102 = ssub.s32 %s17, %s43
    %s103 = ssub.s32 %s20, %s31
    %s104 = sor.u32 %s102, %s103
    %p105 = scmp.eq.s32.totalorder %s104, 0
    %s107 = sadd.s32 %s106, 1
    %s108 = scalar_select %p105, %s106, %s107
    %p111 = pneg %p105
    %p112 = scmp.eq.s32.totalorder %s10, 1
    %p113 = por %p111, %p112
    %p114 = scmp.ne.s32.totalorder %s106, %s109
    %p115 = scmp.eq.s32.totalorder %s10, 0
    %p116 = por %p114, %p115
    %p117 = scmp.ne.s32.totalorder %s106, %s109
    %p118 = scmp.eq.s32.totalorder %s15, 1
    %p119 = por %p117, %p118
    %p120 = scmp.ne.s32.totalorder %s109, %s110
    %p121 = scmp.eq.s32.totalorder %s15, 0
    %p122 = por %p120, %p121
    %p123 = scmp.ne.s32.totalorder %s109, %s110
    %p124 = scmp.eq.s32.totalorder %s16, 1
    %p125 = por %p123, %p124
    %p127 = scmp.ne.s32.totalorder %s110, %s126
    %p128 = scmp.eq.s32.totalorder %s16, 0
    %p129 = por %p127, %p128
    %s130 = ssub.s32 %s17, %s43
    %s131 = ssub.s32 %s18, %s39
    %s132 = sor.u32 %s130, %s131
    %s133 = ssub.s32 %s19, %s35
    %s134 = sor.u32 %s132, %s133
    %p135 = scmp.eq.s32.totalorder %s134, 0
    %s137 = sadd.s32 %s136, 1
    %s138 = scalar_select %p135, %s136, %s137
    %p141 = pneg %p135
    %p142 = scmp.eq.s32.totalorder %s10, 1
    %p143 = por %p141, %p142
    %p144 = scmp.ne.s32.totalorder %s136, %s139
    %p145 = scmp.eq.s32.totalorder %s10, 0
    %p146 = por %p144, %p145
    %p147 = scmp.ne.s32.totalorder %s136, %s139
    %p148 = scmp.eq.s32.totalorder %s15, 1
    %p149 = por %p147, %p148
    %p150 = scmp.ne.s32.totalorder %s139, %s140
    %p151 = scmp.eq.s32.totalorder %s15, 0
    %p152 = por %p150, %p151
    %p153 = scmp.ne.s32.totalorder %s139, %s140
    %p154 = scmp.eq.s32.totalorder %s16, 1
    %p155 = por %p153, %p154
    %p157 = scmp.ne.s32.totalorder %s140, %s156
    %p158 = scmp.eq.s32.totalorder %s16, 0
    %p159 = por %p157, %p158
    %s160 = ssub.s32 %s17, %s43
    %s161 = ssub.s32 %s18, %s39
    %s162 = sor.u32 %s160, %s161
    %s163 = ssub.s32 %s19, %s35
    %s164 = sor.u32 %s162, %s163
    %p165 = scmp.eq.s32.totalorder %s164, 0
    %s167 = sadd.s32 %s166, 1
    %s168 = scalar_select %p165, %s166, %s167
    %p171 = pneg %p165
    %p172 = scmp.eq.s32.totalorder %s10, 1
    %p173 = por %p171, %p172
    %p174 = scmp.ne.s32.totalorder %s166, %s169
    %p175 = scmp.eq.s32.totalorder %s10, 0
    %p176 = por %p174, %p175
    %p177 = scmp.ne.s32.totalorder %s166, %s169
    %p178 = scmp.eq.s32.totalorder %s15, 1
    %p179 = por %p177, %p178
    %p180 = scmp.ne.s32.totalorder %s169, %s170
    %p181 = scmp.eq.s32.totalorder %s15, 0
    %p182 = por %p180, %p181
    %p183 = scmp.ne.s32.totalorder %s169, %s170
    %p184 = scmp.eq.s32.totalorder %s16, 1
    %p185 = por %p183, %p184
    %p187 = scmp.ne.s32.totalorder %s170, %s186
    %p188 = scmp.eq.s32.totalorder %s16, 0
    %p189 = por %p187, %p188
    %p190 = scmp.le.s32.totalorder 1, %s10
    %p191 = scmp.lt.s32.totalorder %s10, 3
    %p192 = pnand %p190, %p191
    %p193 = pneg %p192
    // Predicated region
    $region9: #{pcq_mobilenet_forward.21} parent=5 // pred_check
      _
    $region10: #{pcq_mobilenet_forward.21} parent=5 // pred_check_branch
      %195 = sbr.rel (%p192) target = $region12
    $region11: #{pcq_mobilenet_forward.21} parent=5 // pred_region
      %s196 = ssub.s32 %s10, 1
      // Predicated region
      $region13: #{pcq_mobilenet_forward.21} parent=11 // pred_check
        %p197 = pneg %p94
      $region14: #{pcq_mobilenet_forward.21} parent=11 // pred_check_branch
        %199 = sbr.rel (%p197) target = $region16
      $region15: #{pcq_mobilenet_forward.21} parent=11 // pred_region
        %s200 = smul.u32 16, %s24
        %p201 = scmp.lt.s32.totalorder %s200, 15
        %s202 = scalar_select %p201, %s200, 15
        %p203 = scmp.lt.s32.totalorder %s23, 0
        %s204 = scalar_select %p203, %s23, 0
        %s205 = sadd.s32 %s204, %s202
        %s206 = smul.addr %s205, 4
        %s207 = scalar_lea.vmem %s1, %s206
        %s208 = smul.u32 16, %s24
      $region16: #{pcq_mobilenet_forward.21} parent=11 // pred_fallthru
        _
    $region12: #{pcq_mobilenet_forward.21} parent=5 // pred_fallthru
      _
    %p209 = scmp.lt.s32.totalorder %s10, 2
    // Predicated region
    $region17: #{pcq_mobilenet_forward.21} parent=5 // pred_check
      %p210 = pneg %p209
    $region18: #{pcq_mobilenet_forward.21} parent=5 // pred_check_branch
      %212 = sbr.rel (%p210) target = $region20
    $region19: #{pcq_mobilenet_forward.21} parent=5 // pred_region
      // Predicated region
      $region21: #{pcq_mobilenet_forward.21} parent=19 // pred_check
        %p213 = pneg %p60
      $region22: #{pcq_mobilenet_forward.21} parent=19 // pred_check_branch
        %215 = sbr.rel (%p213) target = $region24
      $region23: #{pcq_mobilenet_forward.21} parent=19 // pred_region
        %s216 = smul.u32 8, %s18
        %p217 = scmp.lt.s32.totalorder %s17, 1
        %s218 = scalar_select %p217, %s17, 1
        %p219 = scmp.lt.s32.totalorder %s216, 7
        %s220 = scalar_select %p219, %s216, 7
        %p221 = scmp.lt.s32.totalorder %s20, 0
        %s222 = scalar_select %p221, %s20, 0
        %s223 = sadd.s32 %s222, %s220
        %s224 = smul.addr %s218, 8
        %s225 = sadd.s32 %s223, %s224
        %s226 = smul.addr %s225, 4
        %s227 = scalar_lea.vmem %s0, %s226
        %s228 = smul.u32 8, %s18
      $region24: #{pcq_mobilenet_forward.21} parent=19 // pred_fallthru
        _
      // Predicated region
      $region25: #{pcq_mobilenet_forward.21} parent=19 // pred_check
        %p229 = pneg %p116
      $region26: #{pcq_mobilenet_forward.21} parent=19 // pred_check_branch
        %231 = sbr.rel (%p229) target = $region28
      $region27: #{pcq_mobilenet_forward.21} parent=19 // pred_region
        %p232 = scmp.lt.s32.totalorder %s17, 1
        %s233 = scalar_select %p232, %s17, 1
        %p234 = scmp.lt.s32.totalorder %s20, 0
        %s235 = scalar_select %p234, %s20, 0
        %s236 = sadd.s32 %s235, %s233
        %s237 = scalar_lea.vmem %s2, %s236
      $region28: #{pcq_mobilenet_forward.21} parent=19 // pred_fallthru
        _
      // Predicated region
      $region29: #{pcq_mobilenet_forward.21} parent=19 // pred_check
        %p238 = pneg %p146
      $region30: #{pcq_mobilenet_forward.21} parent=19 // pred_check_branch
        %240 = sbr.rel (%p238) target = $region32
      $region31: #{pcq_mobilenet_forward.21} parent=19 // pred_region
        %s241 = smul.u32 8, %s18
        %p242 = scmp.lt.s32.totalorder %s17, 1
        %s243 = scalar_select %p242, %s17, 1
        %p244 = scmp.lt.s32.totalorder %s241, 7
        %s245 = scalar_select %p244, %s241, 7
        %p246 = scmp.lt.s32.totalorder %s19, 0
        %s247 = scalar_select %p246, %s19, 0
        %s248 = sadd.s32 %s247, %s245
        %s249 = smul.addr %s243, 8
        %s250 = sadd.s32 %s248, %s249
        %s251 = smul.addr %s250, 4
        %s252 = scalar_lea.vmem %s3, %s251
        %s253 = smul.u32 8, %s18
      $region32: #{pcq_mobilenet_forward.21} parent=19 // pred_fallthru
        _
    $region20: #{pcq_mobilenet_forward.21} parent=5 // pred_fallthru
      _
    %p254 = scmp.le.s32.totalorder 1, %s10
    %p255 = scmp.lt.s32.totalorder %s10, 3
    %p256 = pnand %p254, %p255
    %p257 = pneg %p256
    // Predicated region
    $region33: #{pcq_mobilenet_forward.21} parent=5 // pred_check
      _
    $region34: #{pcq_mobilenet_forward.21} parent=5 // pred_check_branch
      %259 = sbr.rel (%p256) target = $region36
    $region35: #{pcq_mobilenet_forward.21} parent=5 // pred_region
      %s260 = ssub.s32 %s10, 1
      %s261 = smul.u32 8, %s22
      %p262 = scmp.lt.s32.totalorder %s21, 1
      %s263 = scalar_select %p262, %s21, 1
      %p264 = scmp.lt.s32.totalorder %s261, 7
      %s265 = scalar_select %p264, %s261, 7
      %p266 = scmp.lt.s32.totalorder %s24, 0
      %s267 = scalar_select %p266, %s24, 0
      %s268 = sadd.s32 %s267, %s265
      %s269 = smul.addr %s263, 8
      %s270 = sadd.s32 %s268, %s269
      %s271 = smul.addr %s270, 4
      %s272 = scalar_lea.vmem %s0, %s271
      %p273 = pneg %p66
      %p274 = pneg %p63
      %s275 = smul.u32 16, %s24
      %p276 = scmp.lt.s32.totalorder %s275, 15
      %s277 = scalar_select %p276, %s275, 15
      %p278 = scmp.lt.s32.totalorder %s23, 0
      %s279 = scalar_select %p278, %s23, 0
      %s280 = sadd.s32 %s279, %s277
      %s281 = smul.addr %s280, 4
      %s282 = scalar_lea.vmem %s1, %s281
      %p283 = pneg %p94
      %p284 = pneg %p91
      %p285 = scmp.lt.s32.totalorder %s21, 1
      %s286 = scalar_select %p285, %s21, 1
      %p287 = scmp.lt.s32.totalorder %s24, 0
      %s288 = scalar_select %p287, %s24, 0
      %s289 = sadd.s32 %s288, %s286
      %s290 = scalar_lea.vmem %s2, %s289
      %p291 = pneg %p122
      %p292 = pneg %p119
      %s293 = smul.u32 8, %s22
      %p294 = scmp.lt.s32.totalorder %s21, 1
      %s295 = scalar_select %p294, %s21, 1
      %p296 = scmp.lt.s32.totalorder %s293, 7
      %s297 = scalar_select %p296, %s293, 7
      %p298 = scmp.lt.s32.totalorder %s23, 0
      %s299 = scalar_select %p298, %s23, 0
      %s300 = sadd.s32 %s299, %s297
      %s301 = smul.addr %s295, 8
      %s302 = sadd.s32 %s300, %s301
      %s303 = smul.addr %s302, 4
      %s304 = scalar_lea.vmem %s3, %s303
      %p305 = pneg %p152
      %p306 = pneg %p149
      %p307 = pneg %p182
      %p308 = pneg %p179
      %s309 = smul.u32 8, %s22
      %p310 = scmp.lt.s32.totalorder %s21, 1
      %s311 = scalar_select %p310, %s21, 1
      %p312 = scmp.lt.s32.totalorder %s309, 7
      %s313 = scalar_select %p312, %s309, 7
      %p314 = scmp.lt.s32.totalorder %s23, 0
      %s315 = scalar_select %p314, %s23, 0
      %s316 = sadd.s32 %s315, %s313
      %s317 = smul.addr %s311, 8
      %s318 = sadd.s32 %s316, %s317
      %s319 = smul.addr %s318, 4
      %s320 = scalar_lea.vmem %s4, %s319
      %s321 = smul.u32 8, %s22
      %p322 = scmp.lt.s32.totalorder %s21, 1
      %s323 = scalar_select %p322, %s21, 1
      %p324 = scmp.lt.s32.totalorder %s321, 7
      %s325 = scalar_select %p324, %s321, 7
      %p326 = scmp.lt.s32.totalorder %s24, 0
      %s327 = scalar_select %p326, %s24, 0
      %s328 = sadd.s32 %s327, %s325
      %s329 = smul.addr %s323, 8
      %s330 = sadd.s32 %s328, %s329
      %s331 = smul.addr %s330, 4
      %s332 = scalar_lea.vmem %s0, %s331
      %s333 = smul.u32 8, %s22
      %s334 = smul.u32 16, %s24
      %p335 = scmp.lt.s32.totalorder %s334, 15
      %s336 = scalar_select %p335, %s334, 15
      %p337 = scmp.lt.s32.totalorder %s23, 0
      %s338 = scalar_select %p337, %s23, 0
      %s339 = sadd.s32 %s338, %s336
      %s340 = smul.addr %s339, 4
      %s341 = scalar_lea.vmem %s1, %s340
      %s342 = smul.u32 16, %s24
      %p343 = scmp.lt.s32.totalorder %s21, 1
      %s344 = scalar_select %p343, %s21, 1
      %p345 = scmp.lt.s32.totalorder %s24, 0
      %s346 = scalar_select %p345, %s24, 0
      %s347 = sadd.s32 %s346, %s344
      %s348 = scalar_lea.vmem %s2, %s347
      %s349 = smul.u32 8, %s22
      %p350 = scmp.lt.s32.totalorder %s21, 1
      %s351 = scalar_select %p350, %s21, 1
      %p352 = scmp.lt.s32.totalorder %s349, 7
      %s353 = scalar_select %p352, %s349, 7
      %p354 = scmp.lt.s32.totalorder %s23, 0
      %s355 = scalar_select %p354, %s23, 0
      %s356 = sadd.s32 %s355, %s353
      %s357 = smul.addr %s351, 8
      %s358 = sadd.s32 %s356, %s357
      %s359 = smul.addr %s358, 4
      %s360 = scalar_lea.vmem %s3, %s359
      %s361 = smul.u32 8, %s22
      %s362 = smul.u32 8, %s22
      %p363 = scmp.lt.s32.totalorder %s21, 1
      %s364 = scalar_select %p363, %s21, 1
      %p365 = scmp.lt.s32.totalorder %s362, 7
      %s366 = scalar_select %p365, %s362, 7
      %p367 = scmp.lt.s32.totalorder %s23, 0
      %s368 = scalar_select %p367, %s23, 0
      %s369 = sadd.s32 %s368, %s366
      %s370 = smul.addr %s364, 8
      %s371 = sadd.s32 %s369, %s370
      %s372 = smul.addr %s371, 4
      %s373 = scalar_lea.vmem %s4, %s372
      %s374 = smul.u32 8, %s22
      %p376 = scmp.eq.s32.totalorder %s24, 0
      // Predicated region
      $region37: #{pcq_mobilenet_forward.21} parent=35 // pred_check
        %p377 = pneg %p376
      $region38: #{pcq_mobilenet_forward.21} parent=35 // pred_check_branch
        %379 = sbr.rel (%p377) target = $region40
      $region39: #{pcq_mobilenet_forward.21} parent=35 // pred_region
        %380 = vst [vmem:[#allocation2] sm:$0xff] 0.0
        %381 = vst [vmem:[#allocation2 + $0x8] sm:$0xff] 0.0
        %382 = vst [vmem:[#allocation2 + $0x10] sm:$0xff] 0.0
        %383 = vst [vmem:[#allocation2 + $0x18] sm:$0xff] 0.0
        %384 = vst [vmem:[#allocation2 + $0x20] sm:$0xff] 0.0
        %385 = vst [vmem:[#allocation2 + $0x28] sm:$0xff] 0.0
        %386 = vst [vmem:[#allocation2 + $0x30] sm:$0xff] 0.0
        %387 = vst [vmem:[#allocation2 + $0x38] sm:$0xff] 0.0
      $region40: #{pcq_mobilenet_forward.21} parent=35 // pred_fallthru
        _
      %v388 = vld [vmem:[%s332] sm:$0xf]
      %v389 = vld [vmem:[%s332 + $0x4] sm:$0xf]
      %v390 = vld [vmem:[%s332 + $0x8] sm:$0xf]
      %v391 = vld [vmem:[%s332 + $0xc] sm:$0xf]
      %v392 = vld [vmem:[%s332 + $0x10] sm:$0xf]
      %v393 = vld [vmem:[%s332 + $0x14] sm:$0xf]
      %v394 = vld [vmem:[%s332 + $0x18] sm:$0xf]
      %v395 = vld [vmem:[%s332 + $0x1c] sm:$0xf]
      %v396 = vunpack.c.l.bf16 %v388
      %v397 = vunpack.c.l.bf16 %v389
      %v398 = vunpack.c.l.bf16 %v390
      %v399 = vunpack.c.l.bf16 %v391
      %v400 = vunpack.c.l.bf16 %v392
      %v401 = vunpack.c.l.bf16 %v393
      %v402 = vunpack.c.l.bf16 %v394
      %v403 = vunpack.c.l.bf16 %v395
      %v404 = vld [vmem:[%s348] sm:$0x1]
      %v406 = vlaneseq
      %v407 = vshrl.u32 %v406, 7
      %v408 = vsub.s32 0, %v407
      %v409 = vrot.slane %v404, %v408
      %v411 = vmul.f32 %v396, %v409
      %v412 = vmul.f32 %v397, %v409
      %v413 = vmul.f32 %v398, %v409
      %v414 = vmul.f32 %v399, %v409
      %v415 = vmul.f32 %v400, %v409
      %v416 = vmul.f32 %v401, %v409
      %v417 = vmul.f32 %v402, %v409
      %v418 = vmul.f32 %v403, %v409
      %v419 = vpack.c.bf16 %v412, %v411
      %v420 = vpack.c.bf16 %v414, %v413
      %v421 = vpack.c.bf16 %v416, %v415
      %v422 = vpack.c.bf16 %v418, %v417
      %v423 = vld [vmem:[#allocation2] sm:$0xff]
      %v424 = vld [vmem:[#allocation2 + $0x8] sm:$0xff]
      %v425 = vld [vmem:[#allocation2 + $0x10] sm:$0xff]
      %v426 = vld [vmem:[#allocation2 + $0x18] sm:$0xff]
      %v427 = vld [vmem:[#allocation2 + $0x20] sm:$0xff]
      %v428 = vld [vmem:[#allocation2 + $0x28] sm:$0xff]
      %v429 = vld [vmem:[#allocation2 + $0x30] sm:$0xff]
      %v430 = vld [vmem:[#allocation2 + $0x38] sm:$0xff]
      %v431 = vld [vmem:[%s341] sm:$0xf]
      %v432 = vld [vmem:[%s341 + $0x4] sm:$0xf]
      %v433 = vld [vmem:[%s341 + $0x8] sm:$0xf]
      %v434 = vld [vmem:[%s341 + $0xc] sm:$0xf]
      %v435 = vld [vmem:[%s341 + $0x10] sm:$0xf]
      %v436 = vld [vmem:[%s341 + $0x14] sm:$0xf]
      %v437 = vld [vmem:[%s341 + $0x18] sm:$0xf]
      %v438 = vld [vmem:[%s341 + $0x1c] sm:$0xf]
      %v439 = vld [vmem:[%s341 + $0x20] sm:$0xf]
      %v440 = vld [vmem:[%s341 + $0x24] sm:$0xf]
      %v441 = vld [vmem:[%s341 + $0x28] sm:$0xf]
      %v442 = vld [vmem:[%s341 + $0x2c] sm:$0xf]
      %v443 = vld [vmem:[%s341 + $0x30] sm:$0xf]
      %v444 = vld [vmem:[%s341 + $0x34] sm:$0xf]
      %v445 = vld [vmem:[%s341 + $0x38] sm:$0xf]
      %v446 = vld [vmem:[%s341 + $0x3c] sm:$0xf]
      %v463 = vunpack.c.l.b16 %v431
      %v464 = vunpack.c.l.b16 %v432
      %v465 = vunpack.c.l.b16 %v433
      %v466 = vunpack.c.l.b16 %v434
      %v467 = vunpack.c.l.b16 %v435
      %v468 = vunpack.c.l.b16 %v436
      %v469 = vunpack.c.l.b16 %v437
      %v470 = vunpack.c.l.b16 %v438
      %v471 = vunpack.c.l.b16 %v439
      %v472 = vunpack.c.l.b16 %v440
      %v473 = vunpack.c.l.b16 %v441
      %v474 = vunpack.c.l.b16 %v442
      %v475 = vunpack.c.l.b16 %v443
      %v476 = vunpack.c.l.b16 %v444
      %v477 = vunpack.c.l.b16 %v445
      %v478 = vunpack.c.l.b16 %v446
      %v479 = vpack.c.b16 %v464, %v463
      %v480 = vpack.c.b16 %v466, %v465
      %v481 = vpack.c.b16 %v468, %v467
      %v482 = vpack.c.b16 %v470, %v469
      %v483 = vpack.c.b16 %v472, %v471
      %v484 = vpack.c.b16 %v474, %v473
      %v485 = vpack.c.b16 %v476, %v475
      %v486 = vpack.c.b16 %v478, %v477
      %495 = vmatprep.subr.bf16.mxu0 0
      %496 = vmatpush1.bf16.msra.mxu0 %v479
      %497 = vmatprep.subr.bf16.mxu0 0
      %498 = vmatpush1.bf16.msra.mxu0 %v480
      %499 = vmatprep.subr.bf16.mxu0 0
      %500 = vmatpush1.bf16.msra.mxu0 %v481
      %501 = vmatprep.subr.bf16.mxu0 0
      %502 = vmatpush1.bf16.msra.mxu0 %v482
      %503 = vmatprep.subr.bf16.mxu0 0
      %504 = vmatpush1.bf16.msra.mxu0 %v483
      %505 = vmatprep.subr.bf16.mxu0 0
      %506 = vmatpush1.bf16.msra.mxu0 %v484
      %507 = vmatprep.subr.bf16.mxu0 0
      %508 = vmatpush1.bf16.msra.mxu0 %v485
      %509 = vmatprep.subr.bf16.mxu0 0
      %510 = vmatpush1.bf16.msra.mxu0 %v486
      %511 = vmatprep.subr.bf16.mxu0 0
      %512 = vmatpush1.bf16.msra.mxu0 0
      %513 = vmatprep.subr.bf16.mxu0 0
      %514 = vmatpush1.bf16.msra.mxu0 0
      %515 = vmatprep.subr.bf16.mxu0 0
      %516 = vmatpush1.bf16.msra.mxu0 0
      %517 = vmatprep.subr.bf16.mxu0 0
      %518 = vmatpush1.bf16.msra.mxu0 0
      %519 = vmatprep.subr.bf16.mxu0 0
      %520 = vmatpush1.bf16.msra.mxu0 0
      %521 = vmatprep.subr.bf16.mxu0 0
      %522 = vmatpush1.bf16.msra.mxu0 0
      %523 = vmatprep.subr.bf16.mxu0 0
      %524 = vmatpush1.bf16.msra.mxu0 0
      %525 = vmatprep.subr.bf16.mxu0 0
      %526 = vmatpush1.bf16.msra.mxu0 0
      %527 = vmatprep.mubr.bf16.mxu0 0
      %528 = vmatmul.mubr.bf16.gmra.mrb[0].mxu0 %v419
      %v529 = vpop.f32.mrb[0].mxu0
      %v530 = vadd.f32 0.0, %v529
      %v531 = vpop.f32.mrb[0].mxu0
      %v532 = vpop.f32.mrb[0].mxu0
      %v533 = vadd.f32 0.0, %v532
      %v534 = vpop.f32.mrb[0].mxu0
      %535 = vmatprep.mubr.bf16.mxu0 0
      %536 = vmatmul.mubr.bf16.gmra.mrb[0].mxu0 %v420
      %v537 = vpop.f32.mrb[0].mxu0
      %v538 = vadd.f32 0.0, %v537
      %v539 = vpop.f32.mrb[0].mxu0
      %v540 = vpop.f32.mrb[0].mxu0
      %v541 = vadd.f32 0.0, %v540
      %v542 = vpop.f32.mrb[0].mxu0
      %543 = vmatprep.mubr.bf16.mxu0 0
      %544 = vmatmul.mubr.bf16.gmra.mrb[0].mxu0 %v421
      %v545 = vpop.f32.mrb[0].mxu0
      %v546 = vadd.f32 0.0, %v545
      %v547 = vpop.f32.mrb[0].mxu0
      %v548 = vpop.f32.mrb[0].mxu0
      %v549 = vadd.f32 0.0, %v548
      %v550 = vpop.f32.mrb[0].mxu0
      %551 = vmatprep.mubr.bf16.mxu0 0
      %552 = vmatmul.mubr.bf16.gmra.mrb[0].mxu0 %v422
      %v553 = vpop.f32.mrb[0].mxu0
      %v554 = vadd.f32 0.0, %v553
      %v555 = vpop.f32.mrb[0].mxu0
      %v556 = vpop.f32.mrb[0].mxu0
      %v557 = vadd.f32 0.0, %v556
      %v558 = vpop.f32.mrb[0].mxu0
      %559 = vdwg.mxu0
      %v560 = vadd.f32 %v423, %v530
      %v561 = vadd.f32 %v424, %v533
      %v562 = vadd.f32 %v425, %v538
      %v563 = vadd.f32 %v426, %v541
      %v564 = vadd.f32 %v427, %v546
      %v565 = vadd.f32 %v428, %v549
      %v566 = vadd.f32 %v429, %v554
      %v567 = vadd.f32 %v430, %v557
      %568 = vst [vmem:[#allocation2] sm:$0xff] %v560
      %569 = vst [vmem:[#allocation2 + $0x8] sm:$0xff] %v561
      %570 = vst [vmem:[#allocation2 + $0x10] sm:$0xff] %v562
      %571 = vst [vmem:[#allocation2 + $0x18] sm:$0xff] %v563
      %572 = vst [vmem:[#allocation2 + $0x20] sm:$0xff] %v564
      %573 = vst [vmem:[#allocation2 + $0x28] sm:$0xff] %v565
      %574 = vst [vmem:[#allocation2 + $0x30] sm:$0xff] %v566
      %575 = vst [vmem:[#allocation2 + $0x38] sm:$0xff] %v567
      // Predicated region
      $region41: #{pcq_mobilenet_forward.21} parent=35 // pred_check
        %p576 = pneg %p376
      $region42: #{pcq_mobilenet_forward.21} parent=35 // pred_check_branch
        %578 = sbr.rel (%p576) target = $region44
      $region43: #{pcq_mobilenet_forward.21} parent=35 // pred_region
        %v579 = vld [vmem:[#allocation2] sm:$0xff]
        %v580 = vld [vmem:[#allocation2 + $0x8] sm:$0xff]
        %v581 = vld [vmem:[#allocation2 + $0x10] sm:$0xff]
        %v582 = vld [vmem:[#allocation2 + $0x18] sm:$0xff]
        %v583 = vld [vmem:[#allocation2 + $0x20] sm:$0xff]
        %v584 = vld [vmem:[#allocation2 + $0x28] sm:$0xff]
        %v585 = vld [vmem:[#allocation2 + $0x30] sm:$0xff]
        %v586 = vld [vmem:[#allocation2 + $0x38] sm:$0xff]
        %v587 = vld [vmem:[%s360] sm:$0xf]
        %v588 = vld [vmem:[%s360 + $0x4] sm:$0xf]
        %v589 = vld [vmem:[%s360 + $0x8] sm:$0xf]
        %v590 = vld [vmem:[%s360 + $0xc] sm:$0xf]
        %v591 = vld [vmem:[%s360 + $0x10] sm:$0xf]
        %v592 = vld [vmem:[%s360 + $0x14] sm:$0xf]
        %v593 = vld [vmem:[%s360 + $0x18] sm:$0xf]
        %v594 = vld [vmem:[%s360 + $0x1c] sm:$0xf]
        %v595 = vunpack.c.l.bf16 %v587
        %v596 = vunpack.c.l.bf16 %v588
        %v597 = vunpack.c.l.bf16 %v589
        %v598 = vunpack.c.l.bf16 %v590
        %v599 = vunpack.c.l.bf16 %v591
        %v600 = vunpack.c.l.bf16 %v592
        %v601 = vunpack.c.l.bf16 %v593
        %v602 = vunpack.c.l.bf16 %v594
        %v603 = vadd.f32 %v579, %v595
        %v604 = vadd.f32 %v580, %v596
        %v605 = vadd.f32 %v581, %v597
        %v606 = vadd.f32 %v582, %v598
        %v607 = vadd.f32 %v583, %v599
        %v608 = vadd.f32 %v584, %v600
        %v609 = vadd.f32 %v585, %v601
        %v610 = vadd.f32 %v586, %v602
        %v611 = vpack.c.bf16 %v604, %v603
        %v612 = vpack.c.bf16 %v606, %v605
        %v613 = vpack.c.bf16 %v608, %v607
        %v614 = vpack.c.bf16 %v610, %v609
        %v619 = vunpack.c.l.b16 %v611
        %v620 = vunpack.c.h.b16 %v611
        %v621 = vunpack.c.l.b16 %v612
        %v622 = vunpack.c.h.b16 %v612
        %v623 = vunpack.c.l.b16 %v613
        %v624 = vunpack.c.h.b16 %v613
        %v625 = vunpack.c.l.b16 %v614
        %v626 = vunpack.c.h.b16 %v614
        %v627 = vpack.c.b16 %v619, %v619
        %v628 = vpack.c.b16 %v620, %v620
        %v629 = vpack.c.b16 %v621, %v621
        %v630 = vpack.c.b16 %v622, %v622
        %v631 = vpack.c.b16 %v623, %v623
        %v632 = vpack.c.b16 %v624, %v624
        %v633 = vpack.c.b16 %v625, %v625
        %v634 = vpack.c.b16 %v626, %v626
        %643 = vst [vmem:[%s373] sm:$0xf] %v627
        %644 = vst [vmem:[%s373 + $0x4] sm:$0xf] %v628
        %645 = vst [vmem:[%s373 + $0x8] sm:$0xf] %v629
        %646 = vst [vmem:[%s373 + $0xc] sm:$0xf] %v630
        %647 = vst [vmem:[%s373 + $0x10] sm:$0xf] %v631
        %648 = vst [vmem:[%s373 + $0x14] sm:$0xf] %v632
        %649 = vst [vmem:[%s373 + $0x18] sm:$0xf] %v633
        %650 = vst [vmem:[%s373 + $0x1c] sm:$0xf] %v634
      $region44: #{pcq_mobilenet_forward.21} parent=35 // pred_fallthru
        _
      %s651 = smul.u32 8, %s22
      %p652 = scmp.lt.s32.totalorder %s21, 1
      %s653 = scalar_select %p652, %s21, 1
      %p654 = scmp.lt.s32.totalorder %s651, 7
      %s655 = scalar_select %p654, %s651, 7
      %p656 = scmp.lt.s32.totalorder %s23, 0
      %s657 = scalar_select %p656, %s23, 0
      %s658 = sadd.s32 %s657, %s655
      %s659 = smul.addr %s653, 8
      %s660 = sadd.s32 %s658, %s659
      %s661 = smul.addr %s660, 4
      %s662 = scalar_lea.vmem %s4, %s661
      // Predicated region
      $region45: #{pcq_mobilenet_forward.21} parent=35 // pred_check
        %p663 = pneg %p179
      $region46: #{pcq_mobilenet_forward.21} parent=35 // pred_check_branch
        %665 = sbr.rel (%p663) target = $region48
      $region47: #{pcq_mobilenet_forward.21} parent=35 // pred_region
        %s666 = smul.u32 8, %s22
      $region48: #{pcq_mobilenet_forward.21} parent=35 // pred_fallthru
        _
    $region36: #{pcq_mobilenet_forward.21} parent=5 // pred_fallthru
      _
    %p667 = scmp.le.s32.totalorder 2, %s10
    // Predicated region
    $region49: #{pcq_mobilenet_forward.21} parent=5 // pred_check
      %p668 = pneg %p667
    $region50: #{pcq_mobilenet_forward.21} parent=5 // pred_check_branch
      %670 = sbr.rel (%p668) target = $region52
    $region51: #{pcq_mobilenet_forward.21} parent=5 // pred_region
      %s671 = ssub.s32 %s10, 2
      // Predicated region
      $region53: #{pcq_mobilenet_forward.21} parent=51 // pred_check
        %p672 = pneg %p185
      $region54: #{pcq_mobilenet_forward.21} parent=51 // pred_check_branch
        %674 = sbr.rel (%p672) target = $region56
      $region55: #{pcq_mobilenet_forward.21} parent=51 // pred_region
        %s675 = smul.u32 8, %s26
        %p676 = scmp.lt.s32.totalorder %s25, 1
        %s677 = scalar_select %p676, %s25, 1
        %p678 = scmp.lt.s32.totalorder %s675, 7
        %s679 = scalar_select %p678, %s675, 7
        %p680 = scmp.lt.s32.totalorder %s27, 0
        %s681 = scalar_select %p680, %s27, 0
        %s682 = sadd.s32 %s681, %s679
        %s683 = smul.addr %s677, 8
        %s684 = sadd.s32 %s682, %s683
        %s685 = smul.addr %s684, 4
        %s686 = scalar_lea.vmem %s4, %s685
      $region56: #{pcq_mobilenet_forward.21} parent=51 // pred_fallthru
        _
    $region52: #{pcq_mobilenet_forward.21} parent=5 // pred_fallthru
      _
  $region6: #{pcq_mobilenet_forward.21} parent=0 // loop_footer
    %s14 = sadd.s32 1, %s10
  $region7: #{pcq_mobilenet_forward.21} parent=0 // loop_footer_branch
    %9 = sbr.rel target = $region3
  $region8: #{pcq_mobilenet_forward.21} parent=0 // loop_exit
    _

// kernel: pcq_mobilenet_forward.23
$region0: #{pcq_mobilenet_forward.23}
  #allocation0 [shape = 'u32[]', space=smem, size = 0x4, offset = 0x4, fixed_abs, tag = 'smem constant byte address 0x4 - core index']
  #allocation1 [shape = 'u32[144,128]{1,0:T(1,128)}', space=vmem, size = 0x12000, scoped, tag = 'internal scratch']
  %s0 = inlined_call_operand.vmem [shape: bf16[2,20,5,24], index: 0, kind: input, shape index: {}]
  %s1 = inlined_call_operand.vmem [shape: f32[3,3,24], index: 1, kind: input, shape index: {}]
  %s2 = inlined_call_operand.vmem [shape: bf16[2,4,4,24], index: 2, kind: output, shape index: {}]
  %s3 = sld [smem:[#allocation0]]
  $region41: #{pcq_mobilenet_forward.23} parent=0
    _
  %s5 = ssub.s32 1, %s3
  %s6 = scalar_select 0, %s5, %s3
  loop: start=0, step=1, limit=4
  $region2: #{pcq_mobilenet_forward.23} parent=0 // loop_pre_header
    _
  $region3: #{pcq_mobilenet_forward.23} parent=0 // loop_header
    %s8 = sphi 0, %s12
    %p9 = scmp.ge.s32.totalorder %s8, 4
    %s18 = sphi 0, %s20
    %s21 = sphi 0, %s18
    %s22 = sphi 0, %s21
    %s38 = sphi 0, %s22
    %s42 = sphi 0, %s42
    %s44 = sphi 0, %s42
    %s45 = sphi 0, %s44
    %s59 = sphi 0, %s45
    %s65 = sphi 0, %s67
    %s68 = sphi 0, %s65
    %s69 = sphi 0, %s68
    %s85 = sphi 0, %s69
  $region4: #{pcq_mobilenet_forward.23} parent=0 // loop_header_branch
    %11 = sbr.rel (%p9) target = $region8
  $region5: #{pcq_mobilenet_forward.23} parent=0 // loop_body
    %s13 = ssub.s32 %s8, 1
    %s14 = ssub.s32 %s8, 2
    %s15 = sadd.s32 %s8, 1
    %s16 = ssub.s32 %s8, %s15
    %p17 = scmp.eq.s32.totalorder %s16, 0
    %s19 = sadd.s32 %s18, 1
    %s20 = scalar_select %p17, %s18, %s19
    %p23 = pneg %p17
    %p24 = scmp.eq.s32.totalorder %s8, 1
    %p25 = por %p23, %p24
    %p26 = scmp.ne.s32.totalorder %s18, %s21
    %p27 = scmp.eq.s32.totalorder %s8, 0
    %p28 = por %p26, %p27
    %p29 = scmp.ne.s32.totalorder %s18, %s21
    %p30 = scmp.eq.s32.totalorder %s13, 1
    %p31 = por %p29, %p30
    %p32 = scmp.ne.s32.totalorder %s21, %s22
    %p33 = scmp.eq.s32.totalorder %s13, 0
    %p34 = por %p32, %p33
    %p35 = scmp.ne.s32.totalorder %s21, %s22
    %p36 = scmp.eq.s32.totalorder %s14, 1
    %p37 = por %p35, %p36
    %p39 = scmp.ne.s32.totalorder %s22, %s38
    %p40 = scmp.eq.s32.totalorder %s14, 0
    %p41 = por %p39, %p40
    %s43 = sadd.s32 %s42, 1
    %p46 = scmp.eq.s32.totalorder %s8, 1
    %p47 = scmp.ne.s32.totalorder %s42, %s44
    %p48 = scmp.eq.s32.totalorder %s8, 0
    %p49 = por %p47, %p48
    %p50 = scmp.ne.s32.totalorder %s42, %s44
    %p51 = scmp.eq.s32.totalorder %s13, 1
    %p52 = por %p50, %p51
    %p53 = scmp.ne.s32.totalorder %s44, %s45
    %p54 = scmp.eq.s32.totalorder %s13, 0
    %p55 = por %p53, %p54
    %p56 = scmp.ne.s32.totalorder %s44, %s45
    %p57 = scmp.eq.s32.totalorder %s14, 1
    %p58 = por %p56, %p57
    %p60 = scmp.ne.s32.totalorder %s45, %s59
    %p61 = scmp.eq.s32.totalorder %s14, 0
    %p62 = por %p60, %p61
    %s63 = ssub.s32 %s8, %s15
    %p64 = scmp.eq.s32.totalorder %s63, 0
    %s66 = sadd.s32 %s65, 1
    %s67 = scalar_select %p64, %s65, %s66
    %p70 = pneg %p64
    %p71 = scmp.eq.s32.totalorder %s8, 1
    %p72 = por %p70, %p71
    %p73 = scmp.ne.s32.totalorder %s65, %s68
    %p74 = scmp.eq.s32.totalorder %s8, 0
    %p75 = por %p73, %p74
    %p76 = scmp.ne.s32.totalorder %s65, %s68
    %p77 = scmp.eq.s32.totalorder %s13, 1
    %p78 = por %p76, %p77
    %p79 = scmp.ne.s32.totalorder %s68, %s69
    %p80 = scmp.eq.s32.totalorder %s13, 0
    %p81 = por %p79, %p80
    %p82 = scmp.ne.s32.totalorder %s68, %s69
    %p83 = scmp.eq.s32.totalorder %s14, 1
    %p84 = por %p82, %p83
    %p86 = scmp.ne.s32.totalorder %s69, %s85
    %p87 = scmp.eq.s32.totalorder %s14, 0
    %p88 = por %p86, %p87
    %p89 = scmp.le.s32.totalorder 1, %s8
    %p90 = scmp.lt.s32.totalorder %s8, 3
    %p91 = pnand %p89, %p90
    %p92 = pneg %p91
    // Predicated region
    $region9: #{pcq_mobilenet_forward.23} parent=5 // pred_check
      _
    $region10: #{pcq_mobilenet_forward.23} parent=5 // pred_check_branch
      %94 = sbr.rel (%p91) target = $region12
    $region11: #{pcq_mobilenet_forward.23} parent=5 // pred_region
      %s95 = ssub.s32 %s8, 1
      // Predicated region
      $region13: #{pcq_mobilenet_forward.23} parent=11 // pred_check
        %p96 = pneg %p55
      $region14: #{pcq_mobilenet_forward.23} parent=11 // pred_check_branch
        %98 = sbr.rel (%p96) target = $region16
      $region15: #{pcq_mobilenet_forward.23} parent=11 // pred_region
        _
      $region16: #{pcq_mobilenet_forward.23} parent=11 // pred_fallthru
        _
    $region12: #{pcq_mobilenet_forward.23} parent=5 // pred_fallthru
      _
    %p99 = scmp.lt.s32.totalorder %s8, 2
    // Predicated region
    $region17: #{pcq_mobilenet_forward.23} parent=5 // pred_check
      %p100 = pneg %p99
    $region18: #{pcq_mobilenet_forward.23} parent=5 // pred_check_branch
      %102 = sbr.rel (%p100) target = $region20
    $region19: #{pcq_mobilenet_forward.23} parent=5 // pred_region
      // Predicated region
      $region21: #{pcq_mobilenet_forward.23} parent=19 // pred_check
        %p103 = pneg %p28
      $region22: #{pcq_mobilenet_forward.23} parent=19 // pred_check_branch
        %105 = sbr.rel (%p103) target = $region24
      $region23: #{pcq_mobilenet_forward.23} parent=19 // pred_region
        %p106 = scmp.lt.s32.totalorder %s8, 1
        %s107 = scalar_select %p106, %s8, 1
        %s108 = smul.addr %s107, 20
        %s109 = smul.addr %s108, 4
        %s110 = scalar_lea.vmem %s0, %s109
      $region24: #{pcq_mobilenet_forward.23} parent=19 // pred_fallthru
        _
    $region20: #{pcq_mobilenet_forward.23} parent=5 // pred_fallthru
      _
    %p111 = scmp.le.s32.totalorder 1, %s8
    %p112 = scmp.lt.s32.totalorder %s8, 3
    %p113 = pnand %p111, %p112
    %p114 = pneg %p113
    // Predicated region
    $region25: #{pcq_mobilenet_forward.23} parent=5 // pred_check
      _
    $region26: #{pcq_mobilenet_forward.23} parent=5 // pred_check_branch
      %116 = sbr.rel (%p113) target = $region28
    $region27: #{pcq_mobilenet_forward.23} parent=5 // pred_region
      %s117 = ssub.s32 %s8, 1
      %p118 = scmp.lt.s32.totalorder %s13, 1
      %s119 = scalar_select %p118, %s13, 1
      %s120 = smul.addr %s119, 20
      %s121 = smul.addr %s120, 4
      %s122 = scalar_lea.vmem %s0, %s121
      %p123 = pneg %p34
      %p124 = pneg %p31
      %p125 = pneg %p55
      %p126 = pneg %p52
      %p127 = pneg %p81
      %p128 = pneg %p78
      %p129 = scmp.lt.s32.totalorder %s13, 1
      %s130 = scalar_select %p129, %s13, 1
      %s131 = smul.addr %s130, 4
      %s132 = smul.addr %s131, 2
      %s133 = scalar_lea.vmem %s2, %s132
      %p134 = scmp.lt.s32.totalorder %s13, 1
      %s135 = scalar_select %p134, %s13, 1
      %s136 = smul.addr %s135, 20
      %s137 = smul.addr %s136, 4
      %s138 = scalar_lea.vmem %s0, %s137
      %p139 = scmp.lt.s32.totalorder %s13, 1
      %s140 = scalar_select %p139, %s13, 1
      %s141 = smul.addr %s140, 4
      %s142 = smul.addr %s141, 2
      %s143 = scalar_lea.vmem %s2, %s142
      %v144 = vld [vmem:[%s1] sm:$0x7]
      %v145 = vld [vmem:[%s1 + $0x4] sm:$0x7]
      %v146 = vld [vmem:[%s1 + $0x8] sm:$0x7]
      %v147 = vld [vmem:[%s138] sm:$0x3]
      %v148 = vld [vmem:[%s138 + $0x4] sm:$0x3]
      %v149 = vld [vmem:[%s138 + $0x8] sm:$0x3]
      %v150 = vld [vmem:[%s138 + $0xc] sm:$0x3]
      %v151 = vunpack.c.l.bf16 %v147
      %v152 = vunpack.c.l.bf16 %v148
      %v153 = vunpack.c.l.bf16 %v149
      %v154 = vunpack.c.l.bf16 %v150
      %v155 = vlaneseq
      %v156 = vshrl.u32 %v155, 7
      %v157 = vsub.s32 0, %v156
      %v158 = vrot.slane %v144, %v157
      %v159 = vmul.f32 %v151, %v158
      %v160 = vmul.f32 %v152, %v158
      %v161 = vmul.f32 %v153, %v158
      %v162 = vmul.f32 %v154, %v158
      %s163 = scalar_lea.vmem %s138, 20
      %v164 = vld [vmem:[%s163] sm:$0x3]
      %v165 = vld [vmem:[%s163 + $0x4] sm:$0x3]
      %v166 = vld [vmem:[%s163 + $0x8] sm:$0x3]
      %v167 = vld [vmem:[%s163 + $0xc] sm:$0x3]
      %v168 = vunpack.c.l.bf16 %v164
      %v169 = vunpack.c.l.bf16 %v165
      %v170 = vunpack.c.l.bf16 %v166
      %v171 = vunpack.c.l.bf16 %v167
      %v172 = vlaneseq
      %v173 = vshrl.u32 %v172, 7
      %v174 = vsub.s32 1, %v173
      %v175 = vrot.slane %v144, %v174
      %v176 = vmul.f32 %v168, %v175
      %v177 = vmul.f32 %v169, %v175
      %v178 = vmul.f32 %v170, %v175
      %v179 = vmul.f32 %v171, %v175
      %v180 = vadd.f32 %v159, %v176
      %v181 = vadd.f32 %v160, %v177
      %v182 = vadd.f32 %v161, %v178
      %v183 = vadd.f32 %v162, %v179
      %v184 = vld [vmem:[%s138] sm:$0x7]
      %v185 = vld [vmem:[%s138 + $0x4] sm:$0x7]
      %v186 = vld [vmem:[%s138 + $0x8] sm:$0x7]
      %v187 = vld [vmem:[%s138 + $0xc] sm:$0x7]
      %v188 = vunpack.c.l.bf16 %v184
      %v189 = vunpack.c.l.bf16 %v185
      %v190 = vunpack.c.l.bf16 %v186
      %v191 = vunpack.c.l.bf16 %v187
      %v192 = vlaneseq
      %v193 = vshrl.u32 %v192, 7
      %v194 = vsub.s32 2, %v193
      %v195 = vrot.slane %v144, %v194
      %v196 = vmul.f32 %v188, %v195
      %v197 = vmul.f32 %v189, %v195
      %v198 = vmul.f32 %v190, %v195
      %v199 = vmul.f32 %v191, %v195
      %v204 = vrot.slane %v196, 1
      %v205 = vrot.slane %v197, 1
      %v206 = vrot.slane %v198, 1
      %v207 = vrot.slane %v199, 1
      %v212 = vadd.f32 %v180, %v204
      %v213 = vadd.f32 %v181, %v205
      %v214 = vadd.f32 %v182, %v206
      %v215 = vadd.f32 %v183, %v207
      %s216 = scalar_lea.vmem %s138, 40
      %v217 = vld [vmem:[%s216] sm:$0x3]
      %v218 = vld [vmem:[%s216 + $0x4] sm:$0x3]
      %v219 = vld [vmem:[%s216 + $0x8] sm:$0x3]
      %v220 = vld [vmem:[%s216 + $0xc] sm:$0x3]
      %v221 = vunpack.c.l.bf16 %v217
      %v222 = vunpack.c.l.bf16 %v218
      %v223 = vunpack.c.l.bf16 %v219
      %v224 = vunpack.c.l.bf16 %v220
      %v225 = vlaneseq
      %v226 = vshrl.u32 %v225, 7
      %v227 = vsub.s32 0, %v226
      %v228 = vrot.slane %v145, %v227
      %v229 = vmul.f32 %v221, %v228
      %v230 = vmul.f32 %v222, %v228
      %v231 = vmul.f32 %v223, %v228
      %v232 = vmul.f32 %v224, %v228
      %v233 = vadd.f32 %v212, %v229
      %v234 = vadd.f32 %v213, %v230
      %v235 = vadd.f32 %v214, %v231
      %v236 = vadd.f32 %v215, %v232
      %s237 = scalar_lea.vmem %s138, 60
      %v238 = vld [vmem:[%s237] sm:$0x3]
      %v239 = vld [vmem:[%s237 + $0x4] sm:$0x3]
      %v240 = vld [vmem:[%s237 + $0x8] sm:$0x3]
      %v241 = vld [vmem:[%s237 + $0xc] sm:$0x3]
      %v242 = vunpack.c.l.bf16 %v238
      %v243 = vunpack.c.l.bf16 %v239
      %v244 = vunpack.c.l.bf16 %v240
      %v245 = vunpack.c.l.bf16 %v241
      %v246 = vlaneseq
      %v247 = vshrl.u32 %v246, 7
      %v248 = vsub.s32 1, %v247
      %v249 = vrot.slane %v145, %v248
      %v250 = vmul.f32 %v242, %v249
      %v251 = vmul.f32 %v243, %v249
      %v252 = vmul.f32 %v244, %v249
      %v253 = vmul.f32 %v245, %v249
      %v254 = vadd.f32 %v233, %v250
      %v255 = vadd.f32 %v234, %v251
      %v256 = vadd.f32 %v235, %v252
      %v257 = vadd.f32 %v236, %v253
      %v258 = vld [vmem:[%s216] sm:$0x7]
      %v259 = vld [vmem:[%s216 + $0x4] sm:$0x7]
      %v260 = vld [vmem:[%s216 + $0x8] sm:$0x7]
      %v261 = vld [vmem:[%s216 + $0xc] sm:$0x7]
      %v262 = vunpack.c.l.bf16 %v258
      %v263 = vunpack.c.l.bf16 %v259
      %v264 = vunpack.c.l.bf16 %v260
      %v265 = vunpack.c.l.bf16 %v261
      %v266 = vlaneseq
      %v267 = vshrl.u32 %v266, 7
      %v268 = vsub.s32 2, %v267
      %v269 = vrot.slane %v145, %v268
      %v270 = vmul.f32 %v262, %v269
      %v271 = vmul.f32 %v263, %v269
      %v272 = vmul.f32 %v264, %v269
      %v273 = vmul.f32 %v265, %v269
      %v278 = vrot.slane %v270, 1
      %v279 = vrot.slane %v271, 1
      %v280 = vrot.slane %v272, 1
      %v281 = vrot.slane %v273, 1
      %v286 = vadd.f32 %v254, %v278
      %v287 = vadd.f32 %v255, %v279
      %v288 = vadd.f32 %v256, %v280
      %v289 = vadd.f32 %v257, %v281
      %s290 = scalar_lea.vmem %s138, 4
      %v291 = vld [vmem:[%s290] sm:$0x3]
      %v292 = vld [vmem:[%s290 + $0x4] sm:$0x3]
      %v293 = vld [vmem:[%s290 + $0x8] sm:$0x3]
      %v294 = vld [vmem:[%s290 + $0xc] sm:$0x3]
      %v295 = vunpack.c.l.bf16 %v291
      %v296 = vunpack.c.l.bf16 %v292
      %v297 = vunpack.c.l.bf16 %v293
      %v298 = vunpack.c.l.bf16 %v294
      %v299 = vlaneseq
      %v300 = vshrl.u32 %v299, 7
      %v301 = vsub.s32 0, %v300
      %v302 = vrot.slane %v146, %v301
      %v303 = vmul.f32 %v295, %v302
      %v304 = vmul.f32 %v296, %v302
      %v305 = vmul.f32 %v297, %v302
      %v306 = vmul.f32 %v298, %v302
      %v307 = vadd.f32 %v286, %v303
      %v308 = vadd.f32 %v287, %v304
      %v309 = vadd.f32 %v288, %v305
      %v310 = vadd.f32 %v289, %v306
      %s311 = scalar_lea.vmem %s138, 24
      %v312 = vld [vmem:[%s311] sm:$0x3]
      %v313 = vld [vmem:[%s311 + $0x4] sm:$0x3]
      %v314 = vld [vmem:[%s311 + $0x8] sm:$0x3]
      %v315 = vld [vmem:[%s311 + $0xc] sm:$0x3]
      %v316 = vunpack.c.l.bf16 %v312
      %v317 = vunpack.c.l.bf16 %v313
      %v318 = vunpack.c.l.bf16 %v314
      %v319 = vunpack.c.l.bf16 %v315
      %v320 = vlaneseq
      %v321 = vshrl.u32 %v320, 7
      %v322 = vsub.s32 1, %v321
      %v323 = vrot.slane %v146, %v322
      %v324 = vmul.f32 %v316, %v323
      %v325 = vmul.f32 %v317, %v323
      %v326 = vmul.f32 %v318, %v323
      %v327 = vmul.f32 %v319, %v323
      %v328 = vadd.f32 %v307, %v324
      %v329 = vadd.f32 %v308, %v325
      %v330 = vadd.f32 %v309, %v326
      %v331 = vadd.f32 %v310, %v327
      %v332 = vld [vmem:[%s290] sm:$0x7]
      %v333 = vld [vmem:[%s290 + $0x4] sm:$0x7]
      %v334 = vld [vmem:[%s290 + $0x8] sm:$0x7]
      %v335 = vld [vmem:[%s290 + $0xc] sm:$0x7]
      %v336 = vunpack.c.l.bf16 %v332
      %v337 = vunpack.c.l.bf16 %v333
      %v338 = vunpack.c.l.bf16 %v334
      %v339 = vunpack.c.l.bf16 %v335
      %v340 = vlaneseq
      %v341 = vshrl.u32 %v340, 7
      %v342 = vsub.s32 2, %v341
      %v343 = vrot.slane %v146, %v342
      %v344 = vmul.f32 %v336, %v343
      %v345 = vmul.f32 %v337, %v343
      %v346 = vmul.f32 %v338, %v343
      %v347 = vmul.f32 %v339, %v343
      %v352 = vrot.slane %v344, 1
      %v353 = vrot.slane %v345, 1
      %v354 = vrot.slane %v346, 1
      %v355 = vrot.slane %v347, 1
      %v360 = vadd.f32 %v328, %v352
      %v361 = vadd.f32 %v329, %v353
      %v362 = vadd.f32 %v330, %v354
      %v363 = vadd.f32 %v331, %v355
      %v364 = vadd.f32 %v360, 3.0
      %v365 = vadd.f32 %v361, 3.0
      %v366 = vadd.f32 %v362, 3.0
      %v367 = vadd.f32 %v363, 3.0
      %v368 = vmax.f32 %v364, 0.0
      %v369 = vmax.f32 %v365, 0.0
      %v370 = vmax.f32 %v366, 0.0
      %v371 = vmax.f32 %v367, 0.0
      %v372 = vmin.f32 %v368, 6.0
      %v373 = vmin.f32 %v369, 6.0
      %v374 = vmin.f32 %v370, 6.0
      %v375 = vmin.f32 %v371, 6.0
      %v376 = vmul.f32 %v360, %v372
      %v377 = vmul.f32 %v361, %v373
      %v378 = vmul.f32 %v362, %v374
      %v379 = vmul.f32 %v363, %v375
      %v380 = vmul.f32 %v376, 0.16666667
      %v381 = vmul.f32 %v377, 0.16666667
      %v382 = vmul.f32 %v378, 0.16666667
      %v383 = vmul.f32 %v379, 0.16666667
      %v384 = vpack.c.bf16 %v380, %v380
      %v385 = vpack.c.bf16 %v381, %v381
      %v386 = vpack.c.bf16 %v382, %v382
      %v387 = vpack.c.bf16 %v383, %v383
      %vm388 = vcmask 189440
      %389 = vst.msk [vmem:[%s143] sm:$0x3] %vm388, %v384
      %390 = vst.msk [vmem:[%s143 + $0x2] sm:$0x3] %vm388, %v385
      %391 = vst.msk [vmem:[%s143 + $0x4] sm:$0x3] %vm388, %v386
      %392 = vst.msk [vmem:[%s143 + $0x6] sm:$0x3] %vm388, %v387
      %p393 = scmp.lt.s32.totalorder %s13, 1
      %s394 = scalar_select %p393, %s13, 1
      %s395 = smul.addr %s394, 4
      %s396 = smul.addr %s395, 2
      %s397 = scalar_lea.vmem %s2, %s396
      // Predicated region
      $region29: #{pcq_mobilenet_forward.23} parent=27 // pred_check
        %p398 = pneg %p78
      $region30: #{pcq_mobilenet_forward.23} parent=27 // pred_check_branch
        %400 = sbr.rel (%p398) target = $region32
      $region31: #{pcq_mobilenet_forward.23} parent=27 // pred_region
        _
      $region32: #{pcq_mobilenet_forward.23} parent=27 // pred_fallthru
        _
    $region28: #{pcq_mobilenet_forward.23} parent=5 // pred_fallthru
      _
    %p401 = scmp.le.s32.totalorder 2, %s8
    // Predicated region
    $region33: #{pcq_mobilenet_forward.23} parent=5 // pred_check
      %p402 = pneg %p401
    $region34: #{pcq_mobilenet_forward.23} parent=5 // pred_check_branch
      %404 = sbr.rel (%p402) target = $region36
    $region35: #{pcq_mobilenet_forward.23} parent=5 // pred_region
      %s405 = ssub.s32 %s8, 2
      // Predicated region
      $region37: #{pcq_mobilenet_forward.23} parent=35 // pred_check
        %p406 = pneg %p84
      $region38: #{pcq_mobilenet_forward.23} parent=35 // pred_check_branch
        %408 = sbr.rel (%p406) target = $region40
      $region39: #{pcq_mobilenet_forward.23} parent=35 // pred_region
        %p409 = scmp.lt.s32.totalorder %s14, 1
        %s410 = scalar_select %p409, %s14, 1
        %s411 = smul.addr %s410, 4
        %s412 = smul.addr %s411, 2
        %s413 = scalar_lea.vmem %s2, %s412
      $region40: #{pcq_mobilenet_forward.23} parent=35 // pred_fallthru
        _
    $region36: #{pcq_mobilenet_forward.23} parent=5 // pred_fallthru
      _
  $region6: #{pcq_mobilenet_forward.23} parent=0 // loop_footer
    %s12 = sadd.s32 1, %s8
  $region7: #{pcq_mobilenet_forward.23} parent=0 // loop_footer_branch
    %7 = sbr.rel target = $region3
  $region8: #{pcq_mobilenet_forward.23} parent=0 // loop_exit
    _

// kernel: pcq_mobilenet_forward.24
$region0: #{pcq_mobilenet_forward.24}
  #allocation0 [shape = 'u32[]', space=smem, size = 0x4, offset = 0x4, fixed_abs, tag = 'smem constant byte address 0x4 - core index']
  #allocation1 [shape = 'u32[144,128]{1,0:T(1,128)}', space=vmem, size = 0x12000, scoped, tag = 'internal scratch']
  #allocation2 [shape = 'f32[32,128]{1,0:T(8,128)}', space=vmem, size = 0x4000, scoped, tag = 'scratch operand']
  %s0 = inlined_call_operand.vmem [shape: bf16[1,32,128], index: 0, kind: input, shape index: {}]
  %s1 = inlined_call_operand.vmem [shape: bf16[128,128], index: 1, kind: input, shape index: {}]
  %s2 = inlined_call_operand.vmem [shape: bf16[1,32,128], index: 2, kind: output, shape index: {}]
  %s3 = sld [smem:[#allocation0]]
  $region26: #{pcq_mobilenet_forward.24} parent=0
    _
  %s5 = ssub.s32 1, %s3
  %s6 = scalar_select 0, %s5, %s3
  // Predicated region
  $region2: #{pcq_mobilenet_forward.24} parent=0 // pred_check
    _
  $region3: #{pcq_mobilenet_forward.24} parent=0 // pred_check_branch
    %8 = sbr.rel (0) target = $region5
  $region4: #{pcq_mobilenet_forward.24} parent=0 // pred_region
    _
  $region5: #{pcq_mobilenet_forward.24} parent=0 // pred_fallthru
    _
  // Predicated region
  $region6: #{pcq_mobilenet_forward.24} parent=0 // pred_check
    _
  $region7: #{pcq_mobilenet_forward.24} parent=0 // pred_check_branch
    %10 = sbr.rel (0) target = $region9
  $region8: #{pcq_mobilenet_forward.24} parent=0 // pred_region
    _
  $region9: #{pcq_mobilenet_forward.24} parent=0 // pred_fallthru
    _
  %p12 = scmp.eq.s32.totalorder 0, 0
  // Predicated region
  $region10: #{pcq_mobilenet_forward.24} parent=0 // pred_check
    %p13 = pneg %p12
  $region11: #{pcq_mobilenet_forward.24} parent=0 // pred_check_branch
    %15 = sbr.rel (%p13) target = $region13
  $region12: #{pcq_mobilenet_forward.24} parent=0 // pred_region
    %16 = vst [vmem:[#allocation2] sm:$0xff] 0.0
    %17 = vst [vmem:[#allocation2 + $0x8] sm:$0xff] 0.0
    %18 = vst [vmem:[#allocation2 + $0x10] sm:$0xff] 0.0
    %19 = vst [vmem:[#allocation2 + $0x18] sm:$0xff] 0.0
  $region13: #{pcq_mobilenet_forward.24} parent=0 // pred_fallthru
    _
  %v20 = vld [vmem:[%s0] sm:$0xf]
  %v21 = vld [vmem:[%s0 + $0x4] sm:$0xf]
  %v22 = vld [vmem:[%s0 + $0x8] sm:$0xf]
  %v23 = vld [vmem:[%s0 + $0xc] sm:$0xf]
  %v24 = vld [vmem:[#allocation2] sm:$0xff]
  %v25 = vld [vmem:[#allocation2 + $0x8] sm:$0xff]
  %v26 = vld [vmem:[#allocation2 + $0x10] sm:$0xff]
  %v27 = vld [vmem:[#allocation2 + $0x18] sm:$0xff]
  %v28 = vld [vmem:[%s1] sm:$0xf]
  %v29 = vld [vmem:[%s1 + $0x4] sm:$0xf]
  %v30 = vld [vmem:[%s1 + $0x8] sm:$0xf]
  %v31 = vld [vmem:[%s1 + $0xc] sm:$0xf]
  %v32 = vld [vmem:[%s1 + $0x10] sm:$0xf]
  %v33 = vld [vmem:[%s1 + $0x14] sm:$0xf]
  %v34 = vld [vmem:[%s1 + $0x18] sm:$0xf]
  %v35 = vld [vmem:[%s1 + $0x1c] sm:$0xf]
  %v36 = vld [vmem:[%s1 + $0x20] sm:$0xf]
  %v37 = vld [vmem:[%s1 + $0x24] sm:$0xf]
  %v38 = vld [vmem:[%s1 + $0x28] sm:$0xf]
  %v39 = vld [vmem:[%s1 + $0x2c] sm:$0xf]
  %v40 = vld [vmem:[%s1 + $0x30] sm:$0xf]
  %v41 = vld [vmem:[%s1 + $0x34] sm:$0xf]
  %v42 = vld [vmem:[%s1 + $0x38] sm:$0xf]
  %v43 = vld [vmem:[%s1 + $0x3c] sm:$0xf]
  %v48 = vunpack.c.l.b16 %v20
  %v49 = vunpack.c.l.b16 %v21
  %v50 = vunpack.c.l.b16 %v22
  %v51 = vunpack.c.l.b16 %v23
  %v52 = vpack.c.b16 %v49, %v48
  %v53 = vpack.c.b16 %v51, %v50
  %v72 = vunpack.c.l.b16 %v28
  %v73 = vunpack.c.l.b16 %v29
  %v74 = vunpack.c.l.b16 %v30
  %v75 = vunpack.c.l.b16 %v31
  %v76 = vunpack.c.l.b16 %v32
  %v77 = vunpack.c.l.b16 %v33
  %v78 = vunpack.c.l.b16 %v34
  %v79 = vunpack.c.l.b16 %v35
  %v80 = vunpack.c.l.b16 %v36
  %v81 = vunpack.c.l.b16 %v37
  %v82 = vunpack.c.l.b16 %v38
  %v83 = vunpack.c.l.b16 %v39
  %v84 = vunpack.c.l.b16 %v40
  %v85 = vunpack.c.l.b16 %v41
  %v86 = vunpack.c.l.b16 %v42
  %v87 = vunpack.c.l.b16 %v43
  %v88 = vpack.c.b16 %v73, %v72
  %v89 = vpack.c.b16 %v75, %v74
  %v90 = vpack.c.b16 %v77, %v76
  %v91 = vpack.c.b16 %v79, %v78
  %v92 = vpack.c.b16 %v81, %v80
  %v93 = vpack.c.b16 %v83, %v82
  %v94 = vpack.c.b16 %v85, %v84
  %v95 = vpack.c.b16 %v87, %v86
  %104 = vmatprep.subr.bf16.mxu0 0
  %105 = vmatpush1.bf16.msra.mxu0 %v88
  %106 = vmatprep.subr.bf16.mxu0 0
  %107 = vmatpush1.bf16.msra.mxu0 %v89
  %108 = vmatprep.subr.bf16.mxu0 0
  %109 = vmatpush1.bf16.msra.mxu0 %v90
  %110 = vmatprep.subr.bf16.mxu0 0
  %111 = vmatpush1.bf16.msra.mxu0 %v91
  %112 = vmatprep.subr.bf16.mxu0 0
  %113 = vmatpush1.bf16.msra.mxu0 %v92
  %114 = vmatprep.subr.bf16.mxu0 0
  %115 = vmatpush1.bf16.msra.mxu0 %v93
  %116 = vmatprep.subr.bf16.mxu0 0
  %117 = vmatpush1.bf16.msra.mxu0 %v94
  %118 = vmatprep.subr.bf16.mxu0 0
  %119 = vmatpush1.bf16.msra.mxu0 %v95
  %120 = vmatprep.subr.bf16.mxu0 0
  %121 = vmatpush1.bf16.msra.mxu0 0
  %122 = vmatprep.subr.bf16.mxu0 0
  %123 = vmatpush1.bf16.msra.mxu0 0
  %124 = vmatprep.subr.bf16.mxu0 0
  %125 = vmatpush1.bf16.msra.mxu0 0
  %126 = vmatprep.subr.bf16.mxu0 0
  %127 = vmatpush1.bf16.msra.mxu0 0
  %128 = vmatprep.subr.bf16.mxu0 0
  %129 = vmatpush1.bf16.msra.mxu0 0
  %130 = vmatprep.subr.bf16.mxu0 0
  %131 = vmatpush1.bf16.msra.mxu0 0
  %132 = vmatprep.subr.bf16.mxu0 0
  %133 = vmatpush1.bf16.msra.mxu0 0
  %134 = vmatprep.subr.bf16.mxu0 0
  %135 = vmatpush1.bf16.msra.mxu0 0
  %136 = vmatprep.mubr.bf16.mxu0 0
  %137 = vmatmul.mubr.bf16.gmra.mrb[0].mxu0 %v52
  %v138 = vpop.f32.mrb[0].mxu0
  %v139 = vadd.f32 0.0, %v138
  %v140 = vpop.f32.mrb[0].mxu0
  %v141 = vpop.f32.mrb[0].mxu0
  %v142 = vadd.f32 0.0, %v141
  %v143 = vpop.f32.mrb[0].mxu0
  %144 = vmatprep.mubr.bf16.mxu0 0
  %145 = vmatmul.mubr.bf16.gmra.mrb[0].mxu0 %v53
  %v146 = vpop.f32.mrb[0].mxu0
  %v147 = vadd.f32 0.0, %v146
  %v148 = vpop.f32.mrb[0].mxu0
  %v149 = vpop.f32.mrb[0].mxu0
  %v150 = vadd.f32 0.0, %v149
  %v151 = vpop.f32.mrb[0].mxu0
  %152 = vdwg.mxu0
  %v153 = vadd.f32 %v24, %v139
  %v154 = vadd.f32 %v25, %v142
  %v155 = vadd.f32 %v26, %v147
  %v156 = vadd.f32 %v27, %v150
  %157 = vst [vmem:[#allocation2] sm:$0xff] %v153
  %158 = vst [vmem:[#allocation2 + $0x8] sm:$0xff] %v154
  %159 = vst [vmem:[#allocation2 + $0x10] sm:$0xff] %v155
  %160 = vst [vmem:[#allocation2 + $0x18] sm:$0xff] %v156
  // Predicated region
  $region14: #{pcq_mobilenet_forward.24} parent=0 // pred_check
    %p161 = pneg %p12
  $region15: #{pcq_mobilenet_forward.24} parent=0 // pred_check_branch
    %163 = sbr.rel (%p161) target = $region17
  $region16: #{pcq_mobilenet_forward.24} parent=0 // pred_region
    %v164 = vld [vmem:[#allocation2] sm:$0xff]
    %v165 = vld [vmem:[#allocation2 + $0x8] sm:$0xff]
    %v166 = vld [vmem:[#allocation2 + $0x10] sm:$0xff]
    %v167 = vld [vmem:[#allocation2 + $0x18] sm:$0xff]
    %v168 = vpack.c.bf16 %v165, %v164
    %v169 = vpack.c.bf16 %v167, %v166
    %v172 = vunpack.c.l.b16 %v168
    %v173 = vunpack.c.h.b16 %v168
    %v174 = vunpack.c.l.b16 %v169
    %v175 = vunpack.c.h.b16 %v169
    %v176 = vpack.c.b16 %v172, %v172
    %v177 = vpack.c.b16 %v173, %v173
    %v178 = vpack.c.b16 %v174, %v174
    %v179 = vpack.c.b16 %v175, %v175
    %184 = vst [vmem:[%s2] sm:$0xf] %v176
    %185 = vst [vmem:[%s2 + $0x4] sm:$0xf] %v177
    %186 = vst [vmem:[%s2 + $0x8] sm:$0xf] %v178
    %187 = vst [vmem:[%s2 + $0xc] sm:$0xf] %v179
  $region17: #{pcq_mobilenet_forward.24} parent=0 // pred_fallthru
    _
  // Predicated region
  $region18: #{pcq_mobilenet_forward.24} parent=0 // pred_check
    _
  $region19: #{pcq_mobilenet_forward.24} parent=0 // pred_check_branch
    %189 = sbr.rel (0) target = $region21
  $region20: #{pcq_mobilenet_forward.24} parent=0 // pred_region
    _
  $region21: #{pcq_mobilenet_forward.24} parent=0 // pred_fallthru
    _
  // Predicated region
  $region22: #{pcq_mobilenet_forward.24} parent=0 // pred_check
    _
  $region23: #{pcq_mobilenet_forward.24} parent=0 // pred_check_branch
    %191 = sbr.rel (0) target = $region25
  $region24: #{pcq_mobilenet_forward.24} parent=0 // pred_region
    _
  $region25: #{pcq_mobilenet_forward.24} parent=0 // pred_fallthru
    _

// kernel: pcq_mobilenet_forward.25
$region0: #{pcq_mobilenet_forward.25}
  #allocation0 [shape = 'u32[]', space=smem, size = 0x4, offset = 0x4, fixed_abs, tag = 'smem constant byte address 0x4 - core index']
  #allocation1 [shape = 'u32[144,128]{1,0:T(1,128)}', space=vmem, size = 0x12000, scoped, tag = 'internal scratch']
  #allocation2 [shape = 'f32[32,128]{1,0:T(8,128)}', space=vmem, size = 0x4000, scoped, tag = 'scratch operand']
  %s0 = inlined_call_operand.vmem [shape: bf16[1,32,128], index: 0, kind: input, shape index: {}]
  %s1 = inlined_call_operand.vmem [shape: bf16[128,128], index: 1, kind: input, shape index: {}]
  %s2 = inlined_call_operand.vmem [shape: bf16[1,32,128], index: 2, kind: output, shape index: {}]
  %s3 = sld [smem:[#allocation0]]
  $region26: #{pcq_mobilenet_forward.25} parent=0
    _
  %s5 = ssub.s32 1, %s3
  %s6 = scalar_select 0, %s5, %s3
  // Predicated region
  $region2: #{pcq_mobilenet_forward.25} parent=0 // pred_check
    _
  $region3: #{pcq_mobilenet_forward.25} parent=0 // pred_check_branch
    %8 = sbr.rel (0) target = $region5
  $region4: #{pcq_mobilenet_forward.25} parent=0 // pred_region
    _
  $region5: #{pcq_mobilenet_forward.25} parent=0 // pred_fallthru
    _
  // Predicated region
  $region6: #{pcq_mobilenet_forward.25} parent=0 // pred_check
    _
  $region7: #{pcq_mobilenet_forward.25} parent=0 // pred_check_branch
    %10 = sbr.rel (0) target = $region9
  $region8: #{pcq_mobilenet_forward.25} parent=0 // pred_region
    _
  $region9: #{pcq_mobilenet_forward.25} parent=0 // pred_fallthru
    _
  %p12 = scmp.eq.s32.totalorder 0, 0
  // Predicated region
  $region10: #{pcq_mobilenet_forward.25} parent=0 // pred_check
    %p13 = pneg %p12
  $region11: #{pcq_mobilenet_forward.25} parent=0 // pred_check_branch
    %15 = sbr.rel (%p13) target = $region13
  $region12: #{pcq_mobilenet_forward.25} parent=0 // pred_region
    %16 = vst [vmem:[#allocation2] sm:$0xff] 0.0
    %17 = vst [vmem:[#allocation2 + $0x8] sm:$0xff] 0.0
    %18 = vst [vmem:[#allocation2 + $0x10] sm:$0xff] 0.0
    %19 = vst [vmem:[#allocation2 + $0x18] sm:$0xff] 0.0
  $region13: #{pcq_mobilenet_forward.25} parent=0 // pred_fallthru
    _
  %v20 = vld [vmem:[%s0] sm:$0xf]
  %v21 = vld [vmem:[%s0 + $0x4] sm:$0xf]
  %v22 = vld [vmem:[%s0 + $0x8] sm:$0xf]
  %v23 = vld [vmem:[%s0 + $0xc] sm:$0xf]
  %v24 = vld [vmem:[#allocation2] sm:$0xff]
  %v25 = vld [vmem:[#allocation2 + $0x8] sm:$0xff]
  %v26 = vld [vmem:[#allocation2 + $0x10] sm:$0xff]
  %v27 = vld [vmem:[#allocation2 + $0x18] sm:$0xff]
  %v28 = vld [vmem:[%s1] sm:$0xf]
  %v29 = vld [vmem:[%s1 + $0x4] sm:$0xf]
  %v30 = vld [vmem:[%s1 + $0x8] sm:$0xf]
  %v31 = vld [vmem:[%s1 + $0xc] sm:$0xf]
  %v32 = vld [vmem:[%s1 + $0x10] sm:$0xf]
  %v33 = vld [vmem:[%s1 + $0x14] sm:$0xf]
  %v34 = vld [vmem:[%s1 + $0x18] sm:$0xf]
  %v35 = vld [vmem:[%s1 + $0x1c] sm:$0xf]
  %v36 = vld [vmem:[%s1 + $0x20] sm:$0xf]
  %v37 = vld [vmem:[%s1 + $0x24] sm:$0xf]
  %v38 = vld [vmem:[%s1 + $0x28] sm:$0xf]
  %v39 = vld [vmem:[%s1 + $0x2c] sm:$0xf]
  %v40 = vld [vmem:[%s1 + $0x30] sm:$0xf]
  %v41 = vld [vmem:[%s1 + $0x34] sm:$0xf]
  %v42 = vld [vmem:[%s1 + $0x38] sm:$0xf]
  %v43 = vld [vmem:[%s1 + $0x3c] sm:$0xf]
  %v48 = vunpack.c.l.b16 %v20
  %v49 = vunpack.c.l.b16 %v21
  %v50 = vunpack.c.l.b16 %v22
  %v51 = vunpack.c.l.b16 %v23
  %v52 = vpack.c.b16 %v49, %v48
  %v53 = vpack.c.b16 %v51, %v50
  %v72 = vunpack.c.l.b16 %v28
  %v73 = vunpack.c.l.b16 %v29
  %v74 = vunpack.c.l.b16 %v30
  %v75 = vunpack.c.l.b16 %v31
  %v76 = vunpack.c.l.b16 %v32
  %v77 = vunpack.c.l.b16 %v33
  %v78 = vunpack.c.l.b16 %v34
  %v79 = vunpack.c.l.b16 %v35
  %v80 = vunpack.c.l.b16 %v36
  %v81 = vunpack.c.l.b16 %v37
  %v82 = vunpack.c.l.b16 %v38
  %v83 = vunpack.c.l.b16 %v39
  %v84 = vunpack.c.l.b16 %v40
  %v85 = vunpack.c.l.b16 %v41
  %v86 = vunpack.c.l.b16 %v42
  %v87 = vunpack.c.l.b16 %v43
  %v88 = vpack.c.b16 %v73, %v72
  %v89 = vpack.c.b16 %v75, %v74
  %v90 = vpack.c.b16 %v77, %v76
  %v91 = vpack.c.b16 %v79, %v78
  %v92 = vpack.c.b16 %v81, %v80
  %v93 = vpack.c.b16 %v83, %v82
  %v94 = vpack.c.b16 %v85, %v84
  %v95 = vpack.c.b16 %v87, %v86
  %104 = vmatprep.subr.bf16.mxu0 0
  %105 = vmatpush1.bf16.msra.mxu0 %v88
  %106 = vmatprep.subr.bf16.mxu0 0
  %107 = vmatpush1.bf16.msra.mxu0 %v89
  %108 = vmatprep.subr.bf16.mxu0 0
  %109 = vmatpush1.bf16.msra.mxu0 %v90
  %110 = vmatprep.subr.bf16.mxu0 0
  %111 = vmatpush1.bf16.msra.mxu0 %v91
  %112 = vmatprep.subr.bf16.mxu0 0
  %113 = vmatpush1.bf16.msra.mxu0 %v92
  %114 = vmatprep.subr.bf16.mxu0 0
  %115 = vmatpush1.bf16.msra.mxu0 %v93
  %116 = vmatprep.subr.bf16.mxu0 0
  %117 = vmatpush1.bf16.msra.mxu0 %v94
  %118 = vmatprep.subr.bf16.mxu0 0
  %119 = vmatpush1.bf16.msra.mxu0 %v95
  %120 = vmatprep.subr.bf16.mxu0 0
  %121 = vmatpush1.bf16.msra.mxu0 0
  %122 = vmatprep.subr.bf16.mxu0 0
  %123 = vmatpush1.bf16.msra.mxu0 0
  %124 = vmatprep.subr.bf16.mxu0 0
  %125 = vmatpush1.bf16.msra.mxu0 0
  %126 = vmatprep.subr.bf16.mxu0 0
  %127 = vmatpush1.bf16.msra.mxu0 0
  %128 = vmatprep.subr.bf16.mxu0 0
  %129 = vmatpush1.bf16.msra.mxu0 0
  %130 = vmatprep.subr.bf16.mxu0 0
  %131 = vmatpush1.bf16.msra.mxu0 0
  %132 = vmatprep.subr.bf16.mxu0 0
  %133 = vmatpush1.bf16.msra.mxu0 0
  %134 = vmatprep.subr.bf16.mxu0 0
  %135 = vmatpush1.bf16.msra.mxu0 0
  %136 = vmatprep.mubr.bf16.mxu0 0
  %137 = vmatmul.mubr.bf16.gmra.mrb[0].mxu0 %v52
  %v138 = vpop.f32.mrb[0].mxu0
  %v139 = vadd.f32 0.0, %v138
  %v140 = vpop.f32.mrb[0].mxu0
  %v141 = vpop.f32.mrb[0].mxu0
  %v142 = vadd.f32 0.0, %v141
  %v143 = vpop.f32.mrb[0].mxu0
  %144 = vmatprep.mubr.bf16.mxu0 0
  %145 = vmatmul.mubr.bf16.gmra.mrb[0].mxu0 %v53
  %v146 = vpop.f32.mrb[0].mxu0
  %v147 = vadd.f32 0.0, %v146
  %v148 = vpop.f32.mrb[0].mxu0
  %v149 = vpop.f32.mrb[0].mxu0
  %v150 = vadd.f32 0.0, %v149
  %v151 = vpop.f32.mrb[0].mxu0
  %152 = vdwg.mxu0
  %v153 = vadd.f32 %v24, %v139
  %v154 = vadd.f32 %v25, %v142
  %v155 = vadd.f32 %v26, %v147
  %v156 = vadd.f32 %v27, %v150
  %157 = vst [vmem:[#allocation2] sm:$0xff] %v153
  %158 = vst [vmem:[#allocation2 + $0x8] sm:$0xff] %v154
  %159 = vst [vmem:[#allocation2 + $0x10] sm:$0xff] %v155
  %160 = vst [vmem:[#allocation2 + $0x18] sm:$0xff] %v156
  // Predicated region
  $region14: #{pcq_mobilenet_forward.25} parent=0 // pred_check
    %p161 = pneg %p12
  $region15: #{pcq_mobilenet_forward.25} parent=0 // pred_check_branch
    %163 = sbr.rel (%p161) target = $region17
  $region16: #{pcq_mobilenet_forward.25} parent=0 // pred_region
    %v164 = vld [vmem:[#allocation2] sm:$0xff]
    %v165 = vld [vmem:[#allocation2 + $0x8] sm:$0xff]
    %v166 = vld [vmem:[#allocation2 + $0x10] sm:$0xff]
    %v167 = vld [vmem:[#allocation2 + $0x18] sm:$0xff]
    %v168 = vadd.f32 %v164, 3.0
    %v169 = vadd.f32 %v165, 3.0
    %v170 = vadd.f32 %v166, 3.0
    %v171 = vadd.f32 %v167, 3.0
    %v172 = vmax.f32 %v168, 0.0
    %v173 = vmax.f32 %v169, 0.0
    %v174 = vmax.f32 %v170, 0.0
    %v175 = vmax.f32 %v171, 0.0
    %v176 = vmin.f32 %v172, 6.0
    %v177 = vmin.f32 %v173, 6.0
    %v178 = vmin.f32 %v174, 6.0
    %v179 = vmin.f32 %v175, 6.0
    %v180 = vmul.f32 %v164, %v176
    %v181 = vmul.f32 %v165, %v177
    %v182 = vmul.f32 %v166, %v178
    %v183 = vmul.f32 %v167, %v179
    %v184 = vmul.f32 %v180, 0.16666667
    %v185 = vmul.f32 %v181, 0.16666667
    %v186 = vmul.f32 %v182, 0.16666667
    %v187 = vmul.f32 %v183, 0.16666667
    %v188 = vpack.c.bf16 %v185, %v184
    %v189 = vpack.c.bf16 %v187, %v186
    %v192 = vunpack.c.l.b16 %v188
    %v193 = vunpack.c.h.b16 %v188
    %v194 = vunpack.c.l.b16 %v189
    %v195 = vunpack.c.h.b16 %v189
    %v196 = vpack.c.b16 %v192, %v192
    %v197 = vpack.c.b16 %v193, %v193
    %v198 = vpack.c.b16 %v194, %v194
    %v199 = vpack.c.b16 %v195, %v195
    %204 = vst [vmem:[%s2] sm:$0xf] %v196
    %205 = vst [vmem:[%s2 + $0x4] sm:$0xf] %v197
    %206 = vst [vmem:[%s2 + $0x8] sm:$0xf] %v198
    %207 = vst [vmem:[%s2 + $0xc] sm:$0xf] %v199
  $region17: #{pcq_mobilenet_forward.25} parent=0 // pred_fallthru
    _
  // Predicated region
  $region18: #{pcq_mobilenet_forward.25} parent=0 // pred_check
    _
  $region19: #{pcq_mobilenet_forward.25} parent=0 // pred_check_branch
    %209 = sbr.rel (0) target = $region21
  $region20: #{pcq_mobilenet_forward.25} parent=0 // pred_region
    _
  $region21: #{pcq_mobilenet_forward.25} parent=0 // pred_fallthru
    _
  // Predicated region
  $region22: #{pcq_mobilenet_forward.25} parent=0 // pred_check
    _
  $region23: #{pcq_mobilenet_forward.25} parent=0 // pred_check_branch
    %211 = sbr.rel (0) target = $region25
  $region24: #{pcq_mobilenet_forward.25} parent=0 // pred_region
    _
  $region25: #{pcq_mobilenet_forward.25} parent=0 // pred_fallthru
    _

// kernel: pcq_mobilenet_forward.26
$region0: #{pcq_mobilenet_forward.26}
  #allocation0 [shape = 'u32[]', space=smem, size = 0x4, offset = 0x4, fixed_abs, tag = 'smem constant byte address 0x4 - core index']
  #allocation1 [shape = 'u32[144,128]{1,0:T(1,128)}', space=vmem, size = 0x12000, scoped, tag = 'internal scratch']
  %s0 = inlined_call_operand.vmem [shape: bf16[2,6,6,48], index: 0, kind: input, shape index: {}]
  %s1 = inlined_call_operand.vmem [shape: f32[3,3,48], index: 1, kind: input, shape index: {}]
  %s2 = inlined_call_operand.vmem [shape: bf16[2,4,4,48], index: 2, kind: output, shape index: {}]
  %s3 = sld [smem:[#allocation0]]
  $region41: #{pcq_mobilenet_forward.26} parent=0
    _
  %s5 = ssub.s32 1, %s3
  %s6 = scalar_select 0, %s5, %s3
  loop: start=0, step=1, limit=4
  $region2: #{pcq_mobilenet_forward.26} parent=0 // loop_pre_header
    _
  $region3: #{pcq_mobilenet_forward.26} parent=0 // loop_header
    %s8 = sphi 0, %s12
    %p9 = scmp.ge.s32.totalorder %s8, 4
    %s18 = sphi 0, %s20
    %s21 = sphi 0, %s18
    %s22 = sphi 0, %s21
    %s38 = sphi 0, %s22
    %s42 = sphi 0, %s42
    %s44 = sphi 0, %s42
    %s45 = sphi 0, %s44
    %s59 = sphi 0, %s45
    %s65 = sphi 0, %s67
    %s68 = sphi 0, %s65
    %s69 = sphi 0, %s68
    %s85 = sphi 0, %s69
  $region4: #{pcq_mobilenet_forward.26} parent=0 // loop_header_branch
    %11 = sbr.rel (%p9) target = $region8
  $region5: #{pcq_mobilenet_forward.26} parent=0 // loop_body
    %s13 = ssub.s32 %s8, 1
    %s14 = ssub.s32 %s8, 2
    %s15 = sadd.s32 %s8, 1
    %s16 = ssub.s32 %s8, %s15
    %p17 = scmp.eq.s32.totalorder %s16, 0
    %s19 = sadd.s32 %s18, 1
    %s20 = scalar_select %p17, %s18, %s19
    %p23 = pneg %p17
    %p24 = scmp.eq.s32.totalorder %s8, 1
    %p25 = por %p23, %p24
    %p26 = scmp.ne.s32.totalorder %s18, %s21
    %p27 = scmp.eq.s32.totalorder %s8, 0
    %p28 = por %p26, %p27
    %p29 = scmp.ne.s32.totalorder %s18, %s21
    %p30 = scmp.eq.s32.totalorder %s13, 1
    %p31 = por %p29, %p30
    %p32 = scmp.ne.s32.totalorder %s21, %s22
    %p33 = scmp.eq.s32.totalorder %s13, 0
    %p34 = por %p32, %p33
    %p35 = scmp.ne.s32.totalorder %s21, %s22
    %p36 = scmp.eq.s32.totalorder %s14, 1
    %p37 = por %p35, %p36
    %p39 = scmp.ne.s32.totalorder %s22, %s38
    %p40 = scmp.eq.s32.totalorder %s14, 0
    %p41 = por %p39, %p40
    %s43 = sadd.s32 %s42, 1
    %p46 = scmp.eq.s32.totalorder %s8, 1
    %p47 = scmp.ne.s32.totalorder %s42, %s44
    %p48 = scmp.eq.s32.totalorder %s8, 0
    %p49 = por %p47, %p48
    %p50 = scmp.ne.s32.totalorder %s42, %s44
    %p51 = scmp.eq.s32.totalorder %s13, 1
    %p52 = por %p50, %p51
    %p53 = scmp.ne.s32.totalorder %s44, %s45
    %p54 = scmp.eq.s32.totalorder %s13, 0
    %p55 = por %p53, %p54
    %p56 = scmp.ne.s32.totalorder %s44, %s45
    %p57 = scmp.eq.s32.totalorder %s14, 1
    %p58 = por %p56, %p57
    %p60 = scmp.ne.s32.totalorder %s45, %s59
    %p61 = scmp.eq.s32.totalorder %s14, 0
    %p62 = por %p60, %p61
    %s63 = ssub.s32 %s8, %s15
    %p64 = scmp.eq.s32.totalorder %s63, 0
    %s66 = sadd.s32 %s65, 1
    %s67 = scalar_select %p64, %s65, %s66
    %p70 = pneg %p64
    %p71 = scmp.eq.s32.totalorder %s8, 1
    %p72 = por %p70, %p71
    %p73 = scmp.ne.s32.totalorder %s65, %s68
    %p74 = scmp.eq.s32.totalorder %s8, 0
    %p75 = por %p73, %p74
    %p76 = scmp.ne.s32.totalorder %s65, %s68
    %p77 = scmp.eq.s32.totalorder %s13, 1
    %p78 = por %p76, %p77
    %p79 = scmp.ne.s32.totalorder %s68, %s69
    %p80 = scmp.eq.s32.totalorder %s13, 0
    %p81 = por %p79, %p80
    %p82 = scmp.ne.s32.totalorder %s68, %s69
    %p83 = scmp.eq.s32.totalorder %s14, 1
    %p84 = por %p82, %p83
    %p86 = scmp.ne.s32.totalorder %s69, %s85
    %p87 = scmp.eq.s32.totalorder %s14, 0
    %p88 = por %p86, %p87
    %p89 = scmp.le.s32.totalorder 1, %s8
    %p90 = scmp.lt.s32.totalorder %s8, 3
    %p91 = pnand %p89, %p90
    %p92 = pneg %p91
    // Predicated region
    $region9: #{pcq_mobilenet_forward.26} parent=5 // pred_check
      _
    $region10: #{pcq_mobilenet_forward.26} parent=5 // pred_check_branch
      %94 = sbr.rel (%p91) target = $region12
    $region11: #{pcq_mobilenet_forward.26} parent=5 // pred_region
      %s95 = ssub.s32 %s8, 1
      // Predicated region
      $region13: #{pcq_mobilenet_forward.26} parent=11 // pred_check
        %p96 = pneg %p55
      $region14: #{pcq_mobilenet_forward.26} parent=11 // pred_check_branch
        %98 = sbr.rel (%p96) target = $region16
      $region15: #{pcq_mobilenet_forward.26} parent=11 // pred_region
        _
      $region16: #{pcq_mobilenet_forward.26} parent=11 // pred_fallthru
        _
    $region12: #{pcq_mobilenet_forward.26} parent=5 // pred_fallthru
      _
    %p99 = scmp.lt.s32.totalorder %s8, 2
    // Predicated region
    $region17: #{pcq_mobilenet_forward.26} parent=5 // pred_check
      %p100 = pneg %p99
    $region18: #{pcq_mobilenet_forward.26} parent=5 // pred_check_branch
      %102 = sbr.rel (%p100) target = $region20
    $region19: #{pcq_mobilenet_forward.26} parent=5 // pred_region
      // Predicated region
      $region21: #{pcq_mobilenet_forward.26} parent=19 // pred_check
        %p103 = pneg %p28
      $region22: #{pcq_mobilenet_forward.26} parent=19 // pred_check_branch
        %105 = sbr.rel (%p103) target = $region24
      $region23: #{pcq_mobilenet_forward.26} parent=19 // pred_region
        %p106 = scmp.lt.s32.totalorder %s8, 1
        %s107 = scalar_select %p106, %s8, 1
        %s108 = smul.addr %s107, 6
        %s109 = smul.addr %s108, 4
        %s110 = scalar_lea.vmem %s0, %s109
      $region24: #{pcq_mobilenet_forward.26} parent=19 // pred_fallthru
        _
    $region20: #{pcq_mobilenet_forward.26} parent=5 // pred_fallthru
      _
    %p111 = scmp.le.s32.totalorder 1, %s8
    %p112 = scmp.lt.s32.totalorder %s8, 3
    %p113 = pnand %p111, %p112
    %p114 = pneg %p113
    // Predicated region
    $region25: #{pcq_mobilenet_forward.26} parent=5 // pred_check
      _
    $region26: #{pcq_mobilenet_forward.26} parent=5 // pred_check_branch
      %116 = sbr.rel (%p113) target = $region28
    $region27: #{pcq_mobilenet_forward.26} parent=5 // pred_region
      %s117 = ssub.s32 %s8, 1
      %p118 = scmp.lt.s32.totalorder %s13, 1
      %s119 = scalar_select %p118, %s13, 1
      %s120 = smul.addr %s119, 6
      %s121 = smul.addr %s120, 4
      %s122 = scalar_lea.vmem %s0, %s121
      %p123 = pneg %p34
      %p124 = pneg %p31
      %p125 = pneg %p55
      %p126 = pneg %p52
      %p127 = pneg %p81
      %p128 = pneg %p78
      %p129 = scmp.lt.s32.totalorder %s13, 1
      %s130 = scalar_select %p129, %s13, 1
      %s131 = smul.addr %s130, 4
      %s132 = smul.addr %s131, 2
      %s133 = scalar_lea.vmem %s2, %s132
      %p134 = scmp.lt.s32.totalorder %s13, 1
      %s135 = scalar_select %p134, %s13, 1
      %s136 = smul.addr %s135, 6
      %s137 = smul.addr %s136, 4
      %s138 = scalar_lea.vmem %s0, %s137
      %p139 = scmp.lt.s32.totalorder %s13, 1
      %s140 = scalar_select %p139, %s13, 1
      %s141 = smul.addr %s140, 4
      %s142 = smul.addr %s141, 2
      %s143 = scalar_lea.vmem %s2, %s142
      %v144 = vld [vmem:[%s1] sm:$0x7]
      %v145 = vld [vmem:[%s1 + $0x4] sm:$0x7]
      %v146 = vld [vmem:[%s1 + $0x8] sm:$0x7]
      %v147 = vld [vmem:[%s138] sm:$0x3]
      %v148 = vld [vmem:[%s138 + $0x4] sm:$0x3]
      %v149 = vld [vmem:[%s138 + $0x8] sm:$0x3]
      %v150 = vld [vmem:[%s138 + $0xc] sm:$0x3]
      %v151 = vunpack.c.l.bf16 %v147
      %v152 = vunpack.c.l.bf16 %v148
      %v153 = vunpack.c.l.bf16 %v149
      %v154 = vunpack.c.l.bf16 %v150
      %v155 = vlaneseq
      %v156 = vshrl.u32 %v155, 7
      %v157 = vsub.s32 0, %v156
      %v158 = vrot.slane %v144, %v157
      %v159 = vmul.f32 %v151, %v158
      %v160 = vmul.f32 %v152, %v158
      %v161 = vmul.f32 %v153, %v158
      %v162 = vmul.f32 %v154, %v158
      %v163 = vld [vmem:[%s138] sm:$0x7]
      %v164 = vld [vmem:[%s138 + $0x4] sm:$0x7]
      %v165 = vld [vmem:[%s138 + $0x8] sm:$0x7]
      %v166 = vld [vmem:[%s138 + $0xc] sm:$0x7]
      %v167 = vunpack.c.l.bf16 %v163
      %v168 = vunpack.c.l.bf16 %v164
      %v169 = vunpack.c.l.bf16 %v165
      %v170 = vunpack.c.l.bf16 %v166
      %v171 = vlaneseq
      %v172 = vshrl.u32 %v171, 7
      %v173 = vsub.s32 1, %v172
      %v174 = vrot.slane %v144, %v173
      %v175 = vmul.f32 %v167, %v174
      %v176 = vmul.f32 %v168, %v174
      %v177 = vmul.f32 %v169, %v174
      %v178 = vmul.f32 %v170, %v174
      %v183 = vrot.slane %v175, 1
      %v184 = vrot.slane %v176, 1
      %v185 = vrot.slane %v177, 1
      %v186 = vrot.slane %v178, 1
      %v191 = vadd.f32 %v159, %v183
      %v192 = vadd.f32 %v160, %v184
      %v193 = vadd.f32 %v161, %v185
      %v194 = vadd.f32 %v162, %v186
      %v195 = vld [vmem:[%s138] sm:$0x6]
      %v196 = vld [vmem:[%s138 + $0x4] sm:$0x6]
      %v197 = vld [vmem:[%s138 + $0x8] sm:$0x6]
      %v198 = vld [vmem:[%s138 + $0xc] sm:$0x6]
      %v199 = vunpack.c.l.bf16 %v195
      %v200 = vunpack.c.l.bf16 %v196
      %v201 = vunpack.c.l.bf16 %v197
      %v202 = vunpack.c.l.bf16 %v198
      %v203 = vlaneseq
      %v204 = vshrl.u32 %v203, 7
      %v205 = vsub.s32 2, %v204
      %v206 = vrot.slane %v144, %v205
      %v207 = vmul.f32 %v199, %v206
      %v208 = vmul.f32 %v200, %v206
      %v209 = vmul.f32 %v201, %v206
      %v210 = vmul.f32 %v202, %v206
      %v215 = vrot.slane %v207, 2
      %v216 = vrot.slane %v208, 2
      %v217 = vrot.slane %v209, 2
      %v218 = vrot.slane %v210, 2
      %v223 = vadd.f32 %v191, %v215
      %v224 = vadd.f32 %v192, %v216
      %v225 = vadd.f32 %v193, %v217
      %v226 = vadd.f32 %v194, %v218
      %s227 = scalar_lea.vmem %s138, 4
      %v228 = vld [vmem:[%s227] sm:$0x3]
      %v229 = vld [vmem:[%s227 + $0x4] sm:$0x3]
      %v230 = vld [vmem:[%s227 + $0x8] sm:$0x3]
      %v231 = vld [vmem:[%s227 + $0xc] sm:$0x3]
      %v232 = vunpack.c.l.bf16 %v228
      %v233 = vunpack.c.l.bf16 %v229
      %v234 = vunpack.c.l.bf16 %v230
      %v235 = vunpack.c.l.bf16 %v231
      %v236 = vlaneseq
      %v237 = vshrl.u32 %v236, 7
      %v238 = vsub.s32 0, %v237
      %v239 = vrot.slane %v145, %v238
      %v240 = vmul.f32 %v232, %v239
      %v241 = vmul.f32 %v233, %v239
      %v242 = vmul.f32 %v234, %v239
      %v243 = vmul.f32 %v235, %v239
      %v244 = vadd.f32 %v223, %v240
      %v245 = vadd.f32 %v224, %v241
      %v246 = vadd.f32 %v225, %v242
      %v247 = vadd.f32 %v226, %v243
      %v248 = vld [vmem:[%s227] sm:$0x7]
      %v249 = vld [vmem:[%s227 + $0x4] sm:$0x7]
      %v250 = vld [vmem:[%s227 + $0x8] sm:$0x7]
      %v251 = vld [vmem:[%s227 + $0xc] sm:$0x7]
      %v252 = vunpack.c.l.bf16 %v248
      %v253 = vunpack.c.l.bf16 %v249
      %v254 = vunpack.c.l.bf16 %v250
      %v255 = vunpack.c.l.bf16 %v251
      %v256 = vlaneseq
      %v257 = vshrl.u32 %v256, 7
      %v258 = vsub.s32 1, %v257
      %v259 = vrot.slane %v145, %v258
      %v260 = vmul.f32 %v252, %v259
      %v261 = vmul.f32 %v253, %v259
      %v262 = vmul.f32 %v254, %v259
      %v263 = vmul.f32 %v255, %v259
      %v268 = vrot.slane %v260, 1
      %v269 = vrot.slane %v261, 1
      %v270 = vrot.slane %v262, 1
      %v271 = vrot.slane %v263, 1
      %v276 = vadd.f32 %v244, %v268
      %v277 = vadd.f32 %v245, %v269
      %v278 = vadd.f32 %v246, %v270
      %v279 = vadd.f32 %v247, %v271
      %v280 = vld [vmem:[%s227] sm:$0x6]
      %v281 = vld [vmem:[%s227 + $0x4] sm:$0x6]
      %v282 = vld [vmem:[%s227 + $0x8] sm:$0x6]
      %v283 = vld [vmem:[%s227 + $0xc] sm:$0x6]
      %v284 = vunpack.c.l.bf16 %v280
      %v285 = vunpack.c.l.bf16 %v281
      %v286 = vunpack.c.l.bf16 %v282
      %v287 = vunpack.c.l.bf16 %v283
      %v288 = vlaneseq
      %v289 = vshrl.u32 %v288, 7
      %v290 = vsub.s32 2, %v289
      %v291 = vrot.slane %v145, %v290
      %v292 = vmul.f32 %v284, %v291
      %v293 = vmul.f32 %v285, %v291
      %v294 = vmul.f32 %v286, %v291
      %v295 = vmul.f32 %v287, %v291
      %v300 = vrot.slane %v292, 2
      %v301 = vrot.slane %v293, 2
      %v302 = vrot.slane %v294, 2
      %v303 = vrot.slane %v295, 2
      %v308 = vadd.f32 %v276, %v300
      %v309 = vadd.f32 %v277, %v301
      %v310 = vadd.f32 %v278, %v302
      %v311 = vadd.f32 %v279, %v303
      %s312 = scalar_lea.vmem %s138, 8
      %v313 = vld [vmem:[%s312] sm:$0x3]
      %v314 = vld [vmem:[%s312 + $0x4] sm:$0x3]
      %v315 = vld [vmem:[%s312 + $0x8] sm:$0x3]
      %v316 = vld [vmem:[%s312 + $0xc] sm:$0x3]
      %v317 = vunpack.c.l.bf16 %v313
      %v318 = vunpack.c.l.bf16 %v314
      %v319 = vunpack.c.l.bf16 %v315
      %v320 = vunpack.c.l.bf16 %v316
      %v321 = vlaneseq
      %v322 = vshrl.u32 %v321, 7
      %v323 = vsub.s32 0, %v322
      %v324 = vrot.slane %v146, %v323
      %v325 = vmul.f32 %v317, %v324
      %v326 = vmul.f32 %v318, %v324
      %v327 = vmul.f32 %v319, %v324
      %v328 = vmul.f32 %v320, %v324
      %v329 = vadd.f32 %v308, %v325
      %v330 = vadd.f32 %v309, %v326
      %v331 = vadd.f32 %v310, %v327
      %v332 = vadd.f32 %v311, %v328
      %v333 = vld [vmem:[%s312] sm:$0x7]
      %v334 = vld [vmem:[%s312 + $0x4] sm:$0x7]
      %v335 = vld [vmem:[%s312 + $0x8] sm:$0x7]
      %v336 = vld [vmem:[%s312 + $0xc] sm:$0x7]
      %v337 = vunpack.c.l.bf16 %v333
      %v338 = vunpack.c.l.bf16 %v334
      %v339 = vunpack.c.l.bf16 %v335
      %v340 = vunpack.c.l.bf16 %v336
      %v341 = vlaneseq
      %v342 = vshrl.u32 %v341, 7
      %v343 = vsub.s32 1, %v342
      %v344 = vrot.slane %v146, %v343
      %v345 = vmul.f32 %v337, %v344
      %v346 = vmul.f32 %v338, %v344
      %v347 = vmul.f32 %v339, %v344
      %v348 = vmul.f32 %v340, %v344
      %v353 = vrot.slane %v345, 1
      %v354 = vrot.slane %v346, 1
      %v355 = vrot.slane %v347, 1
      %v356 = vrot.slane %v348, 1
      %v361 = vadd.f32 %v329, %v353
      %v362 = vadd.f32 %v330, %v354
      %v363 = vadd.f32 %v331, %v355
      %v364 = vadd.f32 %v332, %v356
      %v365 = vld [vmem:[%s312] sm:$0x6]
      %v366 = vld [vmem:[%s312 + $0x4] sm:$0x6]
      %v367 = vld [vmem:[%s312 + $0x8] sm:$0x6]
      %v368 = vld [vmem:[%s312 + $0xc] sm:$0x6]
      %v369 = vunpack.c.l.bf16 %v365
      %v370 = vunpack.c.l.bf16 %v366
      %v371 = vunpack.c.l.bf16 %v367
      %v372 = vunpack.c.l.bf16 %v368
      %v373 = vlaneseq
      %v374 = vshrl.u32 %v373, 7
      %v375 = vsub.s32 2, %v374
      %v376 = vrot.slane %v146, %v375
      %v377 = vmul.f32 %v369, %v376
      %v378 = vmul.f32 %v370, %v376
      %v379 = vmul.f32 %v371, %v376
      %v380 = vmul.f32 %v372, %v376
      %v385 = vrot.slane %v377, 2
      %v386 = vrot.slane %v378, 2
      %v387 = vrot.slane %v379, 2
      %v388 = vrot.slane %v380, 2
      %v393 = vadd.f32 %v361, %v385
      %v394 = vadd.f32 %v362, %v386
      %v395 = vadd.f32 %v363, %v387
      %v396 = vadd.f32 %v364, %v388
      %v397 = vadd.f32 %v393, 3.0
      %v398 = vadd.f32 %v394, 3.0
      %v399 = vadd.f32 %v395, 3.0
      %v400 = vadd.f32 %v396, 3.0
      %v401 = vmax.f32 %v397, 0.0
      %v402 = vmax.f32 %v398, 0.0
      %v403 = vmax.f32 %v399, 0.0
      %v404 = vmax.f32 %v400, 0.0
      %v405 = vmin.f32 %v401, 6.0
      %v406 = vmin.f32 %v402, 6.0
      %v407 = vmin.f32 %v403, 6.0
      %v408 = vmin.f32 %v404, 6.0
      %v409 = vmul.f32 %v393, %v405
      %v410 = vmul.f32 %v394, %v406
      %v411 = vmul.f32 %v395, %v407
      %v412 = vmul.f32 %v396, %v408
      %v413 = vmul.f32 %v409, 0.16666667
      %v414 = vmul.f32 %v410, 0.16666667
      %v415 = vmul.f32 %v411, 0.16666667
      %v416 = vmul.f32 %v412, 0.16666667
      %v417 = vpack.c.bf16 %v413, %v413
      %v418 = vpack.c.bf16 %v414, %v414
      %v419 = vpack.c.bf16 %v415, %v415
      %v420 = vpack.c.bf16 %v416, %v416
      %vm421 = vcmask 386048
      %422 = vst.msk [vmem:[%s143] sm:$0x3] %vm421, %v417
      %423 = vst.msk [vmem:[%s143 + $0x2] sm:$0x3] %vm421, %v418
      %424 = vst.msk [vmem:[%s143 + $0x4] sm:$0x3] %vm421, %v419
      %425 = vst.msk [vmem:[%s143 + $0x6] sm:$0x3] %vm421, %v420
      %p426 = scmp.lt.s32.totalorder %s13, 1
      %s427 = scalar_select %p426, %s13, 1
      %s428 = smul.addr %s427, 4
      %s429 = smul.addr %s428, 2
      %s430 = scalar_lea.vmem %s2, %s429
      // Predicated region
      $region29: #{pcq_mobilenet_forward.26} parent=27 // pred_check
        %p431 = pneg %p78
      $region30: #{pcq_mobilenet_forward.26} parent=27 // pred_check_branch
        %433 = sbr.rel (%p431) target = $region32
      $region31: #{pcq_mobilenet_forward.26} parent=27 // pred_region
        _
      $region32: #{pcq_mobilenet_forward.26} parent=27 // pred_fallthru
        _
    $region28: #{pcq_mobilenet_forward.26} parent=5 // pred_fallthru
      _
    %p434 = scmp.le.s32.totalorder 2, %s8
    // Predicated region
    $region33: #{pcq_mobilenet_forward.26} parent=5 // pred_check
      %p435 = pneg %p434
    $region34: #{pcq_mobilenet_forward.26} parent=5 // pred_check_branch
      %437 = sbr.rel (%p435) target = $region36
    $region35: #{pcq_mobilenet_forward.26} parent=5 // pred_region
      %s438 = ssub.s32 %s8, 2
      // Predicated region
      $region37: #{pcq_mobilenet_forward.26} parent=35 // pred_check
        %p439 = pneg %p84
      $region38: #{pcq_mobilenet_forward.26} parent=35 // pred_check_branch
        %441 = sbr.rel (%p439) target = $region40
      $region39: #{pcq_mobilenet_forward.26} parent=35 // pred_region
        %p442 = scmp.lt.s32.totalorder %s14, 1
        %s443 = scalar_select %p442, %s14, 1
        %s444 = smul.addr %s443, 4
        %s445 = smul.addr %s444, 2
        %s446 = scalar_lea.vmem %s2, %s445
      $region40: #{pcq_mobilenet_forward.26} parent=35 // pred_fallthru
        _
    $region36: #{pcq_mobilenet_forward.26} parent=5 // pred_fallthru
      _
  $region6: #{pcq_mobilenet_forward.26} parent=0 // loop_footer
    %s12 = sadd.s32 1, %s8
  $region7: #{pcq_mobilenet_forward.26} parent=0 // loop_footer_branch
    %7 = sbr.rel target = $region3
  $region8: #{pcq_mobilenet_forward.26} parent=0 // loop_exit
    _

// kernel: pcq_mobilenet_forward.27
$region0: #{pcq_mobilenet_forward.27}
  #allocation0 [shape = 'u32[]', space=smem, size = 0x4, offset = 0x4, fixed_abs, tag = 'smem constant byte address 0x4 - core index']
  #allocation1 [shape = 'u32[144,128]{1,0:T(1,128)}', space=vmem, size = 0x12000, scoped, tag = 'internal scratch']
  #allocation2 [shape = 'f32[32,128]{1,0:T(8,128)}', space=vmem, size = 0x4000, scoped, tag = 'scratch operand']
  %s0 = inlined_call_operand.vmem [shape: bf16[1,32,128], index: 0, kind: input, shape index: {}]
  %s1 = inlined_call_operand.vmem [shape: bf16[128,128], index: 1, kind: input, shape index: {}]
  %s2 = inlined_call_operand.vmem [shape: bf16[1,32,128], index: 2, kind: input, shape index: {}]
  %s3 = inlined_call_operand.vmem [shape: bf16[1,32,128], index: 3, kind: output, shape index: {}]
  %s4 = sld [smem:[#allocation0]]
  $region30: #{pcq_mobilenet_forward.27} parent=0
    _
  %s6 = ssub.s32 1, %s4
  %s7 = scalar_select 0, %s6, %s4
  // Predicated region
  $region2: #{pcq_mobilenet_forward.27} parent=0 // pred_check
    _
  $region3: #{pcq_mobilenet_forward.27} parent=0 // pred_check_branch
    %9 = sbr.rel (0) target = $region5
  $region4: #{pcq_mobilenet_forward.27} parent=0 // pred_region
    _
  $region5: #{pcq_mobilenet_forward.27} parent=0 // pred_fallthru
    _
  // Predicated region
  $region6: #{pcq_mobilenet_forward.27} parent=0 // pred_check
    _
  $region7: #{pcq_mobilenet_forward.27} parent=0 // pred_check_branch
    %11 = sbr.rel (0) target = $region9
  $region8: #{pcq_mobilenet_forward.27} parent=0 // pred_region
    _
  $region9: #{pcq_mobilenet_forward.27} parent=0 // pred_fallthru
    _
  // Predicated region
  $region10: #{pcq_mobilenet_forward.27} parent=0 // pred_check
    _
  $region11: #{pcq_mobilenet_forward.27} parent=0 // pred_check_branch
    %13 = sbr.rel (0) target = $region13
  $region12: #{pcq_mobilenet_forward.27} parent=0 // pred_region
    _
  $region13: #{pcq_mobilenet_forward.27} parent=0 // pred_fallthru
    _
  %p15 = scmp.eq.s32.totalorder 0, 0
  // Predicated region
  $region14: #{pcq_mobilenet_forward.27} parent=0 // pred_check
    %p16 = pneg %p15
  $region15: #{pcq_mobilenet_forward.27} parent=0 // pred_check_branch
    %18 = sbr.rel (%p16) target = $region17
  $region16: #{pcq_mobilenet_forward.27} parent=0 // pred_region
    %19 = vst [vmem:[#allocation2] sm:$0xff] 0.0
    %20 = vst [vmem:[#allocation2 + $0x8] sm:$0xff] 0.0
    %21 = vst [vmem:[#allocation2 + $0x10] sm:$0xff] 0.0
    %22 = vst [vmem:[#allocation2 + $0x18] sm:$0xff] 0.0
  $region17: #{pcq_mobilenet_forward.27} parent=0 // pred_fallthru
    _
  %v23 = vld [vmem:[%s0] sm:$0xf]
  %v24 = vld [vmem:[%s0 + $0x4] sm:$0xf]
  %v25 = vld [vmem:[%s0 + $0x8] sm:$0xf]
  %v26 = vld [vmem:[%s0 + $0xc] sm:$0xf]
  %v27 = vld [vmem:[#allocation2] sm:$0xff]
  %v28 = vld [vmem:[#allocation2 + $0x8] sm:$0xff]
  %v29 = vld [vmem:[#allocation2 + $0x10] sm:$0xff]
  %v30 = vld [vmem:[#allocation2 + $0x18] sm:$0xff]
  %v31 = vld [vmem:[%s1] sm:$0xf]
  %v32 = vld [vmem:[%s1 + $0x4] sm:$0xf]
  %v33 = vld [vmem:[%s1 + $0x8] sm:$0xf]
  %v34 = vld [vmem:[%s1 + $0xc] sm:$0xf]
  %v35 = vld [vmem:[%s1 + $0x10] sm:$0xf]
  %v36 = vld [vmem:[%s1 + $0x14] sm:$0xf]
  %v37 = vld [vmem:[%s1 + $0x18] sm:$0xf]
  %v38 = vld [vmem:[%s1 + $0x1c] sm:$0xf]
  %v39 = vld [vmem:[%s1 + $0x20] sm:$0xf]
  %v40 = vld [vmem:[%s1 + $0x24] sm:$0xf]
  %v41 = vld [vmem:[%s1 + $0x28] sm:$0xf]
  %v42 = vld [vmem:[%s1 + $0x2c] sm:$0xf]
  %v43 = vld [vmem:[%s1 + $0x30] sm:$0xf]
  %v44 = vld [vmem:[%s1 + $0x34] sm:$0xf]
  %v45 = vld [vmem:[%s1 + $0x38] sm:$0xf]
  %v46 = vld [vmem:[%s1 + $0x3c] sm:$0xf]
  %v51 = vunpack.c.l.b16 %v23
  %v52 = vunpack.c.l.b16 %v24
  %v53 = vunpack.c.l.b16 %v25
  %v54 = vunpack.c.l.b16 %v26
  %v55 = vpack.c.b16 %v52, %v51
  %v56 = vpack.c.b16 %v54, %v53
  %v75 = vunpack.c.l.b16 %v31
  %v76 = vunpack.c.l.b16 %v32
  %v77 = vunpack.c.l.b16 %v33
  %v78 = vunpack.c.l.b16 %v34
  %v79 = vunpack.c.l.b16 %v35
  %v80 = vunpack.c.l.b16 %v36
  %v81 = vunpack.c.l.b16 %v37
  %v82 = vunpack.c.l.b16 %v38
  %v83 = vunpack.c.l.b16 %v39
  %v84 = vunpack.c.l.b16 %v40
  %v85 = vunpack.c.l.b16 %v41
  %v86 = vunpack.c.l.b16 %v42
  %v87 = vunpack.c.l.b16 %v43
  %v88 = vunpack.c.l.b16 %v44
  %v89 = vunpack.c.l.b16 %v45
  %v90 = vunpack.c.l.b16 %v46
  %v91 = vpack.c.b16 %v76, %v75
  %v92 = vpack.c.b16 %v78, %v77
  %v93 = vpack.c.b16 %v80, %v79
  %v94 = vpack.c.b16 %v82, %v81
  %v95 = vpack.c.b16 %v84, %v83
  %v96 = vpack.c.b16 %v86, %v85
  %v97 = vpack.c.b16 %v88, %v87
  %v98 = vpack.c.b16 %v90, %v89
  %107 = vmatprep.subr.bf16.mxu0 0
  %108 = vmatpush1.bf16.msra.mxu0 %v91
  %109 = vmatprep.subr.bf16.mxu0 0
  %110 = vmatpush1.bf16.msra.mxu0 %v92
  %111 = vmatprep.subr.bf16.mxu0 0
  %112 = vmatpush1.bf16.msra.mxu0 %v93
  %113 = vmatprep.subr.bf16.mxu0 0
  %114 = vmatpush1.bf16.msra.mxu0 %v94
  %115 = vmatprep.subr.bf16.mxu0 0
  %116 = vmatpush1.bf16.msra.mxu0 %v95
  %117 = vmatprep.subr.bf16.mxu0 0
  %118 = vmatpush1.bf16.msra.mxu0 %v96
  %119 = vmatprep.subr.bf16.mxu0 0
  %120 = vmatpush1.bf16.msra.mxu0 %v97
  %121 = vmatprep.subr.bf16.mxu0 0
  %122 = vmatpush1.bf16.msra.mxu0 %v98
  %123 = vmatprep.subr.bf16.mxu0 0
  %124 = vmatpush1.bf16.msra.mxu0 0
  %125 = vmatprep.subr.bf16.mxu0 0
  %126 = vmatpush1.bf16.msra.mxu0 0
  %127 = vmatprep.subr.bf16.mxu0 0
  %128 = vmatpush1.bf16.msra.mxu0 0
  %129 = vmatprep.subr.bf16.mxu0 0
  %130 = vmatpush1.bf16.msra.mxu0 0
  %131 = vmatprep.subr.bf16.mxu0 0
  %132 = vmatpush1.bf16.msra.mxu0 0
  %133 = vmatprep.subr.bf16.mxu0 0
  %134 = vmatpush1.bf16.msra.mxu0 0
  %135 = vmatprep.subr.bf16.mxu0 0
  %136 = vmatpush1.bf16.msra.mxu0 0
  %137 = vmatprep.subr.bf16.mxu0 0
  %138 = vmatpush1.bf16.msra.mxu0 0
  %139 = vmatprep.mubr.bf16.mxu0 0
  %140 = vmatmul.mubr.bf16.gmra.mrb[0].mxu0 %v55
  %v141 = vpop.f32.mrb[0].mxu0
  %v142 = vadd.f32 0.0, %v141
  %v143 = vpop.f32.mrb[0].mxu0
  %v144 = vpop.f32.mrb[0].mxu0
  %v145 = vadd.f32 0.0, %v144
  %v146 = vpop.f32.mrb[0].mxu0
  %147 = vmatprep.mubr.bf16.mxu0 0
  %148 = vmatmul.mubr.bf16.gmra.mrb[0].mxu0 %v56
  %v149 = vpop.f32.mrb[0].mxu0
  %v150 = vadd.f32 0.0, %v149
  %v151 = vpop.f32.mrb[0].mxu0
  %v152 = vpop.f32.mrb[0].mxu0
  %v153 = vadd.f32 0.0, %v152
  %v154 = vpop.f32.mrb[0].mxu0
  %155 = vdwg.mxu0
  %v156 = vadd.f32 %v27, %v142
  %v157 = vadd.f32 %v28, %v145
  %v158 = vadd.f32 %v29, %v150
  %v159 = vadd.f32 %v30, %v153
  %160 = vst [vmem:[#allocation2] sm:$0xff] %v156
  %161 = vst [vmem:[#allocation2 + $0x8] sm:$0xff] %v157
  %162 = vst [vmem:[#allocation2 + $0x10] sm:$0xff] %v158
  %163 = vst [vmem:[#allocation2 + $0x18] sm:$0xff] %v159
  // Predicated region
  $region18: #{pcq_mobilenet_forward.27} parent=0 // pred_check
    %p164 = pneg %p15
  $region19: #{pcq_mobilenet_forward.27} parent=0 // pred_check_branch
    %166 = sbr.rel (%p164) target = $region21
  $region20: #{pcq_mobilenet_forward.27} parent=0 // pred_region
    %v167 = vld [vmem:[#allocation2] sm:$0xff]
    %v168 = vld [vmem:[#allocation2 + $0x8] sm:$0xff]
    %v169 = vld [vmem:[#allocation2 + $0x10] sm:$0xff]
    %v170 = vld [vmem:[#allocation2 + $0x18] sm:$0xff]
    %v171 = vld [vmem:[%s2] sm:$0xf]
    %v172 = vld [vmem:[%s2 + $0x4] sm:$0xf]
    %v173 = vld [vmem:[%s2 + $0x8] sm:$0xf]
    %v174 = vld [vmem:[%s2 + $0xc] sm:$0xf]
    %v175 = vunpack.c.l.bf16 %v171
    %v176 = vunpack.c.l.bf16 %v172
    %v177 = vunpack.c.l.bf16 %v173
    %v178 = vunpack.c.l.bf16 %v174
    %v179 = vadd.f32 %v167, %v175
    %v180 = vadd.f32 %v168, %v176
    %v181 = vadd.f32 %v169, %v177
    %v182 = vadd.f32 %v170, %v178
    %v183 = vpack.c.bf16 %v180, %v179
    %v184 = vpack.c.bf16 %v182, %v181
    %v187 = vunpack.c.l.b16 %v183
    %v188 = vunpack.c.h.b16 %v183
    %v189 = vunpack.c.l.b16 %v184
    %v190 = vunpack.c.h.b16 %v184
    %v191 = vpack.c.b16 %v187, %v187
    %v192 = vpack.c.b16 %v188, %v188
    %v193 = vpack.c.b16 %v189, %v189
    %v194 = vpack.c.b16 %v190, %v190
    %199 = vst [vmem:[%s3] sm:$0xf] %v191
    %200 = vst [vmem:[%s3 + $0x4] sm:$0xf] %v192
    %201 = vst [vmem:[%s3 + $0x8] sm:$0xf] %v193
    %202 = vst [vmem:[%s3 + $0xc] sm:$0xf] %v194
  $region21: #{pcq_mobilenet_forward.27} parent=0 // pred_fallthru
    _
  // Predicated region
  $region22: #{pcq_mobilenet_forward.27} parent=0 // pred_check
    _
  $region23: #{pcq_mobilenet_forward.27} parent=0 // pred_check_branch
    %204 = sbr.rel (0) target = $region25
  $region24: #{pcq_mobilenet_forward.27} parent=0 // pred_region
    _
  $region25: #{pcq_mobilenet_forward.27} parent=0 // pred_fallthru
    _
  // Predicated region
  $region26: #{pcq_mobilenet_forward.27} parent=0 // pred_check
    _
  $region27: #{pcq_mobilenet_forward.27} parent=0 // pred_check_branch
    %206 = sbr.rel (0) target = $region29
  $region28: #{pcq_mobilenet_forward.27} parent=0 // pred_region
    _
  $region29: #{pcq_mobilenet_forward.27} parent=0 // pred_fallthru
    _

// kernel: pcq_mobilenet_forward.29
$region0: #{pcq_mobilenet_forward.29}
  #allocation0 [shape = 'u32[]', space=smem, size = 0x4, offset = 0x4, fixed_abs, tag = 'smem constant byte address 0x4 - core index']
  #allocation1 [shape = 'u32[144,128]{1,0:T(1,128)}', space=vmem, size = 0x12000, scoped, tag = 'internal scratch']
  #allocation2 [shape = 'f32[2,96]{1,0:T(2,128)}', space=vmem, size = 0x400, scoped, tag = 'scratch operand']
  %s0 = inlined_call_operand.vmem [shape: bf16[2,16,96], index: 0, kind: input, shape index: {}]
  %s1 = inlined_call_operand.vmem [shape: f32[2,96], index: 1, kind: output, shape index: {}]
  %s2 = sld [smem:[#allocation0]]
  $region22: #{pcq_mobilenet_forward.29} parent=0
    _
  %s4 = ssub.s32 1, %s2
  %s5 = scalar_select 0, %s4, %s2
  // Predicated region
  $region2: #{pcq_mobilenet_forward.29} parent=0 // pred_check
    _
  $region3: #{pcq_mobilenet_forward.29} parent=0 // pred_check_branch
    %7 = sbr.rel (0) target = $region5
  $region4: #{pcq_mobilenet_forward.29} parent=0 // pred_region
    _
  $region5: #{pcq_mobilenet_forward.29} parent=0 // pred_fallthru
    _
  %p8 = scmp.eq.s32.totalorder 0, 0
  // Predicated region
  $region6: #{pcq_mobilenet_forward.29} parent=0 // pred_check
    %p9 = pneg %p8
  $region7: #{pcq_mobilenet_forward.29} parent=0 // pred_check_branch
    %11 = sbr.rel (%p9) target = $region9
  $region8: #{pcq_mobilenet_forward.29} parent=0 // pred_region
    %vm12 = vcmask 779264
    %13 = vst.msk [vmem:[#allocation2] sm:$0x3] %vm12, 0.0
  $region9: #{pcq_mobilenet_forward.29} parent=0 // pred_fallthru
    _
  %v14 = vld [vmem:[#allocation2] sm:$0x3]
  %v15 = vld [vmem:[%s0] sm:$0xf]
  %v16 = vld [vmem:[%s0 + $0x4] sm:$0xf]
  %v17 = vld [vmem:[%s0 + $0x8] sm:$0xf]
  %v18 = vld [vmem:[%s0 + $0xc] sm:$0xf]
  %v19 = vunpack.c.l.bf16 %v15
  %v20 = vunpack.c.l.bf16 %v16
  %v21 = vunpack.c.l.bf16 %v17
  %v22 = vunpack.c.l.bf16 %v18
  %vm23 = vcmask 785408
  %v24 = vsel %vm23, %v19, 0.0
  %v25 = vsel %vm23, %v20, 0.0
  %v26 = vadd.f32 %v24, %v25
  %v27 = vrot.slane %v26, 4
  %v28 = vadd.f32 %v26, %v27
  %v29 = vrot.slane %v28, 2
  %v30 = vadd.f32 %v28, %v29
  %v31 = vrot.slane %v30, 1
  %v32 = vadd.f32 %v30, %v31
  %v33 = vsel %vm23, %v21, 0.0
  %v34 = vsel %vm23, %v22, 0.0
  %v35 = vadd.f32 %v33, %v34
  %v36 = vrot.slane %v35, 4
  %v37 = vadd.f32 %v35, %v36
  %v38 = vrot.slane %v37, 2
  %v39 = vadd.f32 %v37, %v38
  %v40 = vrot.slane %v39, 1
  %v41 = vadd.f32 %v39, %v40
  %vm44 = vcmask 1041409
  %v45 = vsel %vm44, %v41, %v32
  %v47 = vadd.f32 %v14, %v45
  %vm48 = vcmask 779264
  %49 = vst.msk [vmem:[#allocation2] sm:$0x3] %vm48, %v47
  // Predicated region
  $region10: #{pcq_mobilenet_forward.29} parent=0 // pred_check
    %p50 = pneg %p8
  $region11: #{pcq_mobilenet_forward.29} parent=0 // pred_check_branch
    %52 = sbr.rel (%p50) target = $region13
  $region12: #{pcq_mobilenet_forward.29} parent=0 // pred_region
    %v53 = vld [vmem:[#allocation2] sm:$0x3]
    %v54 = vmul.f32 %v53, 0.0625
    %55 = vst.msk [vmem:[%s1] sm:$0x3] %vm48, %v54
  $region13: #{pcq_mobilenet_forward.29} parent=0 // pred_fallthru
    _
  // Predicated region
  $region14: #{pcq_mobilenet_forward.29} parent=0 // pred_check
    _
  $region15: #{pcq_mobilenet_forward.29} parent=0 // pred_check_branch
    %57 = sbr.rel (0) target = $region17
  $region16: #{pcq_mobilenet_forward.29} parent=0 // pred_region
    _
  $region17: #{pcq_mobilenet_forward.29} parent=0 // pred_fallthru
    _
  // Predicated region
  $region18: #{pcq_mobilenet_forward.29} parent=0 // pred_check
    _
  $region19: #{pcq_mobilenet_forward.29} parent=0 // pred_check_branch
    %59 = sbr.rel (0) target = $region21
  $region20: #{pcq_mobilenet_forward.29} parent=0 // pred_region
    _
  $region21: #{pcq_mobilenet_forward.29} parent=0 // pred_fallthru
    _

// kernel: pcq_mobilenet_forward.30
$region0: #{pcq_mobilenet_forward.30}
  #allocation0 [shape = 'u32[]', space=smem, size = 0x4, offset = 0x4, fixed_abs, tag = 'smem constant byte address 0x4 - core index']
  #allocation1 [shape = 'u32[144,128]{1,0:T(1,128)}', space=vmem, size = 0x12000, scoped, tag = 'internal scratch']
  #allocation2 [shape = 'f32[8,128]{1,0:T(8,128)}', space=vmem, size = 0x1000, scoped, tag = 'scratch operand']
  %s0 = inlined_call_operand.vmem [shape: bf16[1,8,128], index: 0, kind: input, shape index: {}]
  %s1 = inlined_call_operand.vmem [shape: bf16[128,128], index: 1, kind: input, shape index: {}]
  %s2 = inlined_call_operand.vmem [shape: f32[1,128], index: 2, kind: input, shape index: {}]
  %s3 = inlined_call_operand.vmem [shape: f32[1,8,128], index: 3, kind: output, shape index: {}]
  %s4 = sld [smem:[#allocation0]]
  $region30: #{pcq_mobilenet_forward.30} parent=0
    _
  %s6 = ssub.s32 1, %s4
  %s7 = scalar_select 0, %s6, %s4
  // Predicated region
  $region2: #{pcq_mobilenet_forward.30} parent=0 // pred_check
    _
  $region3: #{pcq_mobilenet_forward.30} parent=0 // pred_check_branch
    %9 = sbr.rel (0) target = $region5
  $region4: #{pcq_mobilenet_forward.30} parent=0 // pred_region
    _
  $region5: #{pcq_mobilenet_forward.30} parent=0 // pred_fallthru
    _
  // Predicated region
  $region6: #{pcq_mobilenet_forward.30} parent=0 // pred_check
    _
  $region7: #{pcq_mobilenet_forward.30} parent=0 // pred_check_branch
    %11 = sbr.rel (0) target = $region9
  $region8: #{pcq_mobilenet_forward.30} parent=0 // pred_region
    _
  $region9: #{pcq_mobilenet_forward.30} parent=0 // pred_fallthru
    _
  // Predicated region
  $region10: #{pcq_mobilenet_forward.30} parent=0 // pred_check
    _
  $region11: #{pcq_mobilenet_forward.30} parent=0 // pred_check_branch
    %13 = sbr.rel (0) target = $region13
  $region12: #{pcq_mobilenet_forward.30} parent=0 // pred_region
    _
  $region13: #{pcq_mobilenet_forward.30} parent=0 // pred_fallthru
    _
  %p15 = scmp.eq.s32.totalorder 0, 0
  // Predicated region
  $region14: #{pcq_mobilenet_forward.30} parent=0 // pred_check
    %p16 = pneg %p15
  $region15: #{pcq_mobilenet_forward.30} parent=0 // pred_check_branch
    %18 = sbr.rel (%p16) target = $region17
  $region16: #{pcq_mobilenet_forward.30} parent=0 // pred_region
    %19 = vst [vmem:[#allocation2] sm:$0xff] 0.0
  $region17: #{pcq_mobilenet_forward.30} parent=0 // pred_fallthru
    _
  %v20 = vld [vmem:[%s0] sm:$0xf]
  %v21 = vld [vmem:[#allocation2] sm:$0xff]
  %v22 = vld [vmem:[%s1] sm:$0xf]
  %v23 = vld [vmem:[%s1 + $0x4] sm:$0xf]
  %v24 = vld [vmem:[%s1 + $0x8] sm:$0xf]
  %v25 = vld [vmem:[%s1 + $0xc] sm:$0xf]
  %v26 = vld [vmem:[%s1 + $0x10] sm:$0xf]
  %v27 = vld [vmem:[%s1 + $0x14] sm:$0xf]
  %v28 = vld [vmem:[%s1 + $0x18] sm:$0xf]
  %v29 = vld [vmem:[%s1 + $0x1c] sm:$0xf]
  %v30 = vld [vmem:[%s1 + $0x20] sm:$0xf]
  %v31 = vld [vmem:[%s1 + $0x24] sm:$0xf]
  %v32 = vld [vmem:[%s1 + $0x28] sm:$0xf]
  %v33 = vld [vmem:[%s1 + $0x2c] sm:$0xf]
  %v34 = vld [vmem:[%s1 + $0x30] sm:$0xf]
  %v35 = vld [vmem:[%s1 + $0x34] sm:$0xf]
  %v36 = vld [vmem:[%s1 + $0x38] sm:$0xf]
  %v37 = vld [vmem:[%s1 + $0x3c] sm:$0xf]
  %v54 = vunpack.c.l.b16 %v22
  %v55 = vunpack.c.l.b16 %v23
  %v56 = vunpack.c.l.b16 %v24
  %v57 = vunpack.c.l.b16 %v25
  %v58 = vunpack.c.l.b16 %v26
  %v59 = vunpack.c.l.b16 %v27
  %v60 = vunpack.c.l.b16 %v28
  %v61 = vunpack.c.l.b16 %v29
  %v62 = vunpack.c.l.b16 %v30
  %v63 = vunpack.c.l.b16 %v31
  %v64 = vunpack.c.l.b16 %v32
  %v65 = vunpack.c.l.b16 %v33
  %v66 = vunpack.c.l.b16 %v34
  %v67 = vunpack.c.l.b16 %v35
  %v68 = vunpack.c.l.b16 %v36
  %v69 = vunpack.c.l.b16 %v37
  %v70 = vpack.c.b16 %v55, %v54
  %v71 = vpack.c.b16 %v57, %v56
  %v72 = vpack.c.b16 %v59, %v58
  %v73 = vpack.c.b16 %v61, %v60
  %v74 = vpack.c.b16 %v63, %v62
  %v75 = vpack.c.b16 %v65, %v64
  %v76 = vpack.c.b16 %v67, %v66
  %v77 = vpack.c.b16 %v69, %v68
  %86 = vmatprep.subr.bf16.mxu0 0
  %87 = vmatpush1.bf16.msra.mxu0 %v70
  %88 = vmatprep.subr.bf16.mxu0 0
  %89 = vmatpush1.bf16.msra.mxu0 %v71
  %90 = vmatprep.subr.bf16.mxu0 0
  %91 = vmatpush1.bf16.msra.mxu0 %v72
  %92 = vmatprep.subr.bf16.mxu0 0
  %93 = vmatpush1.bf16.msra.mxu0 %v73
  %94 = vmatprep.subr.bf16.mxu0 0
  %95 = vmatpush1.bf16.msra.mxu0 %v74
  %96 = vmatprep.subr.bf16.mxu0 0
  %97 = vmatpush1.bf16.msra.mxu0 %v75
  %98 = vmatprep.subr.bf16.mxu0 0
  %99 = vmatpush1.bf16.msra.mxu0 %v76
  %100 = vmatprep.subr.bf16.mxu0 0
  %101 = vmatpush1.bf16.msra.mxu0 %v77
  %102 = vmatprep.subr.bf16.mxu0 0
  %103 = vmatpush1.bf16.msra.mxu0 0
  %104 = vmatprep.subr.bf16.mxu0 0
  %105 = vmatpush1.bf16.msra.mxu0 0
  %106 = vmatprep.subr.bf16.mxu0 0
  %107 = vmatpush1.bf16.msra.mxu0 0
  %108 = vmatprep.subr.bf16.mxu0 0
  %109 = vmatpush1.bf16.msra.mxu0 0
  %110 = vmatprep.subr.bf16.mxu0 0
  %111 = vmatpush1.bf16.msra.mxu0 0
  %112 = vmatprep.subr.bf16.mxu0 0
  %113 = vmatpush1.bf16.msra.mxu0 0
  %114 = vmatprep.subr.bf16.mxu0 0
  %115 = vmatpush1.bf16.msra.mxu0 0
  %116 = vmatprep.subr.bf16.mxu0 0
  %117 = vmatpush1.bf16.msra.mxu0 0
  %118 = vmatprep.mubr.bf16.mxu0 0
  %119 = vmatmul.mubr.bf16.gmra.mrb[0].mxu0 %v20
  %v120 = vpop.f32.mrb[0].mxu0
  %v121 = vadd.f32 0.0, %v120
  %v122 = vpop.f32.mrb[0].mxu0
  %v123 = vpop.f32.mrb[0].mxu0
  %v124 = vpop.f32.mrb[0].mxu0
  %125 = vdwg.mxu0
  %v126 = vadd.f32 %v21, %v121
  %127 = vst [vmem:[#allocation2] sm:$0xff] %v126
  // Predicated region
  $region18: #{pcq_mobilenet_forward.30} parent=0 // pred_check
    %p128 = pneg %p15
  $region19: #{pcq_mobilenet_forward.30} parent=0 // pred_check_branch
    %130 = sbr.rel (%p128) target = $region21
  $region20: #{pcq_mobilenet_forward.30} parent=0 // pred_region
    %v131 = vld [vmem:[#allocation2] sm:$0xff]
    %v132 = vld [vmem:[%s2] sm:$0x1]
    %v134 = vlaneseq
    %v135 = vshrl.u32 %v134, 7
    %v136 = vsub.s32 0, %v135
    %v137 = vrot.slane %v132, %v136
    %v139 = vadd.f32 %v131, %v137
    %v140 = vadd.f32 %v139, 3.0
    %v141 = vmax.f32 %v140, 0.0
    %v142 = vmin.f32 %v141, 6.0
    %v143 = vmul.f32 %v139, %v142
    %v144 = vmul.f32 %v143, 0.16666667
    %145 = vst [vmem:[%s3] sm:$0xff] %v144
  $region21: #{pcq_mobilenet_forward.30} parent=0 // pred_fallthru
    _
  // Predicated region
  $region22: #{pcq_mobilenet_forward.30} parent=0 // pred_check
    _
  $region23: #{pcq_mobilenet_forward.30} parent=0 // pred_check_branch
    %147 = sbr.rel (0) target = $region25
  $region24: #{pcq_mobilenet_forward.30} parent=0 // pred_region
    _
  $region25: #{pcq_mobilenet_forward.30} parent=0 // pred_fallthru
    _
  // Predicated region
  $region26: #{pcq_mobilenet_forward.30} parent=0 // pred_check
    _
  $region27: #{pcq_mobilenet_forward.30} parent=0 // pred_check_branch
    %149 = sbr.rel (0) target = $region29
  $region28: #{pcq_mobilenet_forward.30} parent=0 // pred_region
    _
  $region29: #{pcq_mobilenet_forward.30} parent=0 // pred_fallthru
    _

// kernel: pcq_mobilenet_forward.31
$region0: #{pcq_mobilenet_forward.31}
  #allocation0 [shape = 'u32[]', space=smem, size = 0x4, offset = 0x4, fixed_abs, tag = 'smem constant byte address 0x4 - core index']
  #allocation1 [shape = 'u32[144,128]{1,0:T(1,128)}', space=vmem, size = 0x12000, scoped, tag = 'internal scratch']
  #allocation2 [shape = 'f32[8,128]{1,0:T(8,128)}', space=vmem, size = 0x1000, scoped, tag = 'scratch operand']
  %s0 = inlined_call_operand.vmem [shape: bf16[1,8,128], index: 0, kind: input, shape index: {}]
  %s1 = inlined_call_operand.vmem [shape: bf16[128,128], index: 1, kind: input, shape index: {}]
  %s2 = inlined_call_operand.vmem [shape: f32[1,128], index: 2, kind: input, shape index: {}]
  %s3 = inlined_call_operand.vmem [shape: f32[1,8,128], index: 3, kind: output, shape index: {}]
  %s4 = sld [smem:[#allocation0]]
  $region30: #{pcq_mobilenet_forward.31} parent=0
    _
  %s6 = ssub.s32 1, %s4
  %s7 = scalar_select 0, %s6, %s4
  // Predicated region
  $region2: #{pcq_mobilenet_forward.31} parent=0 // pred_check
    _
  $region3: #{pcq_mobilenet_forward.31} parent=0 // pred_check_branch
    %9 = sbr.rel (0) target = $region5
  $region4: #{pcq_mobilenet_forward.31} parent=0 // pred_region
    _
  $region5: #{pcq_mobilenet_forward.31} parent=0 // pred_fallthru
    _
  // Predicated region
  $region6: #{pcq_mobilenet_forward.31} parent=0 // pred_check
    _
  $region7: #{pcq_mobilenet_forward.31} parent=0 // pred_check_branch
    %11 = sbr.rel (0) target = $region9
  $region8: #{pcq_mobilenet_forward.31} parent=0 // pred_region
    _
  $region9: #{pcq_mobilenet_forward.31} parent=0 // pred_fallthru
    _
  // Predicated region
  $region10: #{pcq_mobilenet_forward.31} parent=0 // pred_check
    _
  $region11: #{pcq_mobilenet_forward.31} parent=0 // pred_check_branch
    %13 = sbr.rel (0) target = $region13
  $region12: #{pcq_mobilenet_forward.31} parent=0 // pred_region
    _
  $region13: #{pcq_mobilenet_forward.31} parent=0 // pred_fallthru
    _
  %p15 = scmp.eq.s32.totalorder 0, 0
  // Predicated region
  $region14: #{pcq_mobilenet_forward.31} parent=0 // pred_check
    %p16 = pneg %p15
  $region15: #{pcq_mobilenet_forward.31} parent=0 // pred_check_branch
    %18 = sbr.rel (%p16) target = $region17
  $region16: #{pcq_mobilenet_forward.31} parent=0 // pred_region
    %19 = vst [vmem:[#allocation2] sm:$0xff] 0.0
  $region17: #{pcq_mobilenet_forward.31} parent=0 // pred_fallthru
    _
  %v20 = vld [vmem:[%s0] sm:$0xf]
  %v21 = vld [vmem:[#allocation2] sm:$0xff]
  %v22 = vld [vmem:[%s1] sm:$0xf]
  %v23 = vld [vmem:[%s1 + $0x4] sm:$0xf]
  %v24 = vld [vmem:[%s1 + $0x8] sm:$0xf]
  %v25 = vld [vmem:[%s1 + $0xc] sm:$0xf]
  %v26 = vld [vmem:[%s1 + $0x10] sm:$0xf]
  %v27 = vld [vmem:[%s1 + $0x14] sm:$0xf]
  %v28 = vld [vmem:[%s1 + $0x18] sm:$0xf]
  %v29 = vld [vmem:[%s1 + $0x1c] sm:$0xf]
  %v30 = vld [vmem:[%s1 + $0x20] sm:$0xf]
  %v31 = vld [vmem:[%s1 + $0x24] sm:$0xf]
  %v32 = vld [vmem:[%s1 + $0x28] sm:$0xf]
  %v33 = vld [vmem:[%s1 + $0x2c] sm:$0xf]
  %v34 = vld [vmem:[%s1 + $0x30] sm:$0xf]
  %v35 = vld [vmem:[%s1 + $0x34] sm:$0xf]
  %v36 = vld [vmem:[%s1 + $0x38] sm:$0xf]
  %v37 = vld [vmem:[%s1 + $0x3c] sm:$0xf]
  %v54 = vunpack.c.l.b16 %v22
  %v55 = vunpack.c.l.b16 %v23
  %v56 = vunpack.c.l.b16 %v24
  %v57 = vunpack.c.l.b16 %v25
  %v58 = vunpack.c.l.b16 %v26
  %v59 = vunpack.c.l.b16 %v27
  %v60 = vunpack.c.l.b16 %v28
  %v61 = vunpack.c.l.b16 %v29
  %v62 = vunpack.c.l.b16 %v30
  %v63 = vunpack.c.l.b16 %v31
  %v64 = vunpack.c.l.b16 %v32
  %v65 = vunpack.c.l.b16 %v33
  %v66 = vunpack.c.l.b16 %v34
  %v67 = vunpack.c.l.b16 %v35
  %v68 = vunpack.c.l.b16 %v36
  %v69 = vunpack.c.l.b16 %v37
  %v70 = vpack.c.b16 %v55, %v54
  %v71 = vpack.c.b16 %v57, %v56
  %v72 = vpack.c.b16 %v59, %v58
  %v73 = vpack.c.b16 %v61, %v60
  %v74 = vpack.c.b16 %v63, %v62
  %v75 = vpack.c.b16 %v65, %v64
  %v76 = vpack.c.b16 %v67, %v66
  %v77 = vpack.c.b16 %v69, %v68
  %86 = vmatprep.subr.bf16.mxu0 0
  %87 = vmatpush1.bf16.msra.mxu0 %v70
  %88 = vmatprep.subr.bf16.mxu0 0
  %89 = vmatpush1.bf16.msra.mxu0 %v71
  %90 = vmatprep.subr.bf16.mxu0 0
  %91 = vmatpush1.bf16.msra.mxu0 %v72
  %92 = vmatprep.subr.bf16.mxu0 0
  %93 = vmatpush1.bf16.msra.mxu0 %v73
  %94 = vmatprep.subr.bf16.mxu0 0
  %95 = vmatpush1.bf16.msra.mxu0 %v74
  %96 = vmatprep.subr.bf16.mxu0 0
  %97 = vmatpush1.bf16.msra.mxu0 %v75
  %98 = vmatprep.subr.bf16.mxu0 0
  %99 = vmatpush1.bf16.msra.mxu0 %v76
  %100 = vmatprep.subr.bf16.mxu0 0
  %101 = vmatpush1.bf16.msra.mxu0 %v77
  %102 = vmatprep.subr.bf16.mxu0 0
  %103 = vmatpush1.bf16.msra.mxu0 0
  %104 = vmatprep.subr.bf16.mxu0 0
  %105 = vmatpush1.bf16.msra.mxu0 0
  %106 = vmatprep.subr.bf16.mxu0 0
  %107 = vmatpush1.bf16.msra.mxu0 0
  %108 = vmatprep.subr.bf16.mxu0 0
  %109 = vmatpush1.bf16.msra.mxu0 0
  %110 = vmatprep.subr.bf16.mxu0 0
  %111 = vmatpush1.bf16.msra.mxu0 0
  %112 = vmatprep.subr.bf16.mxu0 0
  %113 = vmatpush1.bf16.msra.mxu0 0
  %114 = vmatprep.subr.bf16.mxu0 0
  %115 = vmatpush1.bf16.msra.mxu0 0
  %116 = vmatprep.subr.bf16.mxu0 0
  %117 = vmatpush1.bf16.msra.mxu0 0
  %118 = vmatprep.mubr.bf16.mxu0 0
  %119 = vmatmul.mubr.bf16.gmra.mrb[0].mxu0 %v20
  %v120 = vpop.f32.mrb[0].mxu0
  %v121 = vadd.f32 0.0, %v120
  %v122 = vpop.f32.mrb[0].mxu0
  %v123 = vpop.f32.mrb[0].mxu0
  %v124 = vpop.f32.mrb[0].mxu0
  %125 = vdwg.mxu0
  %v126 = vadd.f32 %v21, %v121
  %127 = vst [vmem:[#allocation2] sm:$0xff] %v126
  // Predicated region
  $region18: #{pcq_mobilenet_forward.31} parent=0 // pred_check
    %p128 = pneg %p15
  $region19: #{pcq_mobilenet_forward.31} parent=0 // pred_check_branch
    %130 = sbr.rel (%p128) target = $region21
  $region20: #{pcq_mobilenet_forward.31} parent=0 // pred_region
    %v131 = vld [vmem:[#allocation2] sm:$0xff]
    %v132 = vld [vmem:[%s2] sm:$0x1]
    %v134 = vlaneseq
    %v135 = vshrl.u32 %v134, 7
    %v136 = vsub.s32 0, %v135
    %v137 = vrot.slane %v132, %v136
    %v139 = vadd.f32 %v131, %v137
    %140 = vst [vmem:[%s3] sm:$0xff] %v139
  $region21: #{pcq_mobilenet_forward.31} parent=0 // pred_fallthru
    _
  // Predicated region
  $region22: #{pcq_mobilenet_forward.31} parent=0 // pred_check
    _
  $region23: #{pcq_mobilenet_forward.31} parent=0 // pred_check_branch
    %142 = sbr.rel (0) target = $region25
  $region24: #{pcq_mobilenet_forward.31} parent=0 // pred_region
    _
  $region25: #{pcq_mobilenet_forward.31} parent=0 // pred_fallthru
    _
  // Predicated region
  $region26: #{pcq_mobilenet_forward.31} parent=0 // pred_check
    _
  $region27: #{pcq_mobilenet_forward.31} parent=0 // pred_check_branch
    %144 = sbr.rel (0) target = $region29
  $region28: #{pcq_mobilenet_forward.31} parent=0 // pred_region
    _
  $region29: #{pcq_mobilenet_forward.31} parent=0 // pred_fallthru
    _

</llo_original>
